<compile_context>
chip_gen: v6e
topology: v6e:2x2x1
jax: 0.10.0
libtpu: 0.0.40
codegen_flags: <defaults>
</compile_context>

<pallas_src>
import functools

import jax
import jax.numpy as jnp
from jax.experimental import pallas as pl
from jax.experimental.pallas import tpu as pltpu

NEG_SLOPE = 0.2
LN_EPS = 1e-5


# --------------------------- Pallas kernel ---------------------------------
def _down_kernel(*refs, has_x, negative_slope, eps):
    if has_x:
        (img_ref, x_ref, up_ref, sh_ref,
         w1u_ref, w1x_ref, b1_ref, g1_ref, bt1_ref,
         w2_ref, b2_ref, g2_ref, bt2_ref, o_ref) = refs
    else:
        (img_ref, up_ref, sh_ref,
         w1u_ref, b1_ref, g1_ref, bt1_ref,
         w2_ref, b2_ref, g2_ref, bt2_ref, o_ref) = refs

    P = sh_ref.shape[-1]

    def conv3x3(tap_inputs, b_ref):
        # tap_inputs: list of (w_taps_ref [9, C_out, C_f], feat [C_f, P]).
        c_out = b_ref.shape[0]
        acc = jnp.zeros((c_out, P), jnp.float32)
        for k in range(9):            # unrolled 3x3 taps
            tap = None
            for w_ref, feat in tap_inputs:
                part = jnp.dot(w_ref[k], feat, preferred_element_type=jnp.float32)
                tap = part if tap is None else tap + part
            # route the tap result to its shifted spatial positions (zero pad)
            acc = acc + jnp.dot(tap, sh_ref[k], preferred_element_type=jnp.float32)
        return acc + b_ref[...]

    def layernorm_lrelu(z, g_ref, bt_ref):
        n_elem = float(z.shape[0] * z.shape[1])
        s = jnp.sum(jnp.sum(z, axis=1, keepdims=True), axis=0, keepdims=True)
        mean = s * (1.0 / n_elem)
        d = z - mean
        s2 = jnp.sum(jnp.sum(d * d, axis=1, keepdims=True), axis=0, keepdims=True)
        inv = jax.lax.rsqrt(s2 * (1.0 / n_elem) + eps)          # [1, 1], EUP
        z = d * (g_ref[...] * inv) + bt_ref[...]                # folded scale
        return jnp.maximum(z, negative_slope * z)               # LeakyReLU

    # ---- bilinear upsample (align_corners=False) as one matmul ----
    up = jnp.dot(img_ref[0], up_ref[...], preferred_element_type=jnp.float32)

    # ---- conv1 (+ optional channel concat with skip input x) ----
    if has_x:
        tap_inputs = [(w1x_ref, x_ref[0]), (w1u_ref, up)]
    else:
        tap_inputs = [(w1u_ref, up)]
    z = conv3x3(tap_inputs, b1_ref)
    z = layernorm_lrelu(z, g1_ref, bt1_ref)

    # ---- conv2 ----
    z = conv3x3([(w2_ref, z)], b2_ref)
    z = layernorm_lrelu(z, g2_ref, bt2_ref)

    o_ref[0] = z.astype(o_ref.dtype)


# --------------------------- wrapper-side (batch-invariant) prep -------------
def _interp_matrix(out_size, in_size):
    # PyTorch nn.Upsample(mode="bilinear", align_corners=False) sampling matrix.
    i = jnp.arange(out_size, dtype=jnp.float32)
    src = jnp.maximum((i + 0.5) * (in_size / out_size) - 0.5, 0.0)
    i0f = jnp.floor(src)
    frac = src - i0f
    i0 = i0f.astype(jnp.int32)
    i1 = jnp.minimum(i0 + 1, in_size - 1)
    cols = jnp.arange(in_size)
    m = ((cols[None, :] == i0[:, None]).astype(jnp.float32) * (1.0 - frac)[:, None]
         + (cols[None, :] == i1[:, None]).astype(jnp.float32) * frac[:, None])
    return m                                                     # [out, in]


def _shift_matrices(size):
    # Sh_k[q, p] = 1 iff input position q feeds output position p for 3x3 tap k.
    S = size
    P = S * S
    hg, wg = jnp.meshgrid(jnp.arange(S), jnp.arange(S), indexing="ij")
    qids = jnp.arange(P)
    mats = []
    for dy in (-1, 0, 1):
        for dx in (-1, 0, 1):
            hs, ws = hg + dy, wg + dx
            valid = ((hs >= 0) & (hs < S) & (ws >= 0) & (ws < S)).reshape(-1)
            src = (jnp.clip(hs, 0, S - 1) * S + jnp.clip(ws, 0, S - 1)).reshape(-1)
            sh = (qids[:, None] == src[None, :]) & valid[None, :]
            mats.append(sh.astype(jnp.float32))
    return jnp.stack(mats)                                       # [9, P, P]


def down_forward(image, x, params, size):
    f32 = jnp.float32
    image = image.astype(f32)
    N, C_img, H_in, W_in = image.shape
    S = size
    P = S * S
    Pin = H_in * W_in
    has_x = x is not None

    w1 = params["w1"].astype(f32)                                # [C_out, C_tot, 3, 3]
    w2 = params["w2"].astype(f32)                                # [C_out, C_out, 3, 3]
    C_out, C_tot = w1.shape[0], w1.shape[1]
    C_x = C_tot - C_img
    if has_x:
        assert x.shape[1] == C_x and x.shape[2:] == (S, S)
    else:
        assert C_x == 0

    # hoisted batch-invariant constants
    up_mat = jnp.kron(_interp_matrix(S, H_in), _interp_matrix(S, W_in)).T   # [Pin, P]
    shifts = _shift_matrices(S)                                             # [9, P, P]
    w1_taps = jnp.transpose(w1, (2, 3, 0, 1)).reshape(9, C_out, C_tot)
    w2_taps = jnp.transpose(w2, (2, 3, 0, 1)).reshape(9, C_out, C_out)
    b1 = params["b1"].astype(f32).reshape(C_out, 1)
    b2 = params["b2"].astype(f32).reshape(C_out, 1)
    g1 = params["g1"].astype(f32).reshape(C_out, P)
    bt1 = params["bt1"].astype(f32).reshape(C_out, P)
    g2 = params["g2"].astype(f32).reshape(C_out, P)
    bt2 = params["bt2"].astype(f32).reshape(C_out, P)

    img_flat = image.reshape(N, C_img, Pin)

    def bcast(shape):
        zeros = (0,) * len(shape)
        return pl.BlockSpec(shape, lambda n: zeros)

    inputs = [img_flat]
    in_specs = [pl.BlockSpec((1, C_img, Pin), lambda n: (n, 0, 0))]
    if has_x:
        inputs.append(x.astype(f32).reshape(N, C_x, P))
        in_specs.append(pl.BlockSpec((1, C_x, P), lambda n: (n, 0, 0)))
    inputs += [up_mat, shifts, w1_taps[:, :, C_x:]]
    in_specs += [bcast((Pin, P)), bcast((9, P, P)), bcast((9, C_out, C_img))]
    if has_x:
        inputs.append(w1_taps[:, :, :C_x])
        in_specs.append(bcast((9, C_out, C_x)))
    inputs += [b1, g1, bt1, w2_taps, b2, g2, bt2]
    in_specs += [bcast((C_out, 1)), bcast((C_out, P)), bcast((C_out, P)),
                 bcast((9, C_out, C_out)), bcast((C_out, 1)),
                 bcast((C_out, P)), bcast((C_out, P))]

    kernel = functools.partial(_down_kernel, has_x=has_x,
                               negative_slope=NEG_SLOPE, eps=LN_EPS)

    out = pl.pallas_call(
        kernel,
        out_shape=jax.ShapeDtypeStruct((N, C_out, P), f32),
        grid_spec=pltpu.PrefetchScalarGridSpec(
            num_scalar_prefetch=0,
            grid=(N,),
            in_specs=in_specs,
            out_specs=pl.BlockSpec((1, C_out, P), lambda n: (n, 0, 0)),
        ),
        compiler_params=pltpu.CompilerParams(
            dimension_semantics=("parallel",)),
    )(*inputs)

    return out.reshape(N, C_out, S, S)


# --------------------------- pure-JAX reference (mirrors PyTorch) ------------
def down_ref(image, x, params, size):
    f32 = jnp.float32
    image = image.astype(f32)
    _, _, H_in, W_in = image.shape
    A_h = _interp_matrix(size, H_in)
    A_w = _interp_matrix(size, W_in)
    up = jnp.einsum("op,ncpq,wq->ncow", A_h, image, A_w,
                    precision=jax.lax.Precision.HIGHEST)
    z = up if x is None else jnp.concatenate([x.astype(f32), up], axis=1)

    def block(z, w, b, g, bt):
        z = jax.lax.conv_general_dilated(
            z, w.astype(f32), (1, 1), "SAME",
            dimension_numbers=("NCHW", "OIHW", "NCHW"),
            precision=jax.lax.Precision.HIGHEST) + b[None, :, None, None]
        mean = jnp.mean(z, axis=(1, 2, 3), keepdims=True)
        var = jnp.mean((z - mean) ** 2, axis=(1, 2, 3), keepdims=True)
        z = (z - mean) / jnp.sqrt(var + LN_EPS) * g[None] + bt[None]
        return jnp.where(z >= 0, z, NEG_SLOPE * z)

    z = block(z, params["w1"], params["b1"], params["g1"], params["bt1"])
    z = block(z, params["w2"], params["b2"], params["g2"], params["bt2"])
    return z


def _make_params(key, c_in, c_out, size):
    k = jax.random.split(key, 8)
    s = 0.2
    return dict(
        w1=s * jax.random.normal(k[0], (c_out, c_in, 3, 3), jnp.float32),
        b1=s * jax.random.normal(k[1], (c_out,), jnp.float32),
        g1=1.0 + s * jax.random.normal(k[2], (c_out, size, size), jnp.float32),
        bt1=s * jax.random.normal(k[3], (c_out, size, size), jnp.float32),
        w2=s * jax.random.normal(k[4], (c_out, c_out, 3, 3), jnp.float32),
        b2=s * jax.random.normal(k[5], (c_out,), jnp.float32),
        g2=1.0 + s * jax.random.normal(k[6], (c_out, size, size), jnp.float32),
        bt2=s * jax.random.normal(k[7], (c_out, size, size), jnp.float32),
    )


if __name__ == "__main__":
    key = jax.random.PRNGKey(0)
    ks = jax.random.split(key, 6)
    N, size, C_out = 2, 16, 8

    # ---- case 1: x is None (Down(size=16, in_channels=4, out_channels=8)) ----
    C_in, H_in, W_in = 4, 8, 8
    image = jax.random.normal(ks[0], (N, C_in, H_in, W_in), jnp.float32)
    p1 = _make_params(ks[1], C_in, C_out, size)
    out1 = jax.block_until_ready(down_forward(image, None, p1, size))
    ref1 = jax.block_until_ready(down_ref(image, None, p1, size))
    assert out1.shape == (N, C_out, size, size), out1.shape
    assert bool(jnp.all(jnp.isfinite(out1)))
    assert jnp.allclose(out1, ref1, rtol=2e-2, atol=2e-2), \
        float(jnp.max(jnp.abs(out1 - ref1)))

    # ---- case 2: with skip connection x (in_channels = C_x + C_img = 8) ----
    C_img2, C_x2 = 3, 5
    image2 = jax.random.normal(ks[2], (N, C_img2, H_in, W_in), jnp.float32)
    x2 = jax.random.normal(ks[3], (N, C_x2, size, size), jnp.float32)
    p2 = _make_params(ks[4], C_x2 + C_img2, C_out, size)
    out2 = jax.block_until_ready(down_forward(image2, x2, p2, size))
    ref2 = jax.block_until_ready(down_ref(image2, x2, p2, size))
    assert bool(jnp.all(jnp.isfinite(out2)))
    assert jnp.allclose(out2, ref2, rtol=2e-2, atol=2e-2), \
        float(jnp.max(jnp.abs(out2 - ref2)))

    print("KERNEL_OK")
</pallas_src>

<mosaic_0001>
module attributes {stable_mosaic.version = 11 : i64} {
  func.func @_down_kernel(%arg0: i32, %arg1: memref<1x4x64xf32, #tpu.memory_space<vmem>>, %arg2: memref<64x256xf32, #tpu.memory_space<vmem>>, %arg3: memref<9x256x256xf32, #tpu.memory_space<vmem>>, %arg4: memref<9x8x4xf32, #tpu.memory_space<vmem>>, %arg5: memref<8x1xf32, #tpu.memory_space<vmem>>, %arg6: memref<8x256xf32, #tpu.memory_space<vmem>>, %arg7: memref<8x256xf32, #tpu.memory_space<vmem>>, %arg8: memref<9x8x8xf32, #tpu.memory_space<vmem>>, %arg9: memref<8x1xf32, #tpu.memory_space<vmem>>, %arg10: memref<8x256xf32, #tpu.memory_space<vmem>>, %arg11: memref<8x256xf32, #tpu.memory_space<vmem>>, %arg12: memref<1x8x256xf32, #tpu.memory_space<vmem>>) attributes {dimension_semantics = [#tpu.dimension_semantics<parallel>], iteration_bounds = array<i64: 2>, scalar_prefetch = 0 : i64, scratch_operands = 0 : i64, tpu.core_type = #tpu.core_type<tc>, window_params = [{transform_indices = @transform_0, window_bounds = array<i64: 1, 4, 64>}, {pipeline_mode = #tpu.pipeline_mode<synchronous>, transform_indices = @transform_1, window_bounds = array<i64: 64, 256>}, {pipeline_mode = #tpu.pipeline_mode<synchronous>, transform_indices = @transform_2, window_bounds = array<i64: 9, 256, 256>}, {pipeline_mode = #tpu.pipeline_mode<synchronous>, transform_indices = @transform_3, window_bounds = array<i64: 9, 8, 4>}, {pipeline_mode = #tpu.pipeline_mode<synchronous>, transform_indices = @transform_4, window_bounds = array<i64: 8, 1>}, {pipeline_mode = #tpu.pipeline_mode<synchronous>, transform_indices = @transform_5, window_bounds = array<i64: 8, 256>}, {pipeline_mode = #tpu.pipeline_mode<synchronous>, transform_indices = @transform_6, window_bounds = array<i64: 8, 256>}, {pipeline_mode = #tpu.pipeline_mode<synchronous>, transform_indices = @transform_7, window_bounds = array<i64: 9, 8, 8>}, {pipeline_mode = #tpu.pipeline_mode<synchronous>, transform_indices = @transform_8, window_bounds = array<i64: 8, 1>}, {pipeline_mode = #tpu.pipeline_mode<synchronous>, transform_indices = @transform_9, window_bounds = array<i64: 8, 256>}, {pipeline_mode = #tpu.pipeline_mode<synchronous>, transform_indices = @transform_10, window_bounds = array<i64: 8, 256>}, {transform_indices = @transform_11, window_bounds = array<i64: 1, 8, 256>}]} {
    %c0 = arith.constant 0 : index
    %c0_0 = arith.constant 0 : index
    %c0_1 = arith.constant 0 : index
    %0 = vector.load %arg1[%c0, %c0_0, %c0_1] : memref<1x4x64xf32, #tpu.memory_space<vmem>>, vector<1x4x64xf32>
    %1 = vector.shape_cast %0 : vector<1x4x64xf32> to vector<4x64xf32>
    %c0_2 = arith.constant 0 : index
    %c0_3 = arith.constant 0 : index
    %2 = vector.load %arg2[%c0_2, %c0_3] : memref<64x256xf32, #tpu.memory_space<vmem>>, vector<64x256xf32>
    %cst = arith.constant dense<0.000000e+00> : vector<4x256xf32>
    %3 = tpu.matmul %1, %2, %cst {dimension_numbers = #tpu.dot_dimension_numbers<[1], [0], [0], [1], [0, 0, 1, 1], [], []>} : vector<4x64xf32>, vector<64x256xf32>, vector<4x256xf32> -> vector<4x256xf32>
    %cst_4 = arith.constant 0.000000e+00 : f32
    %4 = vector.broadcast %cst_4 : f32 to vector<8x256xf32>
    %c0_5 = arith.constant 0 : index
    %c0_6 = arith.constant 0 : index
    %c0_7 = arith.constant 0 : index
    %5 = vector.load %arg4[%c0_5, %c0_6, %c0_7] : memref<9x8x4xf32, #tpu.memory_space<vmem>>, vector<1x8x4xf32>
    %6 = vector.shape_cast %5 : vector<1x8x4xf32> to vector<8x4xf32>
    %cst_8 = arith.constant dense<0.000000e+00> : vector<8x256xf32>
    %7 = tpu.matmul %6, %3, %cst_8 {dimension_numbers = #tpu.dot_dimension_numbers<[1], [0], [0], [1], [0, 0, 1, 1], [], []>} : vector<8x4xf32>, vector<4x256xf32>, vector<8x256xf32> -> vector<8x256xf32>
    %c0_9 = arith.constant 0 : index
    %c0_10 = arith.constant 0 : index
    %c0_11 = arith.constant 0 : index
    %8 = vector.load %arg3[%c0_9, %c0_10, %c0_11] : memref<9x256x256xf32, #tpu.memory_space<vmem>>, vector<1x256x256xf32>
    %9 = vector.shape_cast %8 : vector<1x256x256xf32> to vector<256x256xf32>
    %cst_12 = arith.constant dense<0.000000e+00> : vector<8x256xf32>
    %10 = tpu.matmul %7, %9, %cst_12 {dimension_numbers = #tpu.dot_dimension_numbers<[1], [0], [0], [1], [0, 0, 1, 1], [], []>} : vector<8x256xf32>, vector<256x256xf32>, vector<8x256xf32> -> vector<8x256xf32>
    %11 = arith.addf %4, %10 : vector<8x256xf32>
    %c1 = arith.constant 1 : index
    %c0_13 = arith.constant 0 : index
    %c0_14 = arith.constant 0 : index
    %12 = vector.load %arg4[%c1, %c0_13, %c0_14] : memref<9x8x4xf32, #tpu.memory_space<vmem>>, vector<1x8x4xf32>
    %13 = vector.shape_cast %12 : vector<1x8x4xf32> to vector<8x4xf32>
    %cst_15 = arith.constant dense<0.000000e+00> : vector<8x256xf32>
    %14 = tpu.matmul %13, %3, %cst_15 {dimension_numbers = #tpu.dot_dimension_numbers<[1], [0], [0], [1], [0, 0, 1, 1], [], []>} : vector<8x4xf32>, vector<4x256xf32>, vector<8x256xf32> -> vector<8x256xf32>
    %c1_16 = arith.constant 1 : index
    %c0_17 = arith.constant 0 : index
    %c0_18 = arith.constant 0 : index
    %15 = vector.load %arg3[%c1_16, %c0_17, %c0_18] : memref<9x256x256xf32, #tpu.memory_space<vmem>>, vector<1x256x256xf32>
    %16 = vector.shape_cast %15 : vector<1x256x256xf32> to vector<256x256xf32>
    %cst_19 = arith.constant dense<0.000000e+00> : vector<8x256xf32>
    %17 = tpu.matmul %14, %16, %cst_19 {dimension_numbers = #tpu.dot_dimension_numbers<[1], [0], [0], [1], [0, 0, 1, 1], [], []>} : vector<8x256xf32>, vector<256x256xf32>, vector<8x256xf32> -> vector<8x256xf32>
    %18 = arith.addf %11, %17 : vector<8x256xf32>
    %c2 = arith.constant 2 : index
    %c0_20 = arith.constant 0 : index
    %c0_21 = arith.constant 0 : index
    %19 = vector.load %arg4[%c2, %c0_20, %c0_21] : memref<9x8x4xf32, #tpu.memory_space<vmem>>, vector<1x8x4xf32>
    %20 = vector.shape_cast %19 : vector<1x8x4xf32> to vector<8x4xf32>
    %cst_22 = arith.constant dense<0.000000e+00> : vector<8x256xf32>
    %21 = tpu.matmul %20, %3, %cst_22 {dimension_numbers = #tpu.dot_dimension_numbers<[1], [0], [0], [1], [0, 0, 1, 1], [], []>} : vector<8x4xf32>, vector<4x256xf32>, vector<8x256xf32> -> vector<8x256xf32>
    %c2_23 = arith.constant 2 : index
    %c0_24 = arith.constant 0 : index
    %c0_25 = arith.constant 0 : index
    %22 = vector.load %arg3[%c2_23, %c0_24, %c0_25] : memref<9x256x256xf32, #tpu.memory_space<vmem>>, vector<1x256x256xf32>
    %23 = vector.shape_cast %22 : vector<1x256x256xf32> to vector<256x256xf32>
    %cst_26 = arith.constant dense<0.000000e+00> : vector<8x256xf32>
    %24 = tpu.matmul %21, %23, %cst_26 {dimension_numbers = #tpu.dot_dimension_numbers<[1], [0], [0], [1], [0, 0, 1, 1], [], []>} : vector<8x256xf32>, vector<256x256xf32>, vector<8x256xf32> -> vector<8x256xf32>
    %25 = arith.addf %18, %24 : vector<8x256xf32>
    %c3 = arith.constant 3 : index
    %c0_27 = arith.constant 0 : index
    %c0_28 = arith.constant 0 : index
    %26 = vector.load %arg4[%c3, %c0_27, %c0_28] : memref<9x8x4xf32, #tpu.memory_space<vmem>>, vector<1x8x4xf32>
    %27 = vector.shape_cast %26 : vector<1x8x4xf32> to vector<8x4xf32>
    %cst_29 = arith.constant dense<0.000000e+00> : vector<8x256xf32>
    %28 = tpu.matmul %27, %3, %cst_29 {dimension_numbers = #tpu.dot_dimension_numbers<[1], [0], [0], [1], [0, 0, 1, 1], [], []>} : vector<8x4xf32>, vector<4x256xf32>, vector<8x256xf32> -> vector<8x256xf32>
    %c3_30 = arith.constant 3 : index
    %c0_31 = arith.constant 0 : index
    %c0_32 = arith.constant 0 : index
    %29 = vector.load %arg3[%c3_30, %c0_31, %c0_32] : memref<9x256x256xf32, #tpu.memory_space<vmem>>, vector<1x256x256xf32>
    %30 = vector.shape_cast %29 : vector<1x256x256xf32> to vector<256x256xf32>
    %cst_33 = arith.constant dense<0.000000e+00> : vector<8x256xf32>
    %31 = tpu.matmul %28, %30, %cst_33 {dimension_numbers = #tpu.dot_dimension_numbers<[1], [0], [0], [1], [0, 0, 1, 1], [], []>} : vector<8x256xf32>, vector<256x256xf32>, vector<8x256xf32> -> vector<8x256xf32>
    %32 = arith.addf %25, %31 : vector<8x256xf32>
    %c4 = arith.constant 4 : index
    %c0_34 = arith.constant 0 : index
    %c0_35 = arith.constant 0 : index
    %33 = vector.load %arg4[%c4, %c0_34, %c0_35] : memref<9x8x4xf32, #tpu.memory_space<vmem>>, vector<1x8x4xf32>
    %34 = vector.shape_cast %33 : vector<1x8x4xf32> to vector<8x4xf32>
    %cst_36 = arith.constant dense<0.000000e+00> : vector<8x256xf32>
    %35 = tpu.matmul %34, %3, %cst_36 {dimension_numbers = #tpu.dot_dimension_numbers<[1], [0], [0], [1], [0, 0, 1, 1], [], []>} : vector<8x4xf32>, vector<4x256xf32>, vector<8x256xf32> -> vector<8x256xf32>
    %c4_37 = arith.constant 4 : index
    %c0_38 = arith.constant 0 : index
    %c0_39 = arith.constant 0 : index
    %36 = vector.load %arg3[%c4_37, %c0_38, %c0_39] : memref<9x256x256xf32, #tpu.memory_space<vmem>>, vector<1x256x256xf32>
    %37 = vector.shape_cast %36 : vector<1x256x256xf32> to vector<256x256xf32>
    %cst_40 = arith.constant dense<0.000000e+00> : vector<8x256xf32>
    %38 = tpu.matmul %35, %37, %cst_40 {dimension_numbers = #tpu.dot_dimension_numbers<[1], [0], [0], [1], [0, 0, 1, 1], [], []>} : vector<8x256xf32>, vector<256x256xf32>, vector<8x256xf32> -> vector<8x256xf32>
    %39 = arith.addf %32, %38 : vector<8x256xf32>
    %c5 = arith.constant 5 : index
    %c0_41 = arith.constant 0 : index
    %c0_42 = arith.constant 0 : index
    %40 = vector.load %arg4[%c5, %c0_41, %c0_42] : memref<9x8x4xf32, #tpu.memory_space<vmem>>, vector<1x8x4xf32>
    %41 = vector.shape_cast %40 : vector<1x8x4xf32> to vector<8x4xf32>
    %cst_43 = arith.constant dense<0.000000e+00> : vector<8x256xf32>
    %42 = tpu.matmul %41, %3, %cst_43 {dimension_numbers = #tpu.dot_dimension_numbers<[1], [0], [0], [1], [0, 0, 1, 1], [], []>} : vector<8x4xf32>, vector<4x256xf32>, vector<8x256xf32> -> vector<8x256xf32>
    %c5_44 = arith.constant 5 : index
    %c0_45 = arith.constant 0 : index
    %c0_46 = arith.constant 0 : index
    %43 = vector.load %arg3[%c5_44, %c0_45, %c0_46] : memref<9x256x256xf32, #tpu.memory_space<vmem>>, vector<1x256x256xf32>
    %44 = vector.shape_cast %43 : vector<1x256x256xf32> to vector<256x256xf32>
    %cst_47 = arith.constant dense<0.000000e+00> : vector<8x256xf32>
    %45 = tpu.matmul %42, %44, %cst_47 {dimension_numbers = #tpu.dot_dimension_numbers<[1], [0], [0], [1], [0, 0, 1, 1], [], []>} : vector<8x256xf32>, vector<256x256xf32>, vector<8x256xf32> -> vector<8x256xf32>
    %46 = arith.addf %39, %45 : vector<8x256xf32>
    %c6 = arith.constant 6 : index
    %c0_48 = arith.constant 0 : index
    %c0_49 = arith.constant 0 : index
    %47 = vector.load %arg4[%c6, %c0_48, %c0_49] : memref<9x8x4xf32, #tpu.memory_space<vmem>>, vector<1x8x4xf32>
    %48 = vector.shape_cast %47 : vector<1x8x4xf32> to vector<8x4xf32>
    %cst_50 = arith.constant dense<0.000000e+00> : vector<8x256xf32>
    %49 = tpu.matmul %48, %3, %cst_50 {dimension_numbers = #tpu.dot_dimension_numbers<[1], [0], [0], [1], [0, 0, 1, 1], [], []>} : vector<8x4xf32>, vector<4x256xf32>, vector<8x256xf32> -> vector<8x256xf32>
    %c6_51 = arith.constant 6 : index
    %c0_52 = arith.constant 0 : index
    %c0_53 = arith.constant 0 : index
    %50 = vector.load %arg3[%c6_51, %c0_52, %c0_53] : memref<9x256x256xf32, #tpu.memory_space<vmem>>, vector<1x256x256xf32>
    %51 = vector.shape_cast %50 : vector<1x256x256xf32> to vector<256x256xf32>
    %cst_54 = arith.constant dense<0.000000e+00> : vector<8x256xf32>
    %52 = tpu.matmul %49, %51, %cst_54 {dimension_numbers = #tpu.dot_dimension_numbers<[1], [0], [0], [1], [0, 0, 1, 1], [], []>} : vector<8x256xf32>, vector<256x256xf32>, vector<8x256xf32> -> vector<8x256xf32>
    %53 = arith.addf %46, %52 : vector<8x256xf32>
    %c7 = arith.constant 7 : index
    %c0_55 = arith.constant 0 : index
    %c0_56 = arith.constant 0 : index
    %54 = vector.load %arg4[%c7, %c0_55, %c0_56] : memref<9x8x4xf32, #tpu.memory_space<vmem>>, vector<1x8x4xf32>
    %55 = vector.shape_cast %54 : vector<1x8x4xf32> to vector<8x4xf32>
    %cst_57 = arith.constant dense<0.000000e+00> : vector<8x256xf32>
    %56 = tpu.matmul %55, %3, %cst_57 {dimension_numbers = #tpu.dot_dimension_numbers<[1], [0], [0], [1], [0, 0, 1, 1], [], []>} : vector<8x4xf32>, vector<4x256xf32>, vector<8x256xf32> -> vector<8x256xf32>
    %c7_58 = arith.constant 7 : index
    %c0_59 = arith.constant 0 : index
    %c0_60 = arith.constant 0 : index
    %57 = vector.load %arg3[%c7_58, %c0_59, %c0_60] : memref<9x256x256xf32, #tpu.memory_space<vmem>>, vector<1x256x256xf32>
    %58 = vector.shape_cast %57 : vector<1x256x256xf32> to vector<256x256xf32>
    %cst_61 = arith.constant dense<0.000000e+00> : vector<8x256xf32>
    %59 = tpu.matmul %56, %58, %cst_61 {dimension_numbers = #tpu.dot_dimension_numbers<[1], [0], [0], [1], [0, 0, 1, 1], [], []>} : vector<8x256xf32>, vector<256x256xf32>, vector<8x256xf32> -> vector<8x256xf32>
    %60 = arith.addf %53, %59 : vector<8x256xf32>
    %c8 = arith.constant 8 : index
    %c0_62 = arith.constant 0 : index
    %c0_63 = arith.constant 0 : index
    %61 = vector.load %arg4[%c8, %c0_62, %c0_63] : memref<9x8x4xf32, #tpu.memory_space<vmem>>, vector<1x8x4xf32>
    %62 = vector.shape_cast %61 : vector<1x8x4xf32> to vector<8x4xf32>
    %cst_64 = arith.constant dense<0.000000e+00> : vector<8x256xf32>
    %63 = tpu.matmul %62, %3, %cst_64 {dimension_numbers = #tpu.dot_dimension_numbers<[1], [0], [0], [1], [0, 0, 1, 1], [], []>} : vector<8x4xf32>, vector<4x256xf32>, vector<8x256xf32> -> vector<8x256xf32>
    %c8_65 = arith.constant 8 : index
    %c0_66 = arith.constant 0 : index
    %c0_67 = arith.constant 0 : index
    %64 = vector.load %arg3[%c8_65, %c0_66, %c0_67] : memref<9x256x256xf32, #tpu.memory_space<vmem>>, vector<1x256x256xf32>
    %65 = vector.shape_cast %64 : vector<1x256x256xf32> to vector<256x256xf32>
    %cst_68 = arith.constant dense<0.000000e+00> : vector<8x256xf32>
    %66 = tpu.matmul %63, %65, %cst_68 {dimension_numbers = #tpu.dot_dimension_numbers<[1], [0], [0], [1], [0, 0, 1, 1], [], []>} : vector<8x256xf32>, vector<256x256xf32>, vector<8x256xf32> -> vector<8x256xf32>
    %67 = arith.addf %60, %66 : vector<8x256xf32>
    %c0_69 = arith.constant 0 : index
    %c0_70 = arith.constant 0 : index
    %68 = vector.load %arg5[%c0_69, %c0_70] : memref<8x1xf32, #tpu.memory_space<vmem>>, vector<8x1xf32>
    %69 = vector.broadcast %68 : vector<8x1xf32> to vector<8x256xf32>
    %70 = arith.addf %67, %69 : vector<8x256xf32>
    %cst_71 = arith.constant dense<0.000000e+00> : vector<8xf32>
    %71 = vector.multi_reduction <add>, %70, %cst_71 [1] : vector<8x256xf32> to vector<8xf32>
    %72 = vector.shape_cast %71 : vector<8xf32> to vector<8x1xf32>
    %cst_72 = arith.constant dense<0.000000e+00> : vector<1xf32>
    %73 = vector.multi_reduction <add>, %72, %cst_72 [0] : vector<8x1xf32> to vector<1xf32>
    %74 = vector.shape_cast %73 : vector<1xf32> to vector<1x1xf32>
    %cst_73 = arith.constant 4.8828125E-4 : f32
    %75 = vector.broadcast %cst_73 : f32 to vector<1x1xf32>
    %76 = arith.mulf %74, %75 : vector<1x1xf32>
    %77 = vector.broadcast %76 : vector<1x1xf32> to vector<8x256xf32>
    %78 = arith.subf %70, %77 : vector<8x256xf32>
    %79 = arith.mulf %78, %78 : vector<8x256xf32>
    %cst_74 = arith.constant dense<0.000000e+00> : vector<8xf32>
    %80 = vector.multi_reduction <add>, %79, %cst_74 [1] : vector<8x256xf32> to vector<8xf32>
    %81 = vector.shape_cast %80 : vector<8xf32> to vector<8x1xf32>
    %cst_75 = arith.constant dense<0.000000e+00> : vector<1xf32>
    %82 = vector.multi_reduction <add>, %81, %cst_75 [0] : vector<8x1xf32> to vector<1xf32>
    %83 = vector.shape_cast %82 : vector<1xf32> to vector<1x1xf32>
    %cst_76 = arith.constant 4.8828125E-4 : f32
    %84 = vector.broadcast %cst_76 : f32 to vector<1x1xf32>
    %85 = arith.mulf %83, %84 : vector<1x1xf32>
    %cst_77 = arith.constant 9.99999974E-6 : f32
    %86 = vector.broadcast %cst_77 : f32 to vector<1x1xf32>
    %87 = arith.addf %85, %86 : vector<1x1xf32>
    %88 = math.rsqrt %87 : vector<1x1xf32>
    %c0_78 = arith.constant 0 : index
    %c0_79 = arith.constant 0 : index
    %89 = vector.load %arg6[%c0_78, %c0_79] : memref<8x256xf32, #tpu.memory_space<vmem>>, vector<8x256xf32>
    %90 = vector.broadcast %88 : vector<1x1xf32> to vector<8x256xf32>
    %91 = arith.mulf %89, %90 : vector<8x256xf32>
    %92 = arith.mulf %78, %91 : vector<8x256xf32>
    %c0_80 = arith.constant 0 : index
    %c0_81 = arith.constant 0 : index
    %93 = vector.load %arg7[%c0_80, %c0_81] : memref<8x256xf32, #tpu.memory_space<vmem>>, vector<8x256xf32>
    %94 = arith.addf %92, %93 : vector<8x256xf32>
    %cst_82 = arith.constant 2.000000e-01 : f32
    %95 = vector.broadcast %cst_82 : f32 to vector<8x256xf32>
    %96 = arith.mulf %95, %94 : vector<8x256xf32>
    %97 = arith.maximumf %94, %96 : vector<8x256xf32>
    %cst_83 = arith.constant 0.000000e+00 : f32
    %98 = vector.broadcast %cst_83 : f32 to vector<8x256xf32>
    %c0_84 = arith.constant 0 : index
    %c0_85 = arith.constant 0 : index
    %c0_86 = arith.constant 0 : index
    %99 = vector.load %arg8[%c0_84, %c0_85, %c0_86] : memref<9x8x8xf32, #tpu.memory_space<vmem>>, vector<1x8x8xf32>
    %100 = vector.shape_cast %99 : vector<1x8x8xf32> to vector<8x8xf32>
    %cst_87 = arith.constant dense<0.000000e+00> : vector<8x256xf32>
    %101 = tpu.matmul %100, %97, %cst_87 {dimension_numbers = #tpu.dot_dimension_numbers<[1], [0], [0], [1], [0, 0, 1, 1], [], []>} : vector<8x8xf32>, vector<8x256xf32>, vector<8x256xf32> -> vector<8x256xf32>
    %c0_88 = arith.constant 0 : index
    %c0_89 = arith.constant 0 : index
    %c0_90 = arith.constant 0 : index
    %102 = vector.load %arg3[%c0_88, %c0_89, %c0_90] : memref<9x256x256xf32, #tpu.memory_space<vmem>>, vector<1x256x256xf32>
    %103 = vector.shape_cast %102 : vector<1x256x256xf32> to vector<256x256xf32>
    %cst_91 = arith.constant dense<0.000000e+00> : vector<8x256xf32>
    %104 = tpu.matmul %101, %103, %cst_91 {dimension_numbers = #tpu.dot_dimension_numbers<[1], [0], [0], [1], [0, 0, 1, 1], [], []>} : vector<8x256xf32>, vector<256x256xf32>, vector<8x256xf32> -> vector<8x256xf32>
    %105 = arith.addf %98, %104 : vector<8x256xf32>
    %c1_92 = arith.constant 1 : index
    %c0_93 = arith.constant 0 : index
    %c0_94 = arith.constant 0 : index
    %106 = vector.load %arg8[%c1_92, %c0_93, %c0_94] : memref<9x8x8xf32, #tpu.memory_space<vmem>>, vector<1x8x8xf32>
    %107 = vector.shape_cast %106 : vector<1x8x8xf32> to vector<8x8xf32>
    %cst_95 = arith.constant dense<0.000000e+00> : vector<8x256xf32>
    %108 = tpu.matmul %107, %97, %cst_95 {dimension_numbers = #tpu.dot_dimension_numbers<[1], [0], [0], [1], [0, 0, 1, 1], [], []>} : vector<8x8xf32>, vector<8x256xf32>, vector<8x256xf32> -> vector<8x256xf32>
    %c1_96 = arith.constant 1 : index
    %c0_97 = arith.constant 0 : index
    %c0_98 = arith.constant 0 : index
    %109 = vector.load %arg3[%c1_96, %c0_97, %c0_98] : memref<9x256x256xf32, #tpu.memory_space<vmem>>, vector<1x256x256xf32>
    %110 = vector.shape_cast %109 : vector<1x256x256xf32> to vector<256x256xf32>
    %cst_99 = arith.constant dense<0.000000e+00> : vector<8x256xf32>
    %111 = tpu.matmul %108, %110, %cst_99 {dimension_numbers = #tpu.dot_dimension_numbers<[1], [0], [0], [1], [0, 0, 1, 1], [], []>} : vector<8x256xf32>, vector<256x256xf32>, vector<8x256xf32> -> vector<8x256xf32>
    %112 = arith.addf %105, %111 : vector<8x256xf32>
    %c2_100 = arith.constant 2 : index
    %c0_101 = arith.constant 0 : index
    %c0_102 = arith.constant 0 : index
    %113 = vector.load %arg8[%c2_100, %c0_101, %c0_102] : memref<9x8x8xf32, #tpu.memory_space<vmem>>, vector<1x8x8xf32>
    %114 = vector.shape_cast %113 : vector<1x8x8xf32> to vector<8x8xf32>
    %cst_103 = arith.constant dense<0.000000e+00> : vector<8x256xf32>
    %115 = tpu.matmul %114, %97, %cst_103 {dimension_numbers = #tpu.dot_dimension_numbers<[1], [0], [0], [1], [0, 0, 1, 1], [], []>} : vector<8x8xf32>, vector<8x256xf32>, vector<8x256xf32> -> vector<8x256xf32>
    %c2_104 = arith.constant 2 : index
    %c0_105 = arith.constant 0 : index
    %c0_106 = arith.constant 0 : index
    %116 = vector.load %arg3[%c2_104, %c0_105, %c0_106] : memref<9x256x256xf32, #tpu.memory_space<vmem>>, vector<1x256x256xf32>
    %117 = vector.shape_cast %116 : vector<1x256x256xf32> to vector<256x256xf32>
    %cst_107 = arith.constant dense<0.000000e+00> : vector<8x256xf32>
    %118 = tpu.matmul %115, %117, %cst_107 {dimension_numbers = #tpu.dot_dimension_numbers<[1], [0], [0], [1], [0, 0, 1, 1], [], []>} : vector<8x256xf32>, vector<256x256xf32>, vector<8x256xf32> -> vector<8x256xf32>
    %119 = arith.addf %112, %118 : vector<8x256xf32>
    %c3_108 = arith.constant 3 : index
    %c0_109 = arith.constant 0 : index
    %c0_110 = arith.constant 0 : index
    %120 = vector.load %arg8[%c3_108, %c0_109, %c0_110] : memref<9x8x8xf32, #tpu.memory_space<vmem>>, vector<1x8x8xf32>
    %121 = vector.shape_cast %120 : vector<1x8x8xf32> to vector<8x8xf32>
    %cst_111 = arith.constant dense<0.000000e+00> : vector<8x256xf32>
    %122 = tpu.matmul %121, %97, %cst_111 {dimension_numbers = #tpu.dot_dimension_numbers<[1], [0], [0], [1], [0, 0, 1, 1], [], []>} : vector<8x8xf32>, vector<8x256xf32>, vector<8x256xf32> -> vector<8x256xf32>
    %c3_112 = arith.constant 3 : index
    %c0_113 = arith.constant 0 : index
    %c0_114 = arith.constant 0 : index
    %123 = vector.load %arg3[%c3_112, %c0_113, %c0_114] : memref<9x256x256xf32, #tpu.memory_space<vmem>>, vector<1x256x256xf32>
    %124 = vector.shape_cast %123 : vector<1x256x256xf32> to vector<256x256xf32>
    %cst_115 = arith.constant dense<0.000000e+00> : vector<8x256xf32>
    %125 = tpu.matmul %122, %124, %cst_115 {dimension_numbers = #tpu.dot_dimension_numbers<[1], [0], [0], [1], [0, 0, 1, 1], [], []>} : vector<8x256xf32>, vector<256x256xf32>, vector<8x256xf32> -> vector<8x256xf32>
    %126 = arith.addf %119, %125 : vector<8x256xf32>
    %c4_116 = arith.constant 4 : index
    %c0_117 = arith.constant 0 : index
    %c0_118 = arith.constant 0 : index
    %127 = vector.load %arg8[%c4_116, %c0_117, %c0_118] : memref<9x8x8xf32, #tpu.memory_space<vmem>>, vector<1x8x8xf32>
    %128 = vector.shape_cast %127 : vector<1x8x8xf32> to vector<8x8xf32>
    %cst_119 = arith.constant dense<0.000000e+00> : vector<8x256xf32>
    %129 = tpu.matmul %128, %97, %cst_119 {dimension_numbers = #tpu.dot_dimension_numbers<[1], [0], [0], [1], [0, 0, 1, 1], [], []>} : vector<8x8xf32>, vector<8x256xf32>, vector<8x256xf32> -> vector<8x256xf32>
    %c4_120 = arith.constant 4 : index
    %c0_121 = arith.constant 0 : index
    %c0_122 = arith.constant 0 : index
    %130 = vector.load %arg3[%c4_120, %c0_121, %c0_122] : memref<9x256x256xf32, #tpu.memory_space<vmem>>, vector<1x256x256xf32>
    %131 = vector.shape_cast %130 : vector<1x256x256xf32> to vector<256x256xf32>
    %cst_123 = arith.constant dense<0.000000e+00> : vector<8x256xf32>
    %132 = tpu.matmul %129, %131, %cst_123 {dimension_numbers = #tpu.dot_dimension_numbers<[1], [0], [0], [1], [0, 0, 1, 1], [], []>} : vector<8x256xf32>, vector<256x256xf32>, vector<8x256xf32> -> vector<8x256xf32>
    %133 = arith.addf %126, %132 : vector<8x256xf32>
    %c5_124 = arith.constant 5 : index
    %c0_125 = arith.constant 0 : index
    %c0_126 = arith.constant 0 : index
    %134 = vector.load %arg8[%c5_124, %c0_125, %c0_126] : memref<9x8x8xf32, #tpu.memory_space<vmem>>, vector<1x8x8xf32>
    %135 = vector.shape_cast %134 : vector<1x8x8xf32> to vector<8x8xf32>
    %cst_127 = arith.constant dense<0.000000e+00> : vector<8x256xf32>
    %136 = tpu.matmul %135, %97, %cst_127 {dimension_numbers = #tpu.dot_dimension_numbers<[1], [0], [0], [1], [0, 0, 1, 1], [], []>} : vector<8x8xf32>, vector<8x256xf32>, vector<8x256xf32> -> vector<8x256xf32>
    %c5_128 = arith.constant 5 : index
    %c0_129 = arith.constant 0 : index
    %c0_130 = arith.constant 0 : index
    %137 = vector.load %arg3[%c5_128, %c0_129, %c0_130] : memref<9x256x256xf32, #tpu.memory_space<vmem>>, vector<1x256x256xf32>
    %138 = vector.shape_cast %137 : vector<1x256x256xf32> to vector<256x256xf32>
    %cst_131 = arith.constant dense<0.000000e+00> : vector<8x256xf32>
    %139 = tpu.matmul %136, %138, %cst_131 {dimension_numbers = #tpu.dot_dimension_numbers<[1], [0], [0], [1], [0, 0, 1, 1], [], []>} : vector<8x256xf32>, vector<256x256xf32>, vector<8x256xf32> -> vector<8x256xf32>
    %140 = arith.addf %133, %139 : vector<8x256xf32>
    %c6_132 = arith.constant 6 : index
    %c0_133 = arith.constant 0 : index
    %c0_134 = arith.constant 0 : index
    %141 = vector.load %arg8[%c6_132, %c0_133, %c0_134] : memref<9x8x8xf32, #tpu.memory_space<vmem>>, vector<1x8x8xf32>
    %142 = vector.shape_cast %141 : vector<1x8x8xf32> to vector<8x8xf32>
    %cst_135 = arith.constant dense<0.000000e+00> : vector<8x256xf32>
    %143 = tpu.matmul %142, %97, %cst_135 {dimension_numbers = #tpu.dot_dimension_numbers<[1], [0], [0], [1], [0, 0, 1, 1], [], []>} : vector<8x8xf32>, vector<8x256xf32>, vector<8x256xf32> -> vector<8x256xf32>
    %c6_136 = arith.constant 6 : index
    %c0_137 = arith.constant 0 : index
    %c0_138 = arith.constant 0 : index
    %144 = vector.load %arg3[%c6_136, %c0_137, %c0_138] : memref<9x256x256xf32, #tpu.memory_space<vmem>>, vector<1x256x256xf32>
    %145 = vector.shape_cast %144 : vector<1x256x256xf32> to vector<256x256xf32>
    %cst_139 = arith.constant dense<0.000000e+00> : vector<8x256xf32>
    %146 = tpu.matmul %143, %145, %cst_139 {dimension_numbers = #tpu.dot_dimension_numbers<[1], [0], [0], [1], [0, 0, 1, 1], [], []>} : vector<8x256xf32>, vector<256x256xf32>, vector<8x256xf32> -> vector<8x256xf32>
    %147 = arith.addf %140, %146 : vector<8x256xf32>
    %c7_140 = arith.constant 7 : index
    %c0_141 = arith.constant 0 : index
    %c0_142 = arith.constant 0 : index
    %148 = vector.load %arg8[%c7_140, %c0_141, %c0_142] : memref<9x8x8xf32, #tpu.memory_space<vmem>>, vector<1x8x8xf32>
    %149 = vector.shape_cast %148 : vector<1x8x8xf32> to vector<8x8xf32>
    %cst_143 = arith.constant dense<0.000000e+00> : vector<8x256xf32>
    %150 = tpu.matmul %149, %97, %cst_143 {dimension_numbers = #tpu.dot_dimension_numbers<[1], [0], [0], [1], [0, 0, 1, 1], [], []>} : vector<8x8xf32>, vector<8x256xf32>, vector<8x256xf32> -> vector<8x256xf32>
    %c7_144 = arith.constant 7 : index
    %c0_145 = arith.constant 0 : index
    %c0_146 = arith.constant 0 : index
    %151 = vector.load %arg3[%c7_144, %c0_145, %c0_146] : memref<9x256x256xf32, #tpu.memory_space<vmem>>, vector<1x256x256xf32>
    %152 = vector.shape_cast %151 : vector<1x256x256xf32> to vector<256x256xf32>
    %cst_147 = arith.constant dense<0.000000e+00> : vector<8x256xf32>
    %153 = tpu.matmul %150, %152, %cst_147 {dimension_numbers = #tpu.dot_dimension_numbers<[1], [0], [0], [1], [0, 0, 1, 1], [], []>} : vector<8x256xf32>, vector<256x256xf32>, vector<8x256xf32> -> vector<8x256xf32>
    %154 = arith.addf %147, %153 : vector<8x256xf32>
    %c8_148 = arith.constant 8 : index
    %c0_149 = arith.constant 0 : index
    %c0_150 = arith.constant 0 : index
    %155 = vector.load %arg8[%c8_148, %c0_149, %c0_150] : memref<9x8x8xf32, #tpu.memory_space<vmem>>, vector<1x8x8xf32>
    %156 = vector.shape_cast %155 : vector<1x8x8xf32> to vector<8x8xf32>
    %cst_151 = arith.constant dense<0.000000e+00> : vector<8x256xf32>
    %157 = tpu.matmul %156, %97, %cst_151 {dimension_numbers = #tpu.dot_dimension_numbers<[1], [0], [0], [1], [0, 0, 1, 1], [], []>} : vector<8x8xf32>, vector<8x256xf32>, vector<8x256xf32> -> vector<8x256xf32>
    %c8_152 = arith.constant 8 : index
    %c0_153 = arith.constant 0 : index
    %c0_154 = arith.constant 0 : index
    %158 = vector.load %arg3[%c8_152, %c0_153, %c0_154] : memref<9x256x256xf32, #tpu.memory_space<vmem>>, vector<1x256x256xf32>
    %159 = vector.shape_cast %158 : vector<1x256x256xf32> to vector<256x256xf32>
    %cst_155 = arith.constant dense<0.000000e+00> : vector<8x256xf32>
    %160 = tpu.matmul %157, %159, %cst_155 {dimension_numbers = #tpu.dot_dimension_numbers<[1], [0], [0], [1], [0, 0, 1, 1], [], []>} : vector<8x256xf32>, vector<256x256xf32>, vector<8x256xf32> -> vector<8x256xf32>
    %161 = arith.addf %154, %160 : vector<8x256xf32>
    %c0_156 = arith.constant 0 : index
    %c0_157 = arith.constant 0 : index
    %162 = vector.load %arg9[%c0_156, %c0_157] : memref<8x1xf32, #tpu.memory_space<vmem>>, vector<8x1xf32>
    %163 = vector.broadcast %162 : vector<8x1xf32> to vector<8x256xf32>
    %164 = arith.addf %161, %163 : vector<8x256xf32>
    %cst_158 = arith.constant dense<0.000000e+00> : vector<8xf32>
    %165 = vector.multi_reduction <add>, %164, %cst_158 [1] : vector<8x256xf32> to vector<8xf32>
    %166 = vector.shape_cast %165 : vector<8xf32> to vector<8x1xf32>
    %cst_159 = arith.constant dense<0.000000e+00> : vector<1xf32>
    %167 = vector.multi_reduction <add>, %166, %cst_159 [0] : vector<8x1xf32> to vector<1xf32>
    %168 = vector.shape_cast %167 : vector<1xf32> to vector<1x1xf32>
    %cst_160 = arith.constant 4.8828125E-4 : f32
    %169 = vector.broadcast %cst_160 : f32 to vector<1x1xf32>
    %170 = arith.mulf %168, %169 : vector<1x1xf32>
    %171 = vector.broadcast %170 : vector<1x1xf32> to vector<8x256xf32>
    %172 = arith.subf %164, %171 : vector<8x256xf32>
    %173 = arith.mulf %172, %172 : vector<8x256xf32>
    %cst_161 = arith.constant dense<0.000000e+00> : vector<8xf32>
    %174 = vector.multi_reduction <add>, %173, %cst_161 [1] : vector<8x256xf32> to vector<8xf32>
    %175 = vector.shape_cast %174 : vector<8xf32> to vector<8x1xf32>
    %cst_162 = arith.constant dense<0.000000e+00> : vector<1xf32>
    %176 = vector.multi_reduction <add>, %175, %cst_162 [0] : vector<8x1xf32> to vector<1xf32>
    %177 = vector.shape_cast %176 : vector<1xf32> to vector<1x1xf32>
    %cst_163 = arith.constant 4.8828125E-4 : f32
    %178 = vector.broadcast %cst_163 : f32 to vector<1x1xf32>
    %179 = arith.mulf %177, %178 : vector<1x1xf32>
    %cst_164 = arith.constant 9.99999974E-6 : f32
    %180 = vector.broadcast %cst_164 : f32 to vector<1x1xf32>
    %181 = arith.addf %179, %180 : vector<1x1xf32>
    %182 = math.rsqrt %181 : vector<1x1xf32>
    %c0_165 = arith.constant 0 : index
    %c0_166 = arith.constant 0 : index
    %183 = vector.load %arg10[%c0_165, %c0_166] : memref<8x256xf32, #tpu.memory_space<vmem>>, vector<8x256xf32>
    %184 = vector.broadcast %182 : vector<1x1xf32> to vector<8x256xf32>
    %185 = arith.mulf %183, %184 : vector<8x256xf32>
    %186 = arith.mulf %172, %185 : vector<8x256xf32>
    %c0_167 = arith.constant 0 : index
    %c0_168 = arith.constant 0 : index
    %187 = vector.load %arg11[%c0_167, %c0_168] : memref<8x256xf32, #tpu.memory_space<vmem>>, vector<8x256xf32>
    %188 = arith.addf %186, %187 : vector<8x256xf32>
    %cst_169 = arith.constant 2.000000e-01 : f32
    %189 = vector.broadcast %cst_169 : f32 to vector<8x256xf32>
    %190 = arith.mulf %189, %188 : vector<8x256xf32>
    %191 = arith.maximumf %188, %190 : vector<8x256xf32>
    %c0_170 = arith.constant 0 : index
    %c0_171 = arith.constant 0 : index
    %c0_172 = arith.constant 0 : index
    %192 = vector.load %arg12[%c0_170, %c0_171, %c0_172] : memref<1x8x256xf32, #tpu.memory_space<vmem>>, vector<1x8x256xf32>
    %193 = vector.shape_cast %192 : vector<1x8x256xf32> to vector<8x256xf32>
    %194 = vector.shape_cast %191 : vector<8x256xf32> to vector<1x8x256xf32>
    tpu.vector_store %arg12[%c0_170, %c0_171, %c0_172], %194 {strides = array<i32>} : memref<1x8x256xf32, #tpu.memory_space<vmem>>, vector<1x8x256xf32>,
    return
  }
  func.func @transform_0(%arg0: i32) -> (i32, i32, i32) {
    %c0_i32 = arith.constant 0 : i32
    %c0_i32_0 = arith.constant 0 : i32
    %c0_i32_1 = arith.constant 0 : i32
    return %arg0, %c0_i32, %c0_i32_0 : i32, i32, i32
  }
  func.func @transform_1(%arg0: i32) -> (i32, i32) {
    %c0_i32 = arith.constant 0 : i32
    %c0_i32_0 = arith.constant 0 : i32
    %c0_i32_1 = arith.constant 0 : i32
    return %c0_i32, %c0_i32_0 : i32, i32
  }
  func.func @transform_2(%arg0: i32) -> (i32, i32, i32) {
    %c0_i32 = arith.constant 0 : i32
    %c0_i32_0 = arith.constant 0 : i32
    %c0_i32_1 = arith.constant 0 : i32
    %c0_i32_2 = arith.constant 0 : i32
    return %c0_i32, %c0_i32_0, %c0_i32_1 : i32, i32, i32
  }
  func.func @transform_3(%arg0: i32) -> (i32, i32, i32) {
    %c0_i32 = arith.constant 0 : i32
    %c0_i32_0 = arith.constant 0 : i32
    %c0_i32_1 = arith.constant 0 : i32
    %c0_i32_2 = arith.constant 0 : i32
    return %c0_i32, %c0_i32_0, %c0_i32_1 : i32, i32, i32
  }
  func.func @transform_4(%arg0: i32) -> (i32, i32) {
    %c0_i32 = arith.constant 0 : i32
    %c0_i32_0 = arith.constant 0 : i32
    %c0_i32_1 = arith.constant 0 : i32
    return %c0_i32, %c0_i32_0 : i32, i32
  }
  func.func @transform_5(%arg0: i32) -> (i32, i32) {
    %c0_i32 = arith.constant 0 : i32
    %c0_i32_0 = arith.constant 0 : i32
    %c0_i32_1 = arith.constant 0 : i32
    return %c0_i32, %c0_i32_0 : i32, i32
  }
  func.func @transform_6(%arg0: i32) -> (i32, i32) {
    %c0_i32 = arith.constant 0 : i32
    %c0_i32_0 = arith.constant 0 : i32
    %c0_i32_1 = arith.constant 0 : i32
    return %c0_i32, %c0_i32_0 : i32, i32
  }
  func.func @transform_7(%arg0: i32) -> (i32, i32, i32) {
    %c0_i32 = arith.constant 0 : i32
    %c0_i32_0 = arith.constant 0 : i32
    %c0_i32_1 = arith.constant 0 : i32
    %c0_i32_2 = arith.constant 0 : i32
    return %c0_i32, %c0_i32_0, %c0_i32_1 : i32, i32, i32
  }
  func.func @transform_8(%arg0: i32) -> (i32, i32) {
    %c0_i32 = arith.constant 0 : i32
    %c0_i32_0 = arith.constant 0 : i32
    %c0_i32_1 = arith.constant 0 : i32
    return %c0_i32, %c0_i32_0 : i32, i32
  }
  func.func @transform_9(%arg0: i32) -> (i32, i32) {
    %c0_i32 = arith.constant 0 : i32
    %c0_i32_0 = arith.constant 0 : i32
    %c0_i32_1 = arith.constant 0 : i32
    return %c0_i32, %c0_i32_0 : i32, i32
  }
  func.func @transform_10(%arg0: i32) -> (i32, i32) {
    %c0_i32 = arith.constant 0 : i32
    %c0_i32_0 = arith.constant 0 : i32
    %c0_i32_1 = arith.constant 0 : i32
    return %c0_i32, %c0_i32_0 : i32, i32
  }
  func.func @transform_11(%arg0: i32) -> (i32, i32, i32) {
    %c0_i32 = arith.constant 0 : i32
    %c0_i32_0 = arith.constant 0 : i32
    %c0_i32_1 = arith.constant 0 : i32
    return %arg0, %c0_i32, %c0_i32_0 : i32, i32, i32
  }
}

</mosaic_0001>

<llo_original>
// kernel: tpu_custom_call.1
$region0: #{tpu_custom_call.1}
  #allocation0 [shape = 'u32[]', space=smem, size = 0x4, offset = 0x4, fixed_abs, tag = 'smem constant byte address 0x4 - core index']
  #allocation1 [shape = 'u32[144,128]{1,0:T(1,128)}', space=vmem, size = 0x12000, scoped, tag = 'internal scratch']
  %s0 = inlined_call_operand.hbm [shape: f32[2,4,64], index: 0, kind: input, shape index: {}]
  %s1 = inlined_call_operand.hbm [shape: f32[64,256], index: 1, kind: input, shape index: {}]
  %s2 = inlined_call_operand.hbm [shape: f32[9,256,256], index: 2, kind: input, shape index: {}]
  %s3 = inlined_call_operand.vmem [shape: f32[9,8,4], index: 3, kind: input, shape index: {}]
  %s4 = inlined_call_operand.vmem [shape: f32[8,1], index: 4, kind: input, shape index: {}]
  %s5 = inlined_call_operand.hbm [shape: f32[8,256], index: 5, kind: input, shape index: {}]
  %s6 = inlined_call_operand.hbm [shape: f32[8,256], index: 6, kind: input, shape index: {}]
  %s7 = inlined_call_operand.vmem [shape: f32[9,8,8], index: 7, kind: input, shape index: {}]
  %s8 = inlined_call_operand.vmem [shape: f32[8,1], index: 8, kind: input, shape index: {}]
  %s9 = inlined_call_operand.hbm [shape: f32[8,256], index: 9, kind: input, shape index: {}]
  %s10 = inlined_call_operand.hbm [shape: f32[8,256], index: 10, kind: input, shape index: {}]
  %s11 = inlined_call_operand.hbm [shape: f32[2,8,256], index: 11, kind: output, shape index: {}]
  %s12 = sld [smem:[#allocation0]]
  $region105: #{tpu_custom_call.1} parent=0
    _
  %s14 = ssub.s32 1, %s12
  %s15 = scalar_select 0, %s14, %s12
  $region1: #{tpu_custom_call.1} parent=0
    #allocation2 [shape = 'u8[4096]{0}', space=vmem, size = 0x1000, scoped, tag = 'input window, operand 0']
    #allocation3 [shape = 's32[2]{0}', space=sflag, size = 0x8, scoped, tag = 'scoped memory for tpu_custom_call.1']
    #allocation4 [shape = 's32[2]{0}', space=sflag, size = 0x8, scoped, tag = 'scoped memory for tpu_custom_call.1']
    #allocation5 [shape = 'u8[65536]{0}', space=vmem, size = 0x10000, scoped, tag = 'input window, operand 1, single buffered']
    #allocation6 [shape = 's32[1]{0}', space=sflag, size = 0x4, scoped, tag = 'scoped memory for tpu_custom_call.1']
    #allocation7 [shape = 'u8[2359296]{0}', space=vmem, size = 0x240000, scoped, tag = 'input window, operand 2, single buffered']
    #allocation8 [shape = 'u8[8192]{0}', space=vmem, size = 0x2000, scoped, tag = 'input window, operand 5, single buffered']
    #allocation9 [shape = 's32[1]{0}', space=sflag, size = 0x4, scoped, tag = 'scoped memory for tpu_custom_call.1']
    #allocation10 [shape = 'u8[8192]{0}', space=vmem, size = 0x2000, scoped, tag = 'input window, operand 6, single buffered']
    #allocation11 [shape = 'u8[8192]{0}', space=vmem, size = 0x2000, scoped, tag = 'input window, operand 9, single buffered']
    #allocation12 [shape = 's32[1]{0}', space=sflag, size = 0x4, scoped, tag = 'scoped memory for tpu_custom_call.1']
    #allocation13 [shape = 'u8[8192]{0}', space=vmem, size = 0x2000, scoped, tag = 'input window, operand 10, single buffered']
    #allocation14 [shape = 'u8[16384]{0}', space=vmem, size = 0x4000, scoped, tag = 'output window, operand 0']
    %16 = vsyncpa [#allocation3], 0
    %s17 = scalar_lea.sflag [#allocation3], 1
    %18 = vsyncpa %s17, 0
    %19 = vsyncpa [#allocation6], 0
    %20 = vsyncpa [#allocation9], 0
    %21 = vsyncpa [#allocation12], 0
    %22 = vsyncpa [#allocation4], 0
    %s23 = scalar_lea.sflag [#allocation4], 1
    %24 = vsyncpa %s23, 0
    loop: start=0, step=1, limit=4
    $region2: #{tpu_custom_call.1} parent=1 // loop_pre_header
      _
    $region3: #{tpu_custom_call.1} parent=1 // loop_header
      %s26 = sphi 0, %s30
      %p27 = scmp.ge.s32.totalorder %s26, 4
      %s36 = sphi 0, %s38
      %s39 = sphi 0, %s36
      %s40 = sphi 0, %s39
      %s56 = sphi 0, %s40
      %s60 = sphi 0, %s60
      %s62 = sphi 0, %s60
      %s63 = sphi 0, %s62
      %s77 = sphi 0, %s63
      %s81 = sphi 0, %s81
      %s83 = sphi 0, %s81
      %s84 = sphi 0, %s83
      %s98 = sphi 0, %s84
      %s102 = sphi 0, %s102
      %s104 = sphi 0, %s102
      %s105 = sphi 0, %s104
      %s119 = sphi 0, %s105
      %s123 = sphi 0, %s123
      %s125 = sphi 0, %s123
      %s126 = sphi 0, %s125
      %s140 = sphi 0, %s126
      %s144 = sphi 0, %s144
      %s146 = sphi 0, %s144
      %s147 = sphi 0, %s146
      %s161 = sphi 0, %s147
      %s165 = sphi 0, %s165
      %s167 = sphi 0, %s165
      %s168 = sphi 0, %s167
      %s182 = sphi 0, %s168
      %s186 = sphi 0, %s186
      %s188 = sphi 0, %s186
      %s189 = sphi 0, %s188
      %s203 = sphi 0, %s189
      %s207 = sphi 0, %s207
      %s209 = sphi 0, %s207
      %s210 = sphi 0, %s209
      %s224 = sphi 0, %s210
      %s228 = sphi 0, %s228
      %s230 = sphi 0, %s228
      %s231 = sphi 0, %s230
      %s245 = sphi 0, %s231
      %s249 = sphi 0, %s249
      %s251 = sphi 0, %s249
      %s252 = sphi 0, %s251
      %s266 = sphi 0, %s252
      %s272 = sphi 0, %s274
      %s275 = sphi 0, %s272
      %s276 = sphi 0, %s275
      %s292 = sphi 0, %s276
    $region4: #{tpu_custom_call.1} parent=1 // loop_header_branch
      %29 = sbr.rel (%p27) target = $region8
    $region5: #{tpu_custom_call.1} parent=1 // loop_body
      %s31 = ssub.s32 %s26, 1
      %s32 = ssub.s32 %s26, 2
      %s33 = sadd.s32 %s26, 1
      %s34 = ssub.s32 %s26, %s33
      %p35 = scmp.eq.s32.totalorder %s34, 0
      %s37 = sadd.s32 %s36, 1
      %s38 = scalar_select %p35, %s36, %s37
      %p41 = pneg %p35
      %p42 = scmp.eq.s32.totalorder %s26, 1
      %p43 = por %p41, %p42
      %p44 = scmp.ne.s32.totalorder %s36, %s39
      %p45 = scmp.eq.s32.totalorder %s26, 0
      %p46 = por %p44, %p45
      %p47 = scmp.ne.s32.totalorder %s36, %s39
      %p48 = scmp.eq.s32.totalorder %s31, 1
      %p49 = por %p47, %p48
      %p50 = scmp.ne.s32.totalorder %s39, %s40
      %p51 = scmp.eq.s32.totalorder %s31, 0
      %p52 = por %p50, %p51
      %p53 = scmp.ne.s32.totalorder %s39, %s40
      %p54 = scmp.eq.s32.totalorder %s32, 1
      %p55 = por %p53, %p54
      %p57 = scmp.ne.s32.totalorder %s40, %s56
      %p58 = scmp.eq.s32.totalorder %s32, 0
      %p59 = por %p57, %p58
      %s61 = sadd.s32 %s60, 1
      %p64 = scmp.eq.s32.totalorder %s26, 1
      %p65 = scmp.ne.s32.totalorder %s60, %s62
      %p66 = scmp.eq.s32.totalorder %s26, 0
      %p67 = por %p65, %p66
      %p68 = scmp.ne.s32.totalorder %s60, %s62
      %p69 = scmp.eq.s32.totalorder %s31, 1
      %p70 = por %p68, %p69
      %p71 = scmp.ne.s32.totalorder %s62, %s63
      %p72 = scmp.eq.s32.totalorder %s31, 0
      %p73 = por %p71, %p72
      %p74 = scmp.ne.s32.totalorder %s62, %s63
      %p75 = scmp.eq.s32.totalorder %s32, 1
      %p76 = por %p74, %p75
      %p78 = scmp.ne.s32.totalorder %s63, %s77
      %p79 = scmp.eq.s32.totalorder %s32, 0
      %p80 = por %p78, %p79
      %s82 = sadd.s32 %s81, 1
      %p85 = scmp.eq.s32.totalorder %s26, 1
      %p86 = scmp.ne.s32.totalorder %s81, %s83
      %p87 = scmp.eq.s32.totalorder %s26, 0
      %p88 = por %p86, %p87
      %p89 = scmp.ne.s32.totalorder %s81, %s83
      %p90 = scmp.eq.s32.totalorder %s31, 1
      %p91 = por %p89, %p90
      %p92 = scmp.ne.s32.totalorder %s83, %s84
      %p93 = scmp.eq.s32.totalorder %s31, 0
      %p94 = por %p92, %p93
      %p95 = scmp.ne.s32.totalorder %s83, %s84
      %p96 = scmp.eq.s32.totalorder %s32, 1
      %p97 = por %p95, %p96
      %p99 = scmp.ne.s32.totalorder %s84, %s98
      %p100 = scmp.eq.s32.totalorder %s32, 0
      %p101 = por %p99, %p100
      %s103 = sadd.s32 %s102, 1
      %p106 = scmp.eq.s32.totalorder %s26, 1
      %p107 = scmp.ne.s32.totalorder %s102, %s104
      %p108 = scmp.eq.s32.totalorder %s26, 0
      %p109 = por %p107, %p108
      %p110 = scmp.ne.s32.totalorder %s102, %s104
      %p111 = scmp.eq.s32.totalorder %s31, 1
      %p112 = por %p110, %p111
      %p113 = scmp.ne.s32.totalorder %s104, %s105
      %p114 = scmp.eq.s32.totalorder %s31, 0
      %p115 = por %p113, %p114
      %p116 = scmp.ne.s32.totalorder %s104, %s105
      %p117 = scmp.eq.s32.totalorder %s32, 1
      %p118 = por %p116, %p117
      %p120 = scmp.ne.s32.totalorder %s105, %s119
      %p121 = scmp.eq.s32.totalorder %s32, 0
      %p122 = por %p120, %p121
      %s124 = sadd.s32 %s123, 1
      %p127 = scmp.eq.s32.totalorder %s26, 1
      %p128 = scmp.ne.s32.totalorder %s123, %s125
      %p129 = scmp.eq.s32.totalorder %s26, 0
      %p130 = por %p128, %p129
      %p131 = scmp.ne.s32.totalorder %s123, %s125
      %p132 = scmp.eq.s32.totalorder %s31, 1
      %p133 = por %p131, %p132
      %p134 = scmp.ne.s32.totalorder %s125, %s126
      %p135 = scmp.eq.s32.totalorder %s31, 0
      %p136 = por %p134, %p135
      %p137 = scmp.ne.s32.totalorder %s125, %s126
      %p138 = scmp.eq.s32.totalorder %s32, 1
      %p139 = por %p137, %p138
      %p141 = scmp.ne.s32.totalorder %s126, %s140
      %p142 = scmp.eq.s32.totalorder %s32, 0
      %p143 = por %p141, %p142
      %s145 = sadd.s32 %s144, 1
      %p148 = scmp.eq.s32.totalorder %s26, 1
      %p149 = scmp.ne.s32.totalorder %s144, %s146
      %p150 = scmp.eq.s32.totalorder %s26, 0
      %p151 = por %p149, %p150
      %p152 = scmp.ne.s32.totalorder %s144, %s146
      %p153 = scmp.eq.s32.totalorder %s31, 1
      %p154 = por %p152, %p153
      %p155 = scmp.ne.s32.totalorder %s146, %s147
      %p156 = scmp.eq.s32.totalorder %s31, 0
      %p157 = por %p155, %p156
      %p158 = scmp.ne.s32.totalorder %s146, %s147
      %p159 = scmp.eq.s32.totalorder %s32, 1
      %p160 = por %p158, %p159
      %p162 = scmp.ne.s32.totalorder %s147, %s161
      %p163 = scmp.eq.s32.totalorder %s32, 0
      %p164 = por %p162, %p163
      %s166 = sadd.s32 %s165, 1
      %p169 = scmp.eq.s32.totalorder %s26, 1
      %p170 = scmp.ne.s32.totalorder %s165, %s167
      %p171 = scmp.eq.s32.totalorder %s26, 0
      %p172 = por %p170, %p171
      %p173 = scmp.ne.s32.totalorder %s165, %s167
      %p174 = scmp.eq.s32.totalorder %s31, 1
      %p175 = por %p173, %p174
      %p176 = scmp.ne.s32.totalorder %s167, %s168
      %p177 = scmp.eq.s32.totalorder %s31, 0
      %p178 = por %p176, %p177
      %p179 = scmp.ne.s32.totalorder %s167, %s168
      %p180 = scmp.eq.s32.totalorder %s32, 1
      %p181 = por %p179, %p180
      %p183 = scmp.ne.s32.totalorder %s168, %s182
      %p184 = scmp.eq.s32.totalorder %s32, 0
      %p185 = por %p183, %p184
      %s187 = sadd.s32 %s186, 1
      %p190 = scmp.eq.s32.totalorder %s26, 1
      %p191 = scmp.ne.s32.totalorder %s186, %s188
      %p192 = scmp.eq.s32.totalorder %s26, 0
      %p193 = por %p191, %p192
      %p194 = scmp.ne.s32.totalorder %s186, %s188
      %p195 = scmp.eq.s32.totalorder %s31, 1
      %p196 = por %p194, %p195
      %p197 = scmp.ne.s32.totalorder %s188, %s189
      %p198 = scmp.eq.s32.totalorder %s31, 0
      %p199 = por %p197, %p198
      %p200 = scmp.ne.s32.totalorder %s188, %s189
      %p201 = scmp.eq.s32.totalorder %s32, 1
      %p202 = por %p200, %p201
      %p204 = scmp.ne.s32.totalorder %s189, %s203
      %p205 = scmp.eq.s32.totalorder %s32, 0
      %p206 = por %p204, %p205
      %s208 = sadd.s32 %s207, 1
      %p211 = scmp.eq.s32.totalorder %s26, 1
      %p212 = scmp.ne.s32.totalorder %s207, %s209
      %p213 = scmp.eq.s32.totalorder %s26, 0
      %p214 = por %p212, %p213
      %p215 = scmp.ne.s32.totalorder %s207, %s209
      %p216 = scmp.eq.s32.totalorder %s31, 1
      %p217 = por %p215, %p216
      %p218 = scmp.ne.s32.totalorder %s209, %s210
      %p219 = scmp.eq.s32.totalorder %s31, 0
      %p220 = por %p218, %p219
      %p221 = scmp.ne.s32.totalorder %s209, %s210
      %p222 = scmp.eq.s32.totalorder %s32, 1
      %p223 = por %p221, %p222
      %p225 = scmp.ne.s32.totalorder %s210, %s224
      %p226 = scmp.eq.s32.totalorder %s32, 0
      %p227 = por %p225, %p226
      %s229 = sadd.s32 %s228, 1
      %p232 = scmp.eq.s32.totalorder %s26, 1
      %p233 = scmp.ne.s32.totalorder %s228, %s230
      %p234 = scmp.eq.s32.totalorder %s26, 0
      %p235 = por %p233, %p234
      %p236 = scmp.ne.s32.totalorder %s228, %s230
      %p237 = scmp.eq.s32.totalorder %s31, 1
      %p238 = por %p236, %p237
      %p239 = scmp.ne.s32.totalorder %s230, %s231
      %p240 = scmp.eq.s32.totalorder %s31, 0
      %p241 = por %p239, %p240
      %p242 = scmp.ne.s32.totalorder %s230, %s231
      %p243 = scmp.eq.s32.totalorder %s32, 1
      %p244 = por %p242, %p243
      %p246 = scmp.ne.s32.totalorder %s231, %s245
      %p247 = scmp.eq.s32.totalorder %s32, 0
      %p248 = por %p246, %p247
      %s250 = sadd.s32 %s249, 1
      %p253 = scmp.eq.s32.totalorder %s26, 1
      %p254 = scmp.ne.s32.totalorder %s249, %s251
      %p255 = scmp.eq.s32.totalorder %s26, 0
      %p256 = por %p254, %p255
      %p257 = scmp.ne.s32.totalorder %s249, %s251
      %p258 = scmp.eq.s32.totalorder %s31, 1
      %p259 = por %p257, %p258
      %p260 = scmp.ne.s32.totalorder %s251, %s252
      %p261 = scmp.eq.s32.totalorder %s31, 0
      %p262 = por %p260, %p261
      %p263 = scmp.ne.s32.totalorder %s251, %s252
      %p264 = scmp.eq.s32.totalorder %s32, 1
      %p265 = por %p263, %p264
      %p267 = scmp.ne.s32.totalorder %s252, %s266
      %p268 = scmp.eq.s32.totalorder %s32, 0
      %p269 = por %p267, %p268
      %s270 = ssub.s32 %s26, %s33
      %p271 = scmp.eq.s32.totalorder %s270, 0
      %s273 = sadd.s32 %s272, 1
      %s274 = scalar_select %p271, %s272, %s273
      %p277 = pneg %p271
      %p278 = scmp.eq.s32.totalorder %s26, 1
      %p279 = por %p277, %p278
      %p280 = scmp.ne.s32.totalorder %s272, %s275
      %p281 = scmp.eq.s32.totalorder %s26, 0
      %p282 = por %p280, %p281
      %p283 = scmp.ne.s32.totalorder %s272, %s275
      %p284 = scmp.eq.s32.totalorder %s31, 1
      %p285 = por %p283, %p284
      %p286 = scmp.ne.s32.totalorder %s275, %s276
      %p287 = scmp.eq.s32.totalorder %s31, 0
      %p288 = por %p286, %p287
      %p289 = scmp.ne.s32.totalorder %s275, %s276
      %p290 = scmp.eq.s32.totalorder %s32, 1
      %p291 = por %p289, %p290
      %p293 = scmp.ne.s32.totalorder %s276, %s292
      %p294 = scmp.eq.s32.totalorder %s32, 0
      %p295 = por %p293, %p294
      %p296 = scmp.le.s32.totalorder 1, %s26
      %p297 = scmp.lt.s32.totalorder %s26, 3
      %p298 = pnand %p296, %p297
      %p299 = pneg %p298
      // Predicated region
      $region9: #{tpu_custom_call.1} parent=5 // pred_check
        _
      $region10: #{tpu_custom_call.1} parent=5 // pred_check_branch
        %301 = sbr.rel (%p298) target = $region12
      $region11: #{tpu_custom_call.1} parent=5 // pred_region
        %s302 = ssub.s32 %s26, 1
        // Predicated region
        $region13: #{tpu_custom_call.1} parent=11 // pred_check
          %p303 = pneg %p73
        $region14: #{tpu_custom_call.1} parent=11 // pred_check_branch
          %305 = sbr.rel (%p303) target = $region16
        $region15: #{tpu_custom_call.1} parent=11 // pred_region
          %s307 = ssub.s32 2048, 2048
          %308 = vsyncadd [#allocation6], %s307
          %s309 = sshll.u32 [#allocation5], 4
          %s310 = int_to_ptr.vmem [resolvable:$true] %s309
          %315 = dma.hbm_to_vmem [thread:$0]  %s1, 2048, %s310, [#allocation6], 256, 256, 16
        $region16: #{tpu_custom_call.1} parent=11 // pred_fallthru
          _
        // Predicated region
        $region17: #{tpu_custom_call.1} parent=11 // pred_check
          %p316 = pneg %p94
        $region18: #{tpu_custom_call.1} parent=11 // pred_check_branch
          %318 = sbr.rel (%p316) target = $region20
        $region19: #{tpu_custom_call.1} parent=11 // pred_region
          %s320 = ssub.s32 73728, 73728
          %321 = vsyncadd [#allocation6], %s320
          %s322 = sshll.u32 [#allocation7], 4
          %s323 = int_to_ptr.vmem [resolvable:$true] %s322
          %328 = dma.hbm_to_vmem [thread:$0]  %s2, 73728, %s323, [#allocation6], 256, 256, 16
        $region20: #{tpu_custom_call.1} parent=11 // pred_fallthru
          _
        // Predicated region
        $region21: #{tpu_custom_call.1} parent=11 // pred_check
          %p329 = pneg %p115
        $region22: #{tpu_custom_call.1} parent=11 // pred_check_branch
          %331 = sbr.rel (%p329) target = $region24
        $region23: #{tpu_custom_call.1} parent=11 // pred_region
          _
        $region24: #{tpu_custom_call.1} parent=11 // pred_fallthru
          _
        // Predicated region
        $region25: #{tpu_custom_call.1} parent=11 // pred_check
          %p332 = pneg %p136
        $region26: #{tpu_custom_call.1} parent=11 // pred_check_branch
          %334 = sbr.rel (%p332) target = $region28
        $region27: #{tpu_custom_call.1} parent=11 // pred_region
          _
        $region28: #{tpu_custom_call.1} parent=11 // pred_fallthru
          _
        // Predicated region
        $region29: #{tpu_custom_call.1} parent=11 // pred_check
          %p335 = pneg %p157
        $region30: #{tpu_custom_call.1} parent=11 // pred_check_branch
          %337 = sbr.rel (%p335) target = $region32
        $region31: #{tpu_custom_call.1} parent=11 // pred_region
          %s339 = ssub.s32 256, 256
          %340 = vsyncadd [#allocation9], %s339
          %s342 = sshll.u32 [#allocation8], 4
          %s343 = int_to_ptr.vmem [resolvable:$true] %s342
          %345 = dma.hbm_to_vmem [thread:$0]  %s5, 256, %s343, [#allocation9]
        $region32: #{tpu_custom_call.1} parent=11 // pred_fallthru
          _
        // Predicated region
        $region33: #{tpu_custom_call.1} parent=11 // pred_check
          %p346 = pneg %p178
        $region34: #{tpu_custom_call.1} parent=11 // pred_check_branch
          %348 = sbr.rel (%p346) target = $region36
        $region35: #{tpu_custom_call.1} parent=11 // pred_region
          %s350 = ssub.s32 256, 256
          %351 = vsyncadd [#allocation9], %s350
          %s353 = sshll.u32 [#allocation10], 4
          %s354 = int_to_ptr.vmem [resolvable:$true] %s353
          %356 = dma.hbm_to_vmem [thread:$0]  %s6, 256, %s354, [#allocation9]
        $region36: #{tpu_custom_call.1} parent=11 // pred_fallthru
          _
        // Predicated region
        $region37: #{tpu_custom_call.1} parent=11 // pred_check
          %p357 = pneg %p199
        $region38: #{tpu_custom_call.1} parent=11 // pred_check_branch
          %359 = sbr.rel (%p357) target = $region40
        $region39: #{tpu_custom_call.1} parent=11 // pred_region
          _
        $region40: #{tpu_custom_call.1} parent=11 // pred_fallthru
          _
        // Predicated region
        $region41: #{tpu_custom_call.1} parent=11 // pred_check
          %p360 = pneg %p220
        $region42: #{tpu_custom_call.1} parent=11 // pred_check_branch
          %362 = sbr.rel (%p360) target = $region44
        $region43: #{tpu_custom_call.1} parent=11 // pred_region
          _
        $region44: #{tpu_custom_call.1} parent=11 // pred_fallthru
          _
        // Predicated region
        $region45: #{tpu_custom_call.1} parent=11 // pred_check
          %p363 = pneg %p241
        $region46: #{tpu_custom_call.1} parent=11 // pred_check_branch
          %365 = sbr.rel (%p363) target = $region48
        $region47: #{tpu_custom_call.1} parent=11 // pred_region
          %s367 = ssub.s32 256, 256
          %368 = vsyncadd [#allocation12], %s367
          %s370 = sshll.u32 [#allocation11], 4
          %s371 = int_to_ptr.vmem [resolvable:$true] %s370
          %373 = dma.hbm_to_vmem [thread:$0]  %s9, 256, %s371, [#allocation12]
        $region48: #{tpu_custom_call.1} parent=11 // pred_fallthru
          _
        // Predicated region
        $region49: #{tpu_custom_call.1} parent=11 // pred_check
          %p374 = pneg %p262
        $region50: #{tpu_custom_call.1} parent=11 // pred_check_branch
          %376 = sbr.rel (%p374) target = $region52
        $region51: #{tpu_custom_call.1} parent=11 // pred_region
          %s378 = ssub.s32 256, 256
          %379 = vsyncadd [#allocation12], %s378
          %s381 = sshll.u32 [#allocation13], 4
          %s382 = int_to_ptr.vmem [resolvable:$true] %s381
          %384 = dma.hbm_to_vmem [thread:$0]  %s10, 256, %s382, [#allocation12]
        $region52: #{tpu_custom_call.1} parent=11 // pred_fallthru
          _
      $region12: #{tpu_custom_call.1} parent=5 // pred_fallthru
        _
      %p385 = scmp.lt.s32.totalorder %s26, 2
      // Predicated region
      $region53: #{tpu_custom_call.1} parent=5 // pred_check
        %p386 = pneg %p385
      $region54: #{tpu_custom_call.1} parent=5 // pred_check_branch
        %388 = sbr.rel (%p386) target = $region56
      $region55: #{tpu_custom_call.1} parent=5 // pred_region
        // Predicated region
        $region57: #{tpu_custom_call.1} parent=55 // pred_check
          %p389 = pneg %p46
        $region58: #{tpu_custom_call.1} parent=55 // pred_check_branch
          %391 = sbr.rel (%p389) target = $region60
        $region59: #{tpu_custom_call.1} parent=55 // pred_region
          %s392 = sand.u32 %s36, 1
          %s393 = scalar_lea.sflag [#allocation3], %s392
          %s394 = sand.u32 %s36, 1
          %s395 = smul.addr %s394, 4
          %s396 = scalar_lea.vmem [#allocation2], %s395
          %s398 = ssub.s32 64, 64
          %399 = vsyncadd %s393, %s398
          %s400 = smul.addr %s26, 64
          %s401 = scalar_lea.hbm %s0, %s400
          %s403 = sshll.u32 %s396, 4
          %s404 = int_to_ptr.vmem [resolvable:$true] %s403
          %406 = dma.hbm_to_vmem [thread:$0]  %s401, 64, %s404, %s393
        $region60: #{tpu_custom_call.1} parent=55 // pred_fallthru
          _
      $region56: #{tpu_custom_call.1} parent=5 // pred_fallthru
        _
      %p407 = scmp.le.s32.totalorder 1, %s26
      %p408 = scmp.lt.s32.totalorder %s26, 3
      %p409 = pnand %p407, %p408
      %p410 = pneg %p409
      // Predicated region
      $region61: #{tpu_custom_call.1} parent=5 // pred_check
        _
      $region62: #{tpu_custom_call.1} parent=5 // pred_check_branch
        %412 = sbr.rel (%p409) target = $region64
      $region63: #{tpu_custom_call.1} parent=5 // pred_region
        %s413 = ssub.s32 %s26, 1
        %s414 = sand.u32 %s39, 1
        %s415 = scalar_lea.sflag [#allocation3], %s414
        %s416 = sand.u32 %s39, 1
        %s417 = smul.addr %s416, 4
        %s418 = scalar_lea.vmem [#allocation2], %s417
        // Predicated region
        $region65: #{tpu_custom_call.1} parent=63 // pred_check
          %p419 = pneg %p52
        $region66: #{tpu_custom_call.1} parent=63 // pred_check_branch
          %421 = sbr.rel (%p419) target = $region68
        $region67: #{tpu_custom_call.1} parent=63 // pred_region
          %422 = dma.done %s415, 64
        $region68: #{tpu_custom_call.1} parent=63 // pred_fallthru
          _
        // Predicated region
        $region69: #{tpu_custom_call.1} parent=63 // pred_check
          %p423 = pneg %p73
        $region70: #{tpu_custom_call.1} parent=63 // pred_check_branch
          %425 = sbr.rel (%p423) target = $region72
        $region71: #{tpu_custom_call.1} parent=63 // pred_region
          %426 = dma.done [#allocation6], 2048
        $region72: #{tpu_custom_call.1} parent=63 // pred_fallthru
          _
        // Predicated region
        $region73: #{tpu_custom_call.1} parent=63 // pred_check
          %p427 = pneg %p94
        $region74: #{tpu_custom_call.1} parent=63 // pred_check_branch
          %429 = sbr.rel (%p427) target = $region76
        $region75: #{tpu_custom_call.1} parent=63 // pred_region
          %430 = dma.done [#allocation6], 73728
        $region76: #{tpu_custom_call.1} parent=63 // pred_fallthru
          _
        // Predicated region
        $region77: #{tpu_custom_call.1} parent=63 // pred_check
          %p431 = pneg %p157
        $region78: #{tpu_custom_call.1} parent=63 // pred_check_branch
          %433 = sbr.rel (%p431) target = $region80
        $region79: #{tpu_custom_call.1} parent=63 // pred_region
          %434 = dma.done [#allocation9], 256
        $region80: #{tpu_custom_call.1} parent=63 // pred_fallthru
          _
        // Predicated region
        $region81: #{tpu_custom_call.1} parent=63 // pred_check
          %p435 = pneg %p178
        $region82: #{tpu_custom_call.1} parent=63 // pred_check_branch
          %437 = sbr.rel (%p435) target = $region84
        $region83: #{tpu_custom_call.1} parent=63 // pred_region
          %438 = dma.done [#allocation9], 256
        $region84: #{tpu_custom_call.1} parent=63 // pred_fallthru
          _
        // Predicated region
        $region85: #{tpu_custom_call.1} parent=63 // pred_check
          %p439 = pneg %p241
        $region86: #{tpu_custom_call.1} parent=63 // pred_check_branch
          %441 = sbr.rel (%p439) target = $region88
        $region87: #{tpu_custom_call.1} parent=63 // pred_region
          %442 = dma.done [#allocation12], 256
        $region88: #{tpu_custom_call.1} parent=63 // pred_fallthru
          _
        // Predicated region
        $region89: #{tpu_custom_call.1} parent=63 // pred_check
          %p443 = pneg %p262
        $region90: #{tpu_custom_call.1} parent=63 // pred_check_branch
          %445 = sbr.rel (%p443) target = $region92
        $region91: #{tpu_custom_call.1} parent=63 // pred_region
          %446 = dma.done [#allocation12], 256
        $region92: #{tpu_custom_call.1} parent=63 // pred_fallthru
          _
        %s447 = sand.u32 %s39, 1
        %s448 = scalar_lea.sflag [#allocation3], %s447
        %s449 = sand.u32 %s39, 1
        %s450 = smul.addr %s449, 4
        %s451 = scalar_lea.vmem [#allocation2], %s450
        %p452 = pneg %p52
        %p453 = pneg %p49
        %p454 = pneg %p73
        %p455 = pneg %p70
        %p456 = pneg %p94
        %p457 = pneg %p91
        %p458 = pneg %p115
        %p459 = pneg %p112
        %p460 = pneg %p136
        %p461 = pneg %p133
        %p462 = pneg %p157
        %p463 = pneg %p154
        %p464 = pneg %p178
        %p465 = pneg %p175
        %p466 = pneg %p199
        %p467 = pneg %p196
        %p468 = pneg %p220
        %p469 = pneg %p217
        %p470 = pneg %p241
        %p471 = pneg %p238
        %p472 = pneg %p262
        %p473 = pneg %p259
        %p474 = pneg %p288
        %p475 = pneg %p285
        %s476 = sand.u32 %s275, 1
        %s477 = scalar_lea.sflag [#allocation4], %s476
        %s478 = sand.u32 %s275, 1
        %s479 = smul.addr %s478, 16
        %s480 = scalar_lea.vmem [#allocation14], %s479
        %v481 = vld [vmem:[%s418] sm:$0xf]
        %v482 = vld [vmem:[#allocation5] sm:$0xff]
        %v483 = vld [vmem:[#allocation5 + $0x8] sm:$0xff]
        %v484 = vld [vmem:[#allocation5 + $0x10] sm:$0xff]
        %v485 = vld [vmem:[#allocation5 + $0x18] sm:$0xff]
        %v486 = vld [vmem:[#allocation5 + $0x20] sm:$0xff]
        %v487 = vld [vmem:[#allocation5 + $0x28] sm:$0xff]
        %v488 = vld [vmem:[#allocation5 + $0x30] sm:$0xff]
        %v489 = vld [vmem:[#allocation5 + $0x38] sm:$0xff]
        %v490 = vld [vmem:[#allocation5 + $0x40] sm:$0xff]
        %v491 = vld [vmem:[#allocation5 + $0x48] sm:$0xff]
        %v492 = vld [vmem:[#allocation5 + $0x50] sm:$0xff]
        %v493 = vld [vmem:[#allocation5 + $0x58] sm:$0xff]
        %v494 = vld [vmem:[#allocation5 + $0x60] sm:$0xff]
        %v495 = vld [vmem:[#allocation5 + $0x68] sm:$0xff]
        %v496 = vld [vmem:[#allocation5 + $0x70] sm:$0xff]
        %v497 = vld [vmem:[#allocation5 + $0x78] sm:$0xff]
        %vm498 = vcmask 523264
        %v500 = vsel %vm498, %v481, 0
        %502 = vmatprep.subr.mxu0 0.0
        %503 = vmatpush1.msra.mxu0 0.0
        %504 = vmatprep.subr.mxu0 0.0
        %505 = vmatpush1.msra.mxu0 0.0
        %506 = vmatprep.subr.mxu0 0.0
        %507 = vmatpush1.msra.mxu0 0.0
        %508 = vmatprep.subr.mxu0 0.0
        %509 = vmatpush1.msra.mxu0 0.0
        %510 = vmatprep.subr.mxu0 0.0
        %511 = vmatpush1.msra.mxu0 0.0
        %512 = vmatprep.subr.mxu0 0.0
        %513 = vmatpush1.msra.mxu0 0.0
        %514 = vmatprep.subr.mxu0 0.0
        %515 = vmatpush1.msra.mxu0 0.0
        %516 = vmatprep.subr.mxu0 0.0
        %517 = vmatpush1.msra.mxu0 0.0
        %518 = vmatprep.subr.mxu0 %v497
        %519 = vmatpush1.msra.mxu0 %v496
        %520 = vmatprep.subr.mxu0 %v495
        %521 = vmatpush1.msra.mxu0 %v494
        %522 = vmatprep.subr.mxu0 %v493
        %523 = vmatpush1.msra.mxu0 %v492
        %524 = vmatprep.subr.mxu0 %v491
        %525 = vmatpush1.msra.mxu0 %v490
        %526 = vmatprep.subr.mxu0 %v489
        %527 = vmatpush1.msra.mxu0 %v488
        %528 = vmatprep.subr.mxu0 %v487
        %529 = vmatpush1.msra.mxu0 %v486
        %530 = vmatprep.subr.mxu0 %v485
        %531 = vmatpush1.msra.mxu0 %v484
        %532 = vmatprep.subr.mxu0 %v483
        %533 = vmatpush1.msra.mxu0 %v482
        %534 = vmatprep.subr.mxu0 0.0
        %535 = vmatpush2.msra.mxu0 0.0
        %536 = vmatprep.subr.mxu0 0.0
        %537 = vmatpush2.msra.mxu0 0.0
        %538 = vmatprep.subr.mxu0 0.0
        %539 = vmatpush2.msra.mxu0 0.0
        %540 = vmatprep.subr.mxu0 0.0
        %541 = vmatpush2.msra.mxu0 0.0
        %542 = vmatprep.subr.mxu0 0.0
        %543 = vmatpush2.msra.mxu0 0.0
        %544 = vmatprep.subr.mxu0 0.0
        %545 = vmatpush2.msra.mxu0 0.0
        %546 = vmatprep.subr.mxu0 0.0
        %547 = vmatpush2.msra.mxu0 0.0
        %548 = vmatprep.subr.mxu0 0.0
        %549 = vmatpush2.msra.mxu0 0.0
        %550 = vmatprep.subr.mxu0 0.0
        %551 = vmatpush2.msra.mxu0 0.0
        %552 = vmatprep.subr.mxu0 0.0
        %553 = vmatpush2.msra.mxu0 0.0
        %554 = vmatprep.subr.mxu0 0.0
        %555 = vmatpush2.msra.mxu0 0.0
        %556 = vmatprep.subr.mxu0 0.0
        %557 = vmatpush2.msra.mxu0 0.0
        %558 = vmatprep.subr.mxu0 0.0
        %559 = vmatpush2.msra.mxu0 0.0
        %560 = vmatprep.subr.mxu0 0.0
        %561 = vmatpush2.msra.mxu0 0.0
        %562 = vmatprep.subr.mxu0 0.0
        %563 = vmatpush2.msra.mxu0 0.0
        %564 = vmatprep.subr.mxu0 0.0
        %565 = vmatpush2.msra.mxu0 0.0
        %566 = vmatprep.mubr.f32.mxu0 0.0
        %567 = vmatmul.mubr.f32.gmra.mxu0 %v500
        %v568 = vpop.f32.mrf.mxu0
        %v569 = vadd.f32 0.0, %v568
        %v570 = vpop.f32.mrf.mxu0
        %v571 = vadd.f32 0.0, %v570
        %572 = vdwg.mxu0
        %v573 = vld [vmem:[%s3] sm:$0xff]
        %vm574 = vcmask 31744
        %v576 = vsel %vm574, %v573, 0
        %vm578 = vcmask 1043456
        %v580 = vsel %vm578, %v569, 0
        %v583 = vsel %vm578, %v571, 0
        %585 = vmatprep.subr.mxu0 0.0
        %586 = vmatpush1.msra.mxu0 0.0
        %587 = vmatprep.subr.mxu0 0.0
        %588 = vmatpush1.msra.mxu0 0.0
        %589 = vmatprep.subr.mxu0 0.0
        %590 = vmatpush1.msra.mxu0 0.0
        %591 = vmatprep.subr.mxu0 0.0
        %592 = vmatpush1.msra.mxu0 0.0
        %593 = vmatprep.subr.mxu0 0.0
        %594 = vmatpush1.msra.mxu0 0.0
        %595 = vmatprep.subr.mxu0 0.0
        %596 = vmatpush1.msra.mxu0 0.0
        %597 = vmatprep.subr.mxu0 0.0
        %598 = vmatpush1.msra.mxu0 0.0
        %599 = vmatprep.subr.mxu0 0.0
        %600 = vmatpush1.msra.mxu0 0.0
        %601 = vmatprep.subr.mxu0 0.0
        %602 = vmatpush1.msra.mxu0 0.0
        %603 = vmatprep.subr.mxu0 0.0
        %604 = vmatpush1.msra.mxu0 0.0
        %605 = vmatprep.subr.mxu0 0.0
        %606 = vmatpush1.msra.mxu0 0.0
        %607 = vmatprep.subr.mxu0 0.0
        %608 = vmatpush1.msra.mxu0 0.0
        %609 = vmatprep.subr.mxu0 0.0
        %610 = vmatpush1.msra.mxu0 0.0
        %611 = vmatprep.subr.mxu0 0.0
        %612 = vmatpush1.msra.mxu0 0.0
        %613 = vmatprep.subr.mxu0 0.0
        %614 = vmatpush1.msra.mxu0 0.0
        %615 = vmatprep.subr.mxu0 %v583
        %616 = vmatpush1.msra.mxu0 %v580
        %617 = vmatprep.subr.mxu0 0.0
        %618 = vmatpush2.msra.mxu0 0.0
        %619 = vmatprep.subr.mxu0 0.0
        %620 = vmatpush2.msra.mxu0 0.0
        %621 = vmatprep.subr.mxu0 0.0
        %622 = vmatpush2.msra.mxu0 0.0
        %623 = vmatprep.subr.mxu0 0.0
        %624 = vmatpush2.msra.mxu0 0.0
        %625 = vmatprep.subr.mxu0 0.0
        %626 = vmatpush2.msra.mxu0 0.0
        %627 = vmatprep.subr.mxu0 0.0
        %628 = vmatpush2.msra.mxu0 0.0
        %629 = vmatprep.subr.mxu0 0.0
        %630 = vmatpush2.msra.mxu0 0.0
        %631 = vmatprep.subr.mxu0 0.0
        %632 = vmatpush2.msra.mxu0 0.0
        %633 = vmatprep.subr.mxu0 0.0
        %634 = vmatpush2.msra.mxu0 0.0
        %635 = vmatprep.subr.mxu0 0.0
        %636 = vmatpush2.msra.mxu0 0.0
        %637 = vmatprep.subr.mxu0 0.0
        %638 = vmatpush2.msra.mxu0 0.0
        %639 = vmatprep.subr.mxu0 0.0
        %640 = vmatpush2.msra.mxu0 0.0
        %641 = vmatprep.subr.mxu0 0.0
        %642 = vmatpush2.msra.mxu0 0.0
        %643 = vmatprep.subr.mxu0 0.0
        %644 = vmatpush2.msra.mxu0 0.0
        %645 = vmatprep.subr.mxu0 0.0
        %646 = vmatpush2.msra.mxu0 0.0
        %647 = vmatprep.subr.mxu0 0.0
        %648 = vmatpush2.msra.mxu0 0.0
        %649 = vmatprep.mubr.f32.mxu0 0.0
        %650 = vmatmul.mubr.f32.gmra.mxu0 %v576
        %v651 = vpop.f32.mrf.mxu0
        %v652 = vadd.f32 0.0, %v651
        %v653 = vpop.f32.mrf.mxu0
        %v654 = vadd.f32 0.0, %v653
        %655 = vdwg.mxu0
        %v656 = vld [vmem:[#allocation7] sm:$0xff]
        %v657 = vld [vmem:[#allocation7 + $0x8] sm:$0xff]
        %v658 = vld [vmem:[#allocation7 + $0x10] sm:$0xff]
        %v659 = vld [vmem:[#allocation7 + $0x18] sm:$0xff]
        %v660 = vld [vmem:[#allocation7 + $0x20] sm:$0xff]
        %v661 = vld [vmem:[#allocation7 + $0x28] sm:$0xff]
        %v662 = vld [vmem:[#allocation7 + $0x30] sm:$0xff]
        %v663 = vld [vmem:[#allocation7 + $0x38] sm:$0xff]
        %v664 = vld [vmem:[#allocation7 + $0x40] sm:$0xff]
        %v665 = vld [vmem:[#allocation7 + $0x48] sm:$0xff]
        %v666 = vld [vmem:[#allocation7 + $0x50] sm:$0xff]
        %v667 = vld [vmem:[#allocation7 + $0x58] sm:$0xff]
        %v668 = vld [vmem:[#allocation7 + $0x60] sm:$0xff]
        %v669 = vld [vmem:[#allocation7 + $0x68] sm:$0xff]
        %v670 = vld [vmem:[#allocation7 + $0x70] sm:$0xff]
        %v671 = vld [vmem:[#allocation7 + $0x78] sm:$0xff]
        %v672 = vld [vmem:[#allocation7 + $0x80] sm:$0xff]
        %v673 = vld [vmem:[#allocation7 + $0x88] sm:$0xff]
        %v674 = vld [vmem:[#allocation7 + $0x90] sm:$0xff]
        %v675 = vld [vmem:[#allocation7 + $0x98] sm:$0xff]
        %v676 = vld [vmem:[#allocation7 + $0xa0] sm:$0xff]
        %v677 = vld [vmem:[#allocation7 + $0xa8] sm:$0xff]
        %v678 = vld [vmem:[#allocation7 + $0xb0] sm:$0xff]
        %v679 = vld [vmem:[#allocation7 + $0xb8] sm:$0xff]
        %v680 = vld [vmem:[#allocation7 + $0xc0] sm:$0xff]
        %v681 = vld [vmem:[#allocation7 + $0xc8] sm:$0xff]
        %v682 = vld [vmem:[#allocation7 + $0xd0] sm:$0xff]
        %v683 = vld [vmem:[#allocation7 + $0xd8] sm:$0xff]
        %v684 = vld [vmem:[#allocation7 + $0xe0] sm:$0xff]
        %v685 = vld [vmem:[#allocation7 + $0xe8] sm:$0xff]
        %v686 = vld [vmem:[#allocation7 + $0xf0] sm:$0xff]
        %v687 = vld [vmem:[#allocation7 + $0xf8] sm:$0xff]
        %v688 = vld [vmem:[#allocation7 + $0x100] sm:$0xff]
        %v689 = vld [vmem:[#allocation7 + $0x108] sm:$0xff]
        %v690 = vld [vmem:[#allocation7 + $0x110] sm:$0xff]
        %v691 = vld [vmem:[#allocation7 + $0x118] sm:$0xff]
        %v692 = vld [vmem:[#allocation7 + $0x120] sm:$0xff]
        %v693 = vld [vmem:[#allocation7 + $0x128] sm:$0xff]
        %v694 = vld [vmem:[#allocation7 + $0x130] sm:$0xff]
        %v695 = vld [vmem:[#allocation7 + $0x138] sm:$0xff]
        %v696 = vld [vmem:[#allocation7 + $0x140] sm:$0xff]
        %v697 = vld [vmem:[#allocation7 + $0x148] sm:$0xff]
        %v698 = vld [vmem:[#allocation7 + $0x150] sm:$0xff]
        %v699 = vld [vmem:[#allocation7 + $0x158] sm:$0xff]
        %v700 = vld [vmem:[#allocation7 + $0x160] sm:$0xff]
        %v701 = vld [vmem:[#allocation7 + $0x168] sm:$0xff]
        %v702 = vld [vmem:[#allocation7 + $0x170] sm:$0xff]
        %v703 = vld [vmem:[#allocation7 + $0x178] sm:$0xff]
        %v704 = vld [vmem:[#allocation7 + $0x180] sm:$0xff]
        %v705 = vld [vmem:[#allocation7 + $0x188] sm:$0xff]
        %v706 = vld [vmem:[#allocation7 + $0x190] sm:$0xff]
        %v707 = vld [vmem:[#allocation7 + $0x198] sm:$0xff]
        %v708 = vld [vmem:[#allocation7 + $0x1a0] sm:$0xff]
        %v709 = vld [vmem:[#allocation7 + $0x1a8] sm:$0xff]
        %v710 = vld [vmem:[#allocation7 + $0x1b0] sm:$0xff]
        %v711 = vld [vmem:[#allocation7 + $0x1b8] sm:$0xff]
        %v712 = vld [vmem:[#allocation7 + $0x1c0] sm:$0xff]
        %v713 = vld [vmem:[#allocation7 + $0x1c8] sm:$0xff]
        %v714 = vld [vmem:[#allocation7 + $0x1d0] sm:$0xff]
        %v715 = vld [vmem:[#allocation7 + $0x1d8] sm:$0xff]
        %v716 = vld [vmem:[#allocation7 + $0x1e0] sm:$0xff]
        %v717 = vld [vmem:[#allocation7 + $0x1e8] sm:$0xff]
        %v718 = vld [vmem:[#allocation7 + $0x1f0] sm:$0xff]
        %v719 = vld [vmem:[#allocation7 + $0x1f8] sm:$0xff]
        %s720 = scalar_lea.vmem %s3, 8
        %v721 = vld [vmem:[%s720] sm:$0xff]
        %v723 = vsel %vm574, %v721, 0
        %725 = vmatprep.subr.mxu0 0.0
        %726 = vmatpush1.msra.mxu0 0.0
        %727 = vmatprep.subr.mxu0 0.0
        %728 = vmatpush1.msra.mxu0 0.0
        %729 = vmatprep.subr.mxu0 0.0
        %730 = vmatpush1.msra.mxu0 0.0
        %731 = vmatprep.subr.mxu0 0.0
        %732 = vmatpush1.msra.mxu0 0.0
        %733 = vmatprep.subr.mxu0 0.0
        %734 = vmatpush1.msra.mxu0 0.0
        %735 = vmatprep.subr.mxu0 0.0
        %736 = vmatpush1.msra.mxu0 0.0
        %737 = vmatprep.subr.mxu0 0.0
        %738 = vmatpush1.msra.mxu0 0.0
        %739 = vmatprep.subr.mxu0 0.0
        %740 = vmatpush1.msra.mxu0 0.0
        %741 = vmatprep.subr.mxu0 0.0
        %742 = vmatpush1.msra.mxu0 0.0
        %743 = vmatprep.subr.mxu0 0.0
        %744 = vmatpush1.msra.mxu0 0.0
        %745 = vmatprep.subr.mxu0 0.0
        %746 = vmatpush1.msra.mxu0 0.0
        %747 = vmatprep.subr.mxu0 0.0
        %748 = vmatpush1.msra.mxu0 0.0
        %749 = vmatprep.subr.mxu0 0.0
        %750 = vmatpush1.msra.mxu0 0.0
        %751 = vmatprep.subr.mxu0 0.0
        %752 = vmatpush1.msra.mxu0 0.0
        %753 = vmatprep.subr.mxu0 0.0
        %754 = vmatpush1.msra.mxu0 0.0
        %755 = vmatprep.subr.mxu0 %v583
        %756 = vmatpush1.msra.mxu0 %v580
        %757 = vmatprep.subr.mxu0 0.0
        %758 = vmatpush2.msra.mxu0 0.0
        %759 = vmatprep.subr.mxu0 0.0
        %760 = vmatpush2.msra.mxu0 0.0
        %761 = vmatprep.subr.mxu0 0.0
        %762 = vmatpush2.msra.mxu0 0.0
        %763 = vmatprep.subr.mxu0 0.0
        %764 = vmatpush2.msra.mxu0 0.0
        %765 = vmatprep.subr.mxu0 0.0
        %766 = vmatpush2.msra.mxu0 0.0
        %767 = vmatprep.subr.mxu0 0.0
        %768 = vmatpush2.msra.mxu0 0.0
        %769 = vmatprep.subr.mxu0 0.0
        %770 = vmatpush2.msra.mxu0 0.0
        %771 = vmatprep.subr.mxu0 0.0
        %772 = vmatpush2.msra.mxu0 0.0
        %773 = vmatprep.subr.mxu0 0.0
        %774 = vmatpush2.msra.mxu0 0.0
        %775 = vmatprep.subr.mxu0 0.0
        %776 = vmatpush2.msra.mxu0 0.0
        %777 = vmatprep.subr.mxu0 0.0
        %778 = vmatpush2.msra.mxu0 0.0
        %779 = vmatprep.subr.mxu0 0.0
        %780 = vmatpush2.msra.mxu0 0.0
        %781 = vmatprep.subr.mxu0 0.0
        %782 = vmatpush2.msra.mxu0 0.0
        %783 = vmatprep.subr.mxu0 0.0
        %784 = vmatpush2.msra.mxu0 0.0
        %785 = vmatprep.subr.mxu0 0.0
        %786 = vmatpush2.msra.mxu0 0.0
        %787 = vmatprep.subr.mxu0 0.0
        %788 = vmatpush2.msra.mxu0 0.0
        %789 = vmatprep.mubr.f32.mxu0 0.0
        %790 = vmatmul.mubr.f32.gmra.mxu0 %v723
        %v791 = vpop.f32.mrf.mxu0
        %v792 = vadd.f32 0.0, %v791
        %v793 = vpop.f32.mrf.mxu0
        %v794 = vadd.f32 0.0, %v793
        %795 = vdwg.mxu0
        %s796 = scalar_lea.vmem [#allocation7], 512
        %v797 = vld [vmem:[%s796] sm:$0xff]
        %v798 = vld [vmem:[%s796 + $0x8] sm:$0xff]
        %v799 = vld [vmem:[%s796 + $0x10] sm:$0xff]
        %v800 = vld [vmem:[%s796 + $0x18] sm:$0xff]
        %v801 = vld [vmem:[%s796 + $0x20] sm:$0xff]
        %v802 = vld [vmem:[%s796 + $0x28] sm:$0xff]
        %v803 = vld [vmem:[%s796 + $0x30] sm:$0xff]
        %v804 = vld [vmem:[%s796 + $0x38] sm:$0xff]
        %v805 = vld [vmem:[%s796 + $0x40] sm:$0xff]
        %v806 = vld [vmem:[%s796 + $0x48] sm:$0xff]
        %v807 = vld [vmem:[%s796 + $0x50] sm:$0xff]
        %v808 = vld [vmem:[%s796 + $0x58] sm:$0xff]
        %v809 = vld [vmem:[%s796 + $0x60] sm:$0xff]
        %v810 = vld [vmem:[%s796 + $0x68] sm:$0xff]
        %v811 = vld [vmem:[%s796 + $0x70] sm:$0xff]
        %v812 = vld [vmem:[%s796 + $0x78] sm:$0xff]
        %v813 = vld [vmem:[%s796 + $0x80] sm:$0xff]
        %v814 = vld [vmem:[%s796 + $0x88] sm:$0xff]
        %v815 = vld [vmem:[%s796 + $0x90] sm:$0xff]
        %v816 = vld [vmem:[%s796 + $0x98] sm:$0xff]
        %v817 = vld [vmem:[%s796 + $0xa0] sm:$0xff]
        %v818 = vld [vmem:[%s796 + $0xa8] sm:$0xff]
        %v819 = vld [vmem:[%s796 + $0xb0] sm:$0xff]
        %v820 = vld [vmem:[%s796 + $0xb8] sm:$0xff]
        %v821 = vld [vmem:[%s796 + $0xc0] sm:$0xff]
        %v822 = vld [vmem:[%s796 + $0xc8] sm:$0xff]
        %v823 = vld [vmem:[%s796 + $0xd0] sm:$0xff]
        %v824 = vld [vmem:[%s796 + $0xd8] sm:$0xff]
        %v825 = vld [vmem:[%s796 + $0xe0] sm:$0xff]
        %v826 = vld [vmem:[%s796 + $0xe8] sm:$0xff]
        %v827 = vld [vmem:[%s796 + $0xf0] sm:$0xff]
        %v828 = vld [vmem:[%s796 + $0xf8] sm:$0xff]
        %v829 = vld [vmem:[%s796 + $0x100] sm:$0xff]
        %v830 = vld [vmem:[%s796 + $0x108] sm:$0xff]
        %v831 = vld [vmem:[%s796 + $0x110] sm:$0xff]
        %v832 = vld [vmem:[%s796 + $0x118] sm:$0xff]
        %v833 = vld [vmem:[%s796 + $0x120] sm:$0xff]
        %v834 = vld [vmem:[%s796 + $0x128] sm:$0xff]
        %v835 = vld [vmem:[%s796 + $0x130] sm:$0xff]
        %v836 = vld [vmem:[%s796 + $0x138] sm:$0xff]
        %v837 = vld [vmem:[%s796 + $0x140] sm:$0xff]
        %v838 = vld [vmem:[%s796 + $0x148] sm:$0xff]
        %v839 = vld [vmem:[%s796 + $0x150] sm:$0xff]
        %v840 = vld [vmem:[%s796 + $0x158] sm:$0xff]
        %v841 = vld [vmem:[%s796 + $0x160] sm:$0xff]
        %v842 = vld [vmem:[%s796 + $0x168] sm:$0xff]
        %v843 = vld [vmem:[%s796 + $0x170] sm:$0xff]
        %v844 = vld [vmem:[%s796 + $0x178] sm:$0xff]
        %v845 = vld [vmem:[%s796 + $0x180] sm:$0xff]
        %v846 = vld [vmem:[%s796 + $0x188] sm:$0xff]
        %v847 = vld [vmem:[%s796 + $0x190] sm:$0xff]
        %v848 = vld [vmem:[%s796 + $0x198] sm:$0xff]
        %v849 = vld [vmem:[%s796 + $0x1a0] sm:$0xff]
        %v850 = vld [vmem:[%s796 + $0x1a8] sm:$0xff]
        %v851 = vld [vmem:[%s796 + $0x1b0] sm:$0xff]
        %v852 = vld [vmem:[%s796 + $0x1b8] sm:$0xff]
        %v853 = vld [vmem:[%s796 + $0x1c0] sm:$0xff]
        %v854 = vld [vmem:[%s796 + $0x1c8] sm:$0xff]
        %v855 = vld [vmem:[%s796 + $0x1d0] sm:$0xff]
        %v856 = vld [vmem:[%s796 + $0x1d8] sm:$0xff]
        %v857 = vld [vmem:[%s796 + $0x1e0] sm:$0xff]
        %v858 = vld [vmem:[%s796 + $0x1e8] sm:$0xff]
        %v859 = vld [vmem:[%s796 + $0x1f0] sm:$0xff]
        %v860 = vld [vmem:[%s796 + $0x1f8] sm:$0xff]
        %861 = vmatprep.subr.mxu0 %v828
        %862 = vmatpush1.msra.mxu0 %v827
        %863 = vmatprep.subr.mxu0 %v826
        %864 = vmatpush1.msra.mxu0 %v825
        %865 = vmatprep.subr.mxu0 %v824
        %866 = vmatpush1.msra.mxu0 %v823
        %867 = vmatprep.subr.mxu0 %v822
        %868 = vmatpush1.msra.mxu0 %v821
        %869 = vmatprep.subr.mxu0 %v820
        %870 = vmatpush1.msra.mxu0 %v819
        %871 = vmatprep.subr.mxu0 %v818
        %872 = vmatpush1.msra.mxu0 %v817
        %873 = vmatprep.subr.mxu0 %v816
        %874 = vmatpush1.msra.mxu0 %v815
        %875 = vmatprep.subr.mxu0 %v814
        %876 = vmatpush1.msra.mxu0 %v813
        %877 = vmatprep.subr.mxu0 %v812
        %878 = vmatpush1.msra.mxu0 %v811
        %879 = vmatprep.subr.mxu0 %v810
        %880 = vmatpush1.msra.mxu0 %v809
        %881 = vmatprep.subr.mxu0 %v808
        %882 = vmatpush1.msra.mxu0 %v807
        %883 = vmatprep.subr.mxu0 %v806
        %884 = vmatpush1.msra.mxu0 %v805
        %885 = vmatprep.subr.mxu0 %v804
        %886 = vmatpush1.msra.mxu0 %v803
        %887 = vmatprep.subr.mxu0 %v802
        %888 = vmatpush1.msra.mxu0 %v801
        %889 = vmatprep.subr.mxu0 %v800
        %890 = vmatpush1.msra.mxu0 %v799
        %891 = vmatprep.subr.mxu0 %v798
        %892 = vmatpush1.msra.mxu0 %v797
        %893 = vmatprep.subr.mxu0 %v860
        %894 = vmatpush2.msra.mxu0 %v859
        %895 = vmatprep.subr.mxu0 %v858
        %896 = vmatpush2.msra.mxu0 %v857
        %897 = vmatprep.subr.mxu0 %v856
        %898 = vmatpush2.msra.mxu0 %v855
        %899 = vmatprep.subr.mxu0 %v854
        %900 = vmatpush2.msra.mxu0 %v853
        %901 = vmatprep.subr.mxu0 %v852
        %902 = vmatpush2.msra.mxu0 %v851
        %903 = vmatprep.subr.mxu0 %v850
        %904 = vmatpush2.msra.mxu0 %v849
        %905 = vmatprep.subr.mxu0 %v848
        %906 = vmatpush2.msra.mxu0 %v847
        %907 = vmatprep.subr.mxu0 %v846
        %908 = vmatpush2.msra.mxu0 %v845
        %909 = vmatprep.subr.mxu0 %v844
        %910 = vmatpush2.msra.mxu0 %v843
        %911 = vmatprep.subr.mxu0 %v842
        %912 = vmatpush2.msra.mxu0 %v841
        %913 = vmatprep.subr.mxu0 %v840
        %914 = vmatpush2.msra.mxu0 %v839
        %915 = vmatprep.subr.mxu0 %v838
        %916 = vmatpush2.msra.mxu0 %v837
        %917 = vmatprep.subr.mxu0 %v836
        %918 = vmatpush2.msra.mxu0 %v835
        %919 = vmatprep.subr.mxu0 %v834
        %920 = vmatpush2.msra.mxu0 %v833
        %921 = vmatprep.subr.mxu0 %v832
        %922 = vmatpush2.msra.mxu0 %v831
        %923 = vmatprep.subr.mxu0 %v830
        %924 = vmatpush2.msra.mxu0 %v829
        %925 = vmatprep.mubr.f32.mxu0 %v794
        %926 = vmatmul.mubr.f32.gmra.mxu0 %v792
        %v927 = vpop.f32.mrf.mxu0
        %v928 = vadd.f32 0.0, %v927
        %v929 = vpop.f32.mrf.mxu0
        %v930 = vadd.f32 0.0, %v929
        %931 = vdwg.mxu0
        %932 = vmatprep.subr.mxu0 %v687
        %933 = vmatpush1.msra.mxu0 %v686
        %934 = vmatprep.subr.mxu0 %v685
        %935 = vmatpush1.msra.mxu0 %v684
        %936 = vmatprep.subr.mxu0 %v683
        %937 = vmatpush1.msra.mxu0 %v682
        %938 = vmatprep.subr.mxu0 %v681
        %939 = vmatpush1.msra.mxu0 %v680
        %940 = vmatprep.subr.mxu0 %v679
        %941 = vmatpush1.msra.mxu0 %v678
        %942 = vmatprep.subr.mxu0 %v677
        %943 = vmatpush1.msra.mxu0 %v676
        %944 = vmatprep.subr.mxu0 %v675
        %945 = vmatpush1.msra.mxu0 %v674
        %946 = vmatprep.subr.mxu0 %v673
        %947 = vmatpush1.msra.mxu0 %v672
        %948 = vmatprep.subr.mxu0 %v671
        %949 = vmatpush1.msra.mxu0 %v670
        %950 = vmatprep.subr.mxu0 %v669
        %951 = vmatpush1.msra.mxu0 %v668
        %952 = vmatprep.subr.mxu0 %v667
        %953 = vmatpush1.msra.mxu0 %v666
        %954 = vmatprep.subr.mxu0 %v665
        %955 = vmatpush1.msra.mxu0 %v664
        %956 = vmatprep.subr.mxu0 %v663
        %957 = vmatpush1.msra.mxu0 %v662
        %958 = vmatprep.subr.mxu0 %v661
        %959 = vmatpush1.msra.mxu0 %v660
        %960 = vmatprep.subr.mxu0 %v659
        %961 = vmatpush1.msra.mxu0 %v658
        %962 = vmatprep.subr.mxu0 %v657
        %963 = vmatpush1.msra.mxu0 %v656
        %964 = vmatprep.subr.mxu0 %v719
        %965 = vmatpush2.msra.mxu0 %v718
        %966 = vmatprep.subr.mxu0 %v717
        %967 = vmatpush2.msra.mxu0 %v716
        %968 = vmatprep.subr.mxu0 %v715
        %969 = vmatpush2.msra.mxu0 %v714
        %970 = vmatprep.subr.mxu0 %v713
        %971 = vmatpush2.msra.mxu0 %v712
        %972 = vmatprep.subr.mxu0 %v711
        %973 = vmatpush2.msra.mxu0 %v710
        %974 = vmatprep.subr.mxu0 %v709
        %975 = vmatpush2.msra.mxu0 %v708
        %976 = vmatprep.subr.mxu0 %v707
        %977 = vmatpush2.msra.mxu0 %v706
        %978 = vmatprep.subr.mxu0 %v705
        %979 = vmatpush2.msra.mxu0 %v704
        %980 = vmatprep.subr.mxu0 %v703
        %981 = vmatpush2.msra.mxu0 %v702
        %982 = vmatprep.subr.mxu0 %v701
        %983 = vmatpush2.msra.mxu0 %v700
        %984 = vmatprep.subr.mxu0 %v699
        %985 = vmatpush2.msra.mxu0 %v698
        %986 = vmatprep.subr.mxu0 %v697
        %987 = vmatpush2.msra.mxu0 %v696
        %988 = vmatprep.subr.mxu0 %v695
        %989 = vmatpush2.msra.mxu0 %v694
        %990 = vmatprep.subr.mxu0 %v693
        %991 = vmatpush2.msra.mxu0 %v692
        %992 = vmatprep.subr.mxu0 %v691
        %993 = vmatpush2.msra.mxu0 %v690
        %994 = vmatprep.subr.mxu0 %v689
        %995 = vmatpush2.msra.mxu0 %v688
        %996 = vmatprep.mubr.f32.mxu0 %v654
        %997 = vmatmul.mubr.f32.gmra.mxu0 %v652
        %v998 = vpop.f32.mrf.mxu0
        %v999 = vadd.f32 %v928, %v998
        %v1000 = vpop.f32.mrf.mxu0
        %v1001 = vadd.f32 %v930, %v1000
        %1002 = vdwg.mxu0
        %s1003 = scalar_lea.vmem %s3, 16
        %v1004 = vld [vmem:[%s1003] sm:$0xff]
        %v1006 = vsel %vm574, %v1004, 0
        %1008 = vmatprep.subr.mxu0 0.0
        %1009 = vmatpush1.msra.mxu0 0.0
        %1010 = vmatprep.subr.mxu0 0.0
        %1011 = vmatpush1.msra.mxu0 0.0
        %1012 = vmatprep.subr.mxu0 0.0
        %1013 = vmatpush1.msra.mxu0 0.0
        %1014 = vmatprep.subr.mxu0 0.0
        %1015 = vmatpush1.msra.mxu0 0.0
        %1016 = vmatprep.subr.mxu0 0.0
        %1017 = vmatpush1.msra.mxu0 0.0
        %1018 = vmatprep.subr.mxu0 0.0
        %1019 = vmatpush1.msra.mxu0 0.0
        %1020 = vmatprep.subr.mxu0 0.0
        %1021 = vmatpush1.msra.mxu0 0.0
        %1022 = vmatprep.subr.mxu0 0.0
        %1023 = vmatpush1.msra.mxu0 0.0
        %1024 = vmatprep.subr.mxu0 0.0
        %1025 = vmatpush1.msra.mxu0 0.0
        %1026 = vmatprep.subr.mxu0 0.0
        %1027 = vmatpush1.msra.mxu0 0.0
        %1028 = vmatprep.subr.mxu0 0.0
        %1029 = vmatpush1.msra.mxu0 0.0
        %1030 = vmatprep.subr.mxu0 0.0
        %1031 = vmatpush1.msra.mxu0 0.0
        %1032 = vmatprep.subr.mxu0 0.0
        %1033 = vmatpush1.msra.mxu0 0.0
        %1034 = vmatprep.subr.mxu0 0.0
        %1035 = vmatpush1.msra.mxu0 0.0
        %1036 = vmatprep.subr.mxu0 0.0
        %1037 = vmatpush1.msra.mxu0 0.0
        %1038 = vmatprep.subr.mxu0 %v583
        %1039 = vmatpush1.msra.mxu0 %v580
        %1040 = vmatprep.subr.mxu0 0.0
        %1041 = vmatpush2.msra.mxu0 0.0
        %1042 = vmatprep.subr.mxu0 0.0
        %1043 = vmatpush2.msra.mxu0 0.0
        %1044 = vmatprep.subr.mxu0 0.0
        %1045 = vmatpush2.msra.mxu0 0.0
        %1046 = vmatprep.subr.mxu0 0.0
        %1047 = vmatpush2.msra.mxu0 0.0
        %1048 = vmatprep.subr.mxu0 0.0
        %1049 = vmatpush2.msra.mxu0 0.0
        %1050 = vmatprep.subr.mxu0 0.0
        %1051 = vmatpush2.msra.mxu0 0.0
        %1052 = vmatprep.subr.mxu0 0.0
        %1053 = vmatpush2.msra.mxu0 0.0
        %1054 = vmatprep.subr.mxu0 0.0
        %1055 = vmatpush2.msra.mxu0 0.0
        %1056 = vmatprep.subr.mxu0 0.0
        %1057 = vmatpush2.msra.mxu0 0.0
        %1058 = vmatprep.subr.mxu0 0.0
        %1059 = vmatpush2.msra.mxu0 0.0
        %1060 = vmatprep.subr.mxu0 0.0
        %1061 = vmatpush2.msra.mxu0 0.0
        %1062 = vmatprep.subr.mxu0 0.0
        %1063 = vmatpush2.msra.mxu0 0.0
        %1064 = vmatprep.subr.mxu0 0.0
        %1065 = vmatpush2.msra.mxu0 0.0
        %1066 = vmatprep.subr.mxu0 0.0
        %1067 = vmatpush2.msra.mxu0 0.0
        %1068 = vmatprep.subr.mxu0 0.0
        %1069 = vmatpush2.msra.mxu0 0.0
        %1070 = vmatprep.subr.mxu0 0.0
        %1071 = vmatpush2.msra.mxu0 0.0
        %1072 = vmatprep.mubr.f32.mxu0 0.0
        %1073 = vmatmul.mubr.f32.gmra.mxu0 %v1006
        %v1074 = vpop.f32.mrf.mxu0
        %v1075 = vadd.f32 0.0, %v1074
        %v1076 = vpop.f32.mrf.mxu0
        %v1077 = vadd.f32 0.0, %v1076
        %1078 = vdwg.mxu0
        %s1079 = scalar_lea.vmem [#allocation7], 1024
        %v1080 = vld [vmem:[%s1079] sm:$0xff]
        %v1081 = vld [vmem:[%s1079 + $0x8] sm:$0xff]
        %v1082 = vld [vmem:[%s1079 + $0x10] sm:$0xff]
        %v1083 = vld [vmem:[%s1079 + $0x18] sm:$0xff]
        %v1084 = vld [vmem:[%s1079 + $0x20] sm:$0xff]
        %v1085 = vld [vmem:[%s1079 + $0x28] sm:$0xff]
        %v1086 = vld [vmem:[%s1079 + $0x30] sm:$0xff]
        %v1087 = vld [vmem:[%s1079 + $0x38] sm:$0xff]
        %v1088 = vld [vmem:[%s1079 + $0x40] sm:$0xff]
        %v1089 = vld [vmem:[%s1079 + $0x48] sm:$0xff]
        %v1090 = vld [vmem:[%s1079 + $0x50] sm:$0xff]
        %v1091 = vld [vmem:[%s1079 + $0x58] sm:$0xff]
        %v1092 = vld [vmem:[%s1079 + $0x60] sm:$0xff]
        %v1093 = vld [vmem:[%s1079 + $0x68] sm:$0xff]
        %v1094 = vld [vmem:[%s1079 + $0x70] sm:$0xff]
        %v1095 = vld [vmem:[%s1079 + $0x78] sm:$0xff]
        %v1096 = vld [vmem:[%s1079 + $0x80] sm:$0xff]
        %v1097 = vld [vmem:[%s1079 + $0x88] sm:$0xff]
        %v1098 = vld [vmem:[%s1079 + $0x90] sm:$0xff]
        %v1099 = vld [vmem:[%s1079 + $0x98] sm:$0xff]
        %v1100 = vld [vmem:[%s1079 + $0xa0] sm:$0xff]
        %v1101 = vld [vmem:[%s1079 + $0xa8] sm:$0xff]
        %v1102 = vld [vmem:[%s1079 + $0xb0] sm:$0xff]
        %v1103 = vld [vmem:[%s1079 + $0xb8] sm:$0xff]
        %v1104 = vld [vmem:[%s1079 + $0xc0] sm:$0xff]
        %v1105 = vld [vmem:[%s1079 + $0xc8] sm:$0xff]
        %v1106 = vld [vmem:[%s1079 + $0xd0] sm:$0xff]
        %v1107 = vld [vmem:[%s1079 + $0xd8] sm:$0xff]
        %v1108 = vld [vmem:[%s1079 + $0xe0] sm:$0xff]
        %v1109 = vld [vmem:[%s1079 + $0xe8] sm:$0xff]
        %v1110 = vld [vmem:[%s1079 + $0xf0] sm:$0xff]
        %v1111 = vld [vmem:[%s1079 + $0xf8] sm:$0xff]
        %v1112 = vld [vmem:[%s1079 + $0x100] sm:$0xff]
        %v1113 = vld [vmem:[%s1079 + $0x108] sm:$0xff]
        %v1114 = vld [vmem:[%s1079 + $0x110] sm:$0xff]
        %v1115 = vld [vmem:[%s1079 + $0x118] sm:$0xff]
        %v1116 = vld [vmem:[%s1079 + $0x120] sm:$0xff]
        %v1117 = vld [vmem:[%s1079 + $0x128] sm:$0xff]
        %v1118 = vld [vmem:[%s1079 + $0x130] sm:$0xff]
        %v1119 = vld [vmem:[%s1079 + $0x138] sm:$0xff]
        %v1120 = vld [vmem:[%s1079 + $0x140] sm:$0xff]
        %v1121 = vld [vmem:[%s1079 + $0x148] sm:$0xff]
        %v1122 = vld [vmem:[%s1079 + $0x150] sm:$0xff]
        %v1123 = vld [vmem:[%s1079 + $0x158] sm:$0xff]
        %v1124 = vld [vmem:[%s1079 + $0x160] sm:$0xff]
        %v1125 = vld [vmem:[%s1079 + $0x168] sm:$0xff]
        %v1126 = vld [vmem:[%s1079 + $0x170] sm:$0xff]
        %v1127 = vld [vmem:[%s1079 + $0x178] sm:$0xff]
        %v1128 = vld [vmem:[%s1079 + $0x180] sm:$0xff]
        %v1129 = vld [vmem:[%s1079 + $0x188] sm:$0xff]
        %v1130 = vld [vmem:[%s1079 + $0x190] sm:$0xff]
        %v1131 = vld [vmem:[%s1079 + $0x198] sm:$0xff]
        %v1132 = vld [vmem:[%s1079 + $0x1a0] sm:$0xff]
        %v1133 = vld [vmem:[%s1079 + $0x1a8] sm:$0xff]
        %v1134 = vld [vmem:[%s1079 + $0x1b0] sm:$0xff]
        %v1135 = vld [vmem:[%s1079 + $0x1b8] sm:$0xff]
        %v1136 = vld [vmem:[%s1079 + $0x1c0] sm:$0xff]
        %v1137 = vld [vmem:[%s1079 + $0x1c8] sm:$0xff]
        %v1138 = vld [vmem:[%s1079 + $0x1d0] sm:$0xff]
        %v1139 = vld [vmem:[%s1079 + $0x1d8] sm:$0xff]
        %v1140 = vld [vmem:[%s1079 + $0x1e0] sm:$0xff]
        %v1141 = vld [vmem:[%s1079 + $0x1e8] sm:$0xff]
        %v1142 = vld [vmem:[%s1079 + $0x1f0] sm:$0xff]
        %v1143 = vld [vmem:[%s1079 + $0x1f8] sm:$0xff]
        %1144 = vmatprep.subr.mxu0 %v1111
        %1145 = vmatpush1.msra.mxu0 %v1110
        %1146 = vmatprep.subr.mxu0 %v1109
        %1147 = vmatpush1.msra.mxu0 %v1108
        %1148 = vmatprep.subr.mxu0 %v1107
        %1149 = vmatpush1.msra.mxu0 %v1106
        %1150 = vmatprep.subr.mxu0 %v1105
        %1151 = vmatpush1.msra.mxu0 %v1104
        %1152 = vmatprep.subr.mxu0 %v1103
        %1153 = vmatpush1.msra.mxu0 %v1102
        %1154 = vmatprep.subr.mxu0 %v1101
        %1155 = vmatpush1.msra.mxu0 %v1100
        %1156 = vmatprep.subr.mxu0 %v1099
        %1157 = vmatpush1.msra.mxu0 %v1098
        %1158 = vmatprep.subr.mxu0 %v1097
        %1159 = vmatpush1.msra.mxu0 %v1096
        %1160 = vmatprep.subr.mxu0 %v1095
        %1161 = vmatpush1.msra.mxu0 %v1094
        %1162 = vmatprep.subr.mxu0 %v1093
        %1163 = vmatpush1.msra.mxu0 %v1092
        %1164 = vmatprep.subr.mxu0 %v1091
        %1165 = vmatpush1.msra.mxu0 %v1090
        %1166 = vmatprep.subr.mxu0 %v1089
        %1167 = vmatpush1.msra.mxu0 %v1088
        %1168 = vmatprep.subr.mxu0 %v1087
        %1169 = vmatpush1.msra.mxu0 %v1086
        %1170 = vmatprep.subr.mxu0 %v1085
        %1171 = vmatpush1.msra.mxu0 %v1084
        %1172 = vmatprep.subr.mxu0 %v1083
        %1173 = vmatpush1.msra.mxu0 %v1082
        %1174 = vmatprep.subr.mxu0 %v1081
        %1175 = vmatpush1.msra.mxu0 %v1080
        %1176 = vmatprep.subr.mxu0 %v1143
        %1177 = vmatpush2.msra.mxu0 %v1142
        %1178 = vmatprep.subr.mxu0 %v1141
        %1179 = vmatpush2.msra.mxu0 %v1140
        %1180 = vmatprep.subr.mxu0 %v1139
        %1181 = vmatpush2.msra.mxu0 %v1138
        %1182 = vmatprep.subr.mxu0 %v1137
        %1183 = vmatpush2.msra.mxu0 %v1136
        %1184 = vmatprep.subr.mxu0 %v1135
        %1185 = vmatpush2.msra.mxu0 %v1134
        %1186 = vmatprep.subr.mxu0 %v1133
        %1187 = vmatpush2.msra.mxu0 %v1132
        %1188 = vmatprep.subr.mxu0 %v1131
        %1189 = vmatpush2.msra.mxu0 %v1130
        %1190 = vmatprep.subr.mxu0 %v1129
        %1191 = vmatpush2.msra.mxu0 %v1128
        %1192 = vmatprep.subr.mxu0 %v1127
        %1193 = vmatpush2.msra.mxu0 %v1126
        %1194 = vmatprep.subr.mxu0 %v1125
        %1195 = vmatpush2.msra.mxu0 %v1124
        %1196 = vmatprep.subr.mxu0 %v1123
        %1197 = vmatpush2.msra.mxu0 %v1122
        %1198 = vmatprep.subr.mxu0 %v1121
        %1199 = vmatpush2.msra.mxu0 %v1120
        %1200 = vmatprep.subr.mxu0 %v1119
        %1201 = vmatpush2.msra.mxu0 %v1118
        %1202 = vmatprep.subr.mxu0 %v1117
        %1203 = vmatpush2.msra.mxu0 %v1116
        %1204 = vmatprep.subr.mxu0 %v1115
        %1205 = vmatpush2.msra.mxu0 %v1114
        %1206 = vmatprep.subr.mxu0 %v1113
        %1207 = vmatpush2.msra.mxu0 %v1112
        %1208 = vmatprep.mubr.f32.mxu0 %v1077
        %1209 = vmatmul.mubr.f32.gmra.mxu0 %v1075
        %v1210 = vpop.f32.mrf.mxu0
        %v1211 = vadd.f32 0.0, %v1210
        %v1212 = vpop.f32.mrf.mxu0
        %v1213 = vadd.f32 0.0, %v1212
        %1214 = vdwg.mxu0
        %v1215 = vadd.f32 %v999, %v1211
        %v1216 = vadd.f32 %v1001, %v1213
        %s1217 = scalar_lea.vmem %s3, 24
        %v1218 = vld [vmem:[%s1217] sm:$0xff]
        %v1220 = vsel %vm574, %v1218, 0
        %1222 = vmatprep.subr.mxu0 0.0
        %1223 = vmatpush1.msra.mxu0 0.0
        %1224 = vmatprep.subr.mxu0 0.0
        %1225 = vmatpush1.msra.mxu0 0.0
        %1226 = vmatprep.subr.mxu0 0.0
        %1227 = vmatpush1.msra.mxu0 0.0
        %1228 = vmatprep.subr.mxu0 0.0
        %1229 = vmatpush1.msra.mxu0 0.0
        %1230 = vmatprep.subr.mxu0 0.0
        %1231 = vmatpush1.msra.mxu0 0.0
        %1232 = vmatprep.subr.mxu0 0.0
        %1233 = vmatpush1.msra.mxu0 0.0
        %1234 = vmatprep.subr.mxu0 0.0
        %1235 = vmatpush1.msra.mxu0 0.0
        %1236 = vmatprep.subr.mxu0 0.0
        %1237 = vmatpush1.msra.mxu0 0.0
        %1238 = vmatprep.subr.mxu0 0.0
        %1239 = vmatpush1.msra.mxu0 0.0
        %1240 = vmatprep.subr.mxu0 0.0
        %1241 = vmatpush1.msra.mxu0 0.0
        %1242 = vmatprep.subr.mxu0 0.0
        %1243 = vmatpush1.msra.mxu0 0.0
        %1244 = vmatprep.subr.mxu0 0.0
        %1245 = vmatpush1.msra.mxu0 0.0
        %1246 = vmatprep.subr.mxu0 0.0
        %1247 = vmatpush1.msra.mxu0 0.0
        %1248 = vmatprep.subr.mxu0 0.0
        %1249 = vmatpush1.msra.mxu0 0.0
        %1250 = vmatprep.subr.mxu0 0.0
        %1251 = vmatpush1.msra.mxu0 0.0
        %1252 = vmatprep.subr.mxu0 %v583
        %1253 = vmatpush1.msra.mxu0 %v580
        %1254 = vmatprep.subr.mxu0 0.0
        %1255 = vmatpush2.msra.mxu0 0.0
        %1256 = vmatprep.subr.mxu0 0.0
        %1257 = vmatpush2.msra.mxu0 0.0
        %1258 = vmatprep.subr.mxu0 0.0
        %1259 = vmatpush2.msra.mxu0 0.0
        %1260 = vmatprep.subr.mxu0 0.0
        %1261 = vmatpush2.msra.mxu0 0.0
        %1262 = vmatprep.subr.mxu0 0.0
        %1263 = vmatpush2.msra.mxu0 0.0
        %1264 = vmatprep.subr.mxu0 0.0
        %1265 = vmatpush2.msra.mxu0 0.0
        %1266 = vmatprep.subr.mxu0 0.0
        %1267 = vmatpush2.msra.mxu0 0.0
        %1268 = vmatprep.subr.mxu0 0.0
        %1269 = vmatpush2.msra.mxu0 0.0
        %1270 = vmatprep.subr.mxu0 0.0
        %1271 = vmatpush2.msra.mxu0 0.0
        %1272 = vmatprep.subr.mxu0 0.0
        %1273 = vmatpush2.msra.mxu0 0.0
        %1274 = vmatprep.subr.mxu0 0.0
        %1275 = vmatpush2.msra.mxu0 0.0
        %1276 = vmatprep.subr.mxu0 0.0
        %1277 = vmatpush2.msra.mxu0 0.0
        %1278 = vmatprep.subr.mxu0 0.0
        %1279 = vmatpush2.msra.mxu0 0.0
        %1280 = vmatprep.subr.mxu0 0.0
        %1281 = vmatpush2.msra.mxu0 0.0
        %1282 = vmatprep.subr.mxu0 0.0
        %1283 = vmatpush2.msra.mxu0 0.0
        %1284 = vmatprep.subr.mxu0 0.0
        %1285 = vmatpush2.msra.mxu0 0.0
        %1286 = vmatprep.mubr.f32.mxu0 0.0
        %1287 = vmatmul.mubr.f32.gmra.mxu0 %v1220
        %v1288 = vpop.f32.mrf.mxu0
        %v1289 = vadd.f32 0.0, %v1288
        %v1290 = vpop.f32.mrf.mxu0
        %v1291 = vadd.f32 0.0, %v1290
        %1292 = vdwg.mxu0
        %s1293 = scalar_lea.vmem [#allocation7], 1536
        %v1294 = vld [vmem:[%s1293] sm:$0xff]
        %v1295 = vld [vmem:[%s1293 + $0x8] sm:$0xff]
        %v1296 = vld [vmem:[%s1293 + $0x10] sm:$0xff]
        %v1297 = vld [vmem:[%s1293 + $0x18] sm:$0xff]
        %v1298 = vld [vmem:[%s1293 + $0x20] sm:$0xff]
        %v1299 = vld [vmem:[%s1293 + $0x28] sm:$0xff]
        %v1300 = vld [vmem:[%s1293 + $0x30] sm:$0xff]
        %v1301 = vld [vmem:[%s1293 + $0x38] sm:$0xff]
        %v1302 = vld [vmem:[%s1293 + $0x40] sm:$0xff]
        %v1303 = vld [vmem:[%s1293 + $0x48] sm:$0xff]
        %v1304 = vld [vmem:[%s1293 + $0x50] sm:$0xff]
        %v1305 = vld [vmem:[%s1293 + $0x58] sm:$0xff]
        %v1306 = vld [vmem:[%s1293 + $0x60] sm:$0xff]
        %v1307 = vld [vmem:[%s1293 + $0x68] sm:$0xff]
        %v1308 = vld [vmem:[%s1293 + $0x70] sm:$0xff]
        %v1309 = vld [vmem:[%s1293 + $0x78] sm:$0xff]
        %v1310 = vld [vmem:[%s1293 + $0x80] sm:$0xff]
        %v1311 = vld [vmem:[%s1293 + $0x88] sm:$0xff]
        %v1312 = vld [vmem:[%s1293 + $0x90] sm:$0xff]
        %v1313 = vld [vmem:[%s1293 + $0x98] sm:$0xff]
        %v1314 = vld [vmem:[%s1293 + $0xa0] sm:$0xff]
        %v1315 = vld [vmem:[%s1293 + $0xa8] sm:$0xff]
        %v1316 = vld [vmem:[%s1293 + $0xb0] sm:$0xff]
        %v1317 = vld [vmem:[%s1293 + $0xb8] sm:$0xff]
        %v1318 = vld [vmem:[%s1293 + $0xc0] sm:$0xff]
        %v1319 = vld [vmem:[%s1293 + $0xc8] sm:$0xff]
        %v1320 = vld [vmem:[%s1293 + $0xd0] sm:$0xff]
        %v1321 = vld [vmem:[%s1293 + $0xd8] sm:$0xff]
        %v1322 = vld [vmem:[%s1293 + $0xe0] sm:$0xff]
        %v1323 = vld [vmem:[%s1293 + $0xe8] sm:$0xff]
        %v1324 = vld [vmem:[%s1293 + $0xf0] sm:$0xff]
        %v1325 = vld [vmem:[%s1293 + $0xf8] sm:$0xff]
        %v1326 = vld [vmem:[%s1293 + $0x100] sm:$0xff]
        %v1327 = vld [vmem:[%s1293 + $0x108] sm:$0xff]
        %v1328 = vld [vmem:[%s1293 + $0x110] sm:$0xff]
        %v1329 = vld [vmem:[%s1293 + $0x118] sm:$0xff]
        %v1330 = vld [vmem:[%s1293 + $0x120] sm:$0xff]
        %v1331 = vld [vmem:[%s1293 + $0x128] sm:$0xff]
        %v1332 = vld [vmem:[%s1293 + $0x130] sm:$0xff]
        %v1333 = vld [vmem:[%s1293 + $0x138] sm:$0xff]
        %v1334 = vld [vmem:[%s1293 + $0x140] sm:$0xff]
        %v1335 = vld [vmem:[%s1293 + $0x148] sm:$0xff]
        %v1336 = vld [vmem:[%s1293 + $0x150] sm:$0xff]
        %v1337 = vld [vmem:[%s1293 + $0x158] sm:$0xff]
        %v1338 = vld [vmem:[%s1293 + $0x160] sm:$0xff]
        %v1339 = vld [vmem:[%s1293 + $0x168] sm:$0xff]
        %v1340 = vld [vmem:[%s1293 + $0x170] sm:$0xff]
        %v1341 = vld [vmem:[%s1293 + $0x178] sm:$0xff]
        %v1342 = vld [vmem:[%s1293 + $0x180] sm:$0xff]
        %v1343 = vld [vmem:[%s1293 + $0x188] sm:$0xff]
        %v1344 = vld [vmem:[%s1293 + $0x190] sm:$0xff]
        %v1345 = vld [vmem:[%s1293 + $0x198] sm:$0xff]
        %v1346 = vld [vmem:[%s1293 + $0x1a0] sm:$0xff]
        %v1347 = vld [vmem:[%s1293 + $0x1a8] sm:$0xff]
        %v1348 = vld [vmem:[%s1293 + $0x1b0] sm:$0xff]
        %v1349 = vld [vmem:[%s1293 + $0x1b8] sm:$0xff]
        %v1350 = vld [vmem:[%s1293 + $0x1c0] sm:$0xff]
        %v1351 = vld [vmem:[%s1293 + $0x1c8] sm:$0xff]
        %v1352 = vld [vmem:[%s1293 + $0x1d0] sm:$0xff]
        %v1353 = vld [vmem:[%s1293 + $0x1d8] sm:$0xff]
        %v1354 = vld [vmem:[%s1293 + $0x1e0] sm:$0xff]
        %v1355 = vld [vmem:[%s1293 + $0x1e8] sm:$0xff]
        %v1356 = vld [vmem:[%s1293 + $0x1f0] sm:$0xff]
        %v1357 = vld [vmem:[%s1293 + $0x1f8] sm:$0xff]
        %1358 = vmatprep.subr.mxu0 %v1325
        %1359 = vmatpush1.msra.mxu0 %v1324
        %1360 = vmatprep.subr.mxu0 %v1323
        %1361 = vmatpush1.msra.mxu0 %v1322
        %1362 = vmatprep.subr.mxu0 %v1321
        %1363 = vmatpush1.msra.mxu0 %v1320
        %1364 = vmatprep.subr.mxu0 %v1319
        %1365 = vmatpush1.msra.mxu0 %v1318
        %1366 = vmatprep.subr.mxu0 %v1317
        %1367 = vmatpush1.msra.mxu0 %v1316
        %1368 = vmatprep.subr.mxu0 %v1315
        %1369 = vmatpush1.msra.mxu0 %v1314
        %1370 = vmatprep.subr.mxu0 %v1313
        %1371 = vmatpush1.msra.mxu0 %v1312
        %1372 = vmatprep.subr.mxu0 %v1311
        %1373 = vmatpush1.msra.mxu0 %v1310
        %1374 = vmatprep.subr.mxu0 %v1309
        %1375 = vmatpush1.msra.mxu0 %v1308
        %1376 = vmatprep.subr.mxu0 %v1307
        %1377 = vmatpush1.msra.mxu0 %v1306
        %1378 = vmatprep.subr.mxu0 %v1305
        %1379 = vmatpush1.msra.mxu0 %v1304
        %1380 = vmatprep.subr.mxu0 %v1303
        %1381 = vmatpush1.msra.mxu0 %v1302
        %1382 = vmatprep.subr.mxu0 %v1301
        %1383 = vmatpush1.msra.mxu0 %v1300
        %1384 = vmatprep.subr.mxu0 %v1299
        %1385 = vmatpush1.msra.mxu0 %v1298
        %1386 = vmatprep.subr.mxu0 %v1297
        %1387 = vmatpush1.msra.mxu0 %v1296
        %1388 = vmatprep.subr.mxu0 %v1295
        %1389 = vmatpush1.msra.mxu0 %v1294
        %1390 = vmatprep.subr.mxu0 %v1357
        %1391 = vmatpush2.msra.mxu0 %v1356
        %1392 = vmatprep.subr.mxu0 %v1355
        %1393 = vmatpush2.msra.mxu0 %v1354
        %1394 = vmatprep.subr.mxu0 %v1353
        %1395 = vmatpush2.msra.mxu0 %v1352
        %1396 = vmatprep.subr.mxu0 %v1351
        %1397 = vmatpush2.msra.mxu0 %v1350
        %1398 = vmatprep.subr.mxu0 %v1349
        %1399 = vmatpush2.msra.mxu0 %v1348
        %1400 = vmatprep.subr.mxu0 %v1347
        %1401 = vmatpush2.msra.mxu0 %v1346
        %1402 = vmatprep.subr.mxu0 %v1345
        %1403 = vmatpush2.msra.mxu0 %v1344
        %1404 = vmatprep.subr.mxu0 %v1343
        %1405 = vmatpush2.msra.mxu0 %v1342
        %1406 = vmatprep.subr.mxu0 %v1341
        %1407 = vmatpush2.msra.mxu0 %v1340
        %1408 = vmatprep.subr.mxu0 %v1339
        %1409 = vmatpush2.msra.mxu0 %v1338
        %1410 = vmatprep.subr.mxu0 %v1337
        %1411 = vmatpush2.msra.mxu0 %v1336
        %1412 = vmatprep.subr.mxu0 %v1335
        %1413 = vmatpush2.msra.mxu0 %v1334
        %1414 = vmatprep.subr.mxu0 %v1333
        %1415 = vmatpush2.msra.mxu0 %v1332
        %1416 = vmatprep.subr.mxu0 %v1331
        %1417 = vmatpush2.msra.mxu0 %v1330
        %1418 = vmatprep.subr.mxu0 %v1329
        %1419 = vmatpush2.msra.mxu0 %v1328
        %1420 = vmatprep.subr.mxu0 %v1327
        %1421 = vmatpush2.msra.mxu0 %v1326
        %1422 = vmatprep.mubr.f32.mxu0 %v1291
        %1423 = vmatmul.mubr.f32.gmra.mxu0 %v1289
        %v1424 = vpop.f32.mrf.mxu0
        %v1425 = vadd.f32 0.0, %v1424
        %v1426 = vpop.f32.mrf.mxu0
        %v1427 = vadd.f32 0.0, %v1426
        %1428 = vdwg.mxu0
        %v1429 = vadd.f32 %v1215, %v1425
        %v1430 = vadd.f32 %v1216, %v1427
        %s1431 = scalar_lea.vmem %s3, 32
        %v1432 = vld [vmem:[%s1431] sm:$0xff]
        %v1434 = vsel %vm574, %v1432, 0
        %1436 = vmatprep.subr.mxu0 0.0
        %1437 = vmatpush1.msra.mxu0 0.0
        %1438 = vmatprep.subr.mxu0 0.0
        %1439 = vmatpush1.msra.mxu0 0.0
        %1440 = vmatprep.subr.mxu0 0.0
        %1441 = vmatpush1.msra.mxu0 0.0
        %1442 = vmatprep.subr.mxu0 0.0
        %1443 = vmatpush1.msra.mxu0 0.0
        %1444 = vmatprep.subr.mxu0 0.0
        %1445 = vmatpush1.msra.mxu0 0.0
        %1446 = vmatprep.subr.mxu0 0.0
        %1447 = vmatpush1.msra.mxu0 0.0
        %1448 = vmatprep.subr.mxu0 0.0
        %1449 = vmatpush1.msra.mxu0 0.0
        %1450 = vmatprep.subr.mxu0 0.0
        %1451 = vmatpush1.msra.mxu0 0.0
        %1452 = vmatprep.subr.mxu0 0.0
        %1453 = vmatpush1.msra.mxu0 0.0
        %1454 = vmatprep.subr.mxu0 0.0
        %1455 = vmatpush1.msra.mxu0 0.0
        %1456 = vmatprep.subr.mxu0 0.0
        %1457 = vmatpush1.msra.mxu0 0.0
        %1458 = vmatprep.subr.mxu0 0.0
        %1459 = vmatpush1.msra.mxu0 0.0
        %1460 = vmatprep.subr.mxu0 0.0
        %1461 = vmatpush1.msra.mxu0 0.0
        %1462 = vmatprep.subr.mxu0 0.0
        %1463 = vmatpush1.msra.mxu0 0.0
        %1464 = vmatprep.subr.mxu0 0.0
        %1465 = vmatpush1.msra.mxu0 0.0
        %1466 = vmatprep.subr.mxu0 %v583
        %1467 = vmatpush1.msra.mxu0 %v580
        %1468 = vmatprep.subr.mxu0 0.0
        %1469 = vmatpush2.msra.mxu0 0.0
        %1470 = vmatprep.subr.mxu0 0.0
        %1471 = vmatpush2.msra.mxu0 0.0
        %1472 = vmatprep.subr.mxu0 0.0
        %1473 = vmatpush2.msra.mxu0 0.0
        %1474 = vmatprep.subr.mxu0 0.0
        %1475 = vmatpush2.msra.mxu0 0.0
        %1476 = vmatprep.subr.mxu0 0.0
        %1477 = vmatpush2.msra.mxu0 0.0
        %1478 = vmatprep.subr.mxu0 0.0
        %1479 = vmatpush2.msra.mxu0 0.0
        %1480 = vmatprep.subr.mxu0 0.0
        %1481 = vmatpush2.msra.mxu0 0.0
        %1482 = vmatprep.subr.mxu0 0.0
        %1483 = vmatpush2.msra.mxu0 0.0
        %1484 = vmatprep.subr.mxu0 0.0
        %1485 = vmatpush2.msra.mxu0 0.0
        %1486 = vmatprep.subr.mxu0 0.0
        %1487 = vmatpush2.msra.mxu0 0.0
        %1488 = vmatprep.subr.mxu0 0.0
        %1489 = vmatpush2.msra.mxu0 0.0
        %1490 = vmatprep.subr.mxu0 0.0
        %1491 = vmatpush2.msra.mxu0 0.0
        %1492 = vmatprep.subr.mxu0 0.0
        %1493 = vmatpush2.msra.mxu0 0.0
        %1494 = vmatprep.subr.mxu0 0.0
        %1495 = vmatpush2.msra.mxu0 0.0
        %1496 = vmatprep.subr.mxu0 0.0
        %1497 = vmatpush2.msra.mxu0 0.0
        %1498 = vmatprep.subr.mxu0 0.0
        %1499 = vmatpush2.msra.mxu0 0.0
        %1500 = vmatprep.mubr.f32.mxu0 0.0
        %1501 = vmatmul.mubr.f32.gmra.mxu0 %v1434
        %v1502 = vpop.f32.mrf.mxu0
        %v1503 = vadd.f32 0.0, %v1502
        %v1504 = vpop.f32.mrf.mxu0
        %v1505 = vadd.f32 0.0, %v1504
        %1506 = vdwg.mxu0
        %s1507 = scalar_lea.vmem [#allocation7], 2048
        %v1508 = vld [vmem:[%s1507] sm:$0xff]
        %v1509 = vld [vmem:[%s1507 + $0x8] sm:$0xff]
        %v1510 = vld [vmem:[%s1507 + $0x10] sm:$0xff]
        %v1511 = vld [vmem:[%s1507 + $0x18] sm:$0xff]
        %v1512 = vld [vmem:[%s1507 + $0x20] sm:$0xff]
        %v1513 = vld [vmem:[%s1507 + $0x28] sm:$0xff]
        %v1514 = vld [vmem:[%s1507 + $0x30] sm:$0xff]
        %v1515 = vld [vmem:[%s1507 + $0x38] sm:$0xff]
        %v1516 = vld [vmem:[%s1507 + $0x40] sm:$0xff]
        %v1517 = vld [vmem:[%s1507 + $0x48] sm:$0xff]
        %v1518 = vld [vmem:[%s1507 + $0x50] sm:$0xff]
        %v1519 = vld [vmem:[%s1507 + $0x58] sm:$0xff]
        %v1520 = vld [vmem:[%s1507 + $0x60] sm:$0xff]
        %v1521 = vld [vmem:[%s1507 + $0x68] sm:$0xff]
        %v1522 = vld [vmem:[%s1507 + $0x70] sm:$0xff]
        %v1523 = vld [vmem:[%s1507 + $0x78] sm:$0xff]
        %v1524 = vld [vmem:[%s1507 + $0x80] sm:$0xff]
        %v1525 = vld [vmem:[%s1507 + $0x88] sm:$0xff]
        %v1526 = vld [vmem:[%s1507 + $0x90] sm:$0xff]
        %v1527 = vld [vmem:[%s1507 + $0x98] sm:$0xff]
        %v1528 = vld [vmem:[%s1507 + $0xa0] sm:$0xff]
        %v1529 = vld [vmem:[%s1507 + $0xa8] sm:$0xff]
        %v1530 = vld [vmem:[%s1507 + $0xb0] sm:$0xff]
        %v1531 = vld [vmem:[%s1507 + $0xb8] sm:$0xff]
        %v1532 = vld [vmem:[%s1507 + $0xc0] sm:$0xff]
        %v1533 = vld [vmem:[%s1507 + $0xc8] sm:$0xff]
        %v1534 = vld [vmem:[%s1507 + $0xd0] sm:$0xff]
        %v1535 = vld [vmem:[%s1507 + $0xd8] sm:$0xff]
        %v1536 = vld [vmem:[%s1507 + $0xe0] sm:$0xff]
        %v1537 = vld [vmem:[%s1507 + $0xe8] sm:$0xff]
        %v1538 = vld [vmem:[%s1507 + $0xf0] sm:$0xff]
        %v1539 = vld [vmem:[%s1507 + $0xf8] sm:$0xff]
        %v1540 = vld [vmem:[%s1507 + $0x100] sm:$0xff]
        %v1541 = vld [vmem:[%s1507 + $0x108] sm:$0xff]
        %v1542 = vld [vmem:[%s1507 + $0x110] sm:$0xff]
        %v1543 = vld [vmem:[%s1507 + $0x118] sm:$0xff]
        %v1544 = vld [vmem:[%s1507 + $0x120] sm:$0xff]
        %v1545 = vld [vmem:[%s1507 + $0x128] sm:$0xff]
        %v1546 = vld [vmem:[%s1507 + $0x130] sm:$0xff]
        %v1547 = vld [vmem:[%s1507 + $0x138] sm:$0xff]
        %v1548 = vld [vmem:[%s1507 + $0x140] sm:$0xff]
        %v1549 = vld [vmem:[%s1507 + $0x148] sm:$0xff]
        %v1550 = vld [vmem:[%s1507 + $0x150] sm:$0xff]
        %v1551 = vld [vmem:[%s1507 + $0x158] sm:$0xff]
        %v1552 = vld [vmem:[%s1507 + $0x160] sm:$0xff]
        %v1553 = vld [vmem:[%s1507 + $0x168] sm:$0xff]
        %v1554 = vld [vmem:[%s1507 + $0x170] sm:$0xff]
        %v1555 = vld [vmem:[%s1507 + $0x178] sm:$0xff]
        %v1556 = vld [vmem:[%s1507 + $0x180] sm:$0xff]
        %v1557 = vld [vmem:[%s1507 + $0x188] sm:$0xff]
        %v1558 = vld [vmem:[%s1507 + $0x190] sm:$0xff]
        %v1559 = vld [vmem:[%s1507 + $0x198] sm:$0xff]
        %v1560 = vld [vmem:[%s1507 + $0x1a0] sm:$0xff]
        %v1561 = vld [vmem:[%s1507 + $0x1a8] sm:$0xff]
        %v1562 = vld [vmem:[%s1507 + $0x1b0] sm:$0xff]
        %v1563 = vld [vmem:[%s1507 + $0x1b8] sm:$0xff]
        %v1564 = vld [vmem:[%s1507 + $0x1c0] sm:$0xff]
        %v1565 = vld [vmem:[%s1507 + $0x1c8] sm:$0xff]
        %v1566 = vld [vmem:[%s1507 + $0x1d0] sm:$0xff]
        %v1567 = vld [vmem:[%s1507 + $0x1d8] sm:$0xff]
        %v1568 = vld [vmem:[%s1507 + $0x1e0] sm:$0xff]
        %v1569 = vld [vmem:[%s1507 + $0x1e8] sm:$0xff]
        %v1570 = vld [vmem:[%s1507 + $0x1f0] sm:$0xff]
        %v1571 = vld [vmem:[%s1507 + $0x1f8] sm:$0xff]
        %1572 = vmatprep.subr.mxu0 %v1539
        %1573 = vmatpush1.msra.mxu0 %v1538
        %1574 = vmatprep.subr.mxu0 %v1537
        %1575 = vmatpush1.msra.mxu0 %v1536
        %1576 = vmatprep.subr.mxu0 %v1535
        %1577 = vmatpush1.msra.mxu0 %v1534
        %1578 = vmatprep.subr.mxu0 %v1533
        %1579 = vmatpush1.msra.mxu0 %v1532
        %1580 = vmatprep.subr.mxu0 %v1531
        %1581 = vmatpush1.msra.mxu0 %v1530
        %1582 = vmatprep.subr.mxu0 %v1529
        %1583 = vmatpush1.msra.mxu0 %v1528
        %1584 = vmatprep.subr.mxu0 %v1527
        %1585 = vmatpush1.msra.mxu0 %v1526
        %1586 = vmatprep.subr.mxu0 %v1525
        %1587 = vmatpush1.msra.mxu0 %v1524
        %1588 = vmatprep.subr.mxu0 %v1523
        %1589 = vmatpush1.msra.mxu0 %v1522
        %1590 = vmatprep.subr.mxu0 %v1521
        %1591 = vmatpush1.msra.mxu0 %v1520
        %1592 = vmatprep.subr.mxu0 %v1519
        %1593 = vmatpush1.msra.mxu0 %v1518
        %1594 = vmatprep.subr.mxu0 %v1517
        %1595 = vmatpush1.msra.mxu0 %v1516
        %1596 = vmatprep.subr.mxu0 %v1515
        %1597 = vmatpush1.msra.mxu0 %v1514
        %1598 = vmatprep.subr.mxu0 %v1513
        %1599 = vmatpush1.msra.mxu0 %v1512
        %1600 = vmatprep.subr.mxu0 %v1511
        %1601 = vmatpush1.msra.mxu0 %v1510
        %1602 = vmatprep.subr.mxu0 %v1509
        %1603 = vmatpush1.msra.mxu0 %v1508
        %1604 = vmatprep.subr.mxu0 %v1571
        %1605 = vmatpush2.msra.mxu0 %v1570
        %1606 = vmatprep.subr.mxu0 %v1569
        %1607 = vmatpush2.msra.mxu0 %v1568
        %1608 = vmatprep.subr.mxu0 %v1567
        %1609 = vmatpush2.msra.mxu0 %v1566
        %1610 = vmatprep.subr.mxu0 %v1565
        %1611 = vmatpush2.msra.mxu0 %v1564
        %1612 = vmatprep.subr.mxu0 %v1563
        %1613 = vmatpush2.msra.mxu0 %v1562
        %1614 = vmatprep.subr.mxu0 %v1561
        %1615 = vmatpush2.msra.mxu0 %v1560
        %1616 = vmatprep.subr.mxu0 %v1559
        %1617 = vmatpush2.msra.mxu0 %v1558
        %1618 = vmatprep.subr.mxu0 %v1557
        %1619 = vmatpush2.msra.mxu0 %v1556
        %1620 = vmatprep.subr.mxu0 %v1555
        %1621 = vmatpush2.msra.mxu0 %v1554
        %1622 = vmatprep.subr.mxu0 %v1553
        %1623 = vmatpush2.msra.mxu0 %v1552
        %1624 = vmatprep.subr.mxu0 %v1551
        %1625 = vmatpush2.msra.mxu0 %v1550
        %1626 = vmatprep.subr.mxu0 %v1549
        %1627 = vmatpush2.msra.mxu0 %v1548
        %1628 = vmatprep.subr.mxu0 %v1547
        %1629 = vmatpush2.msra.mxu0 %v1546
        %1630 = vmatprep.subr.mxu0 %v1545
        %1631 = vmatpush2.msra.mxu0 %v1544
        %1632 = vmatprep.subr.mxu0 %v1543
        %1633 = vmatpush2.msra.mxu0 %v1542
        %1634 = vmatprep.subr.mxu0 %v1541
        %1635 = vmatpush2.msra.mxu0 %v1540
        %1636 = vmatprep.mubr.f32.mxu0 %v1505
        %1637 = vmatmul.mubr.f32.gmra.mxu0 %v1503
        %v1638 = vpop.f32.mrf.mxu0
        %v1639 = vadd.f32 0.0, %v1638
        %v1640 = vpop.f32.mrf.mxu0
        %v1641 = vadd.f32 0.0, %v1640
        %1642 = vdwg.mxu0
        %v1643 = vadd.f32 %v1429, %v1639
        %v1644 = vadd.f32 %v1430, %v1641
        %s1645 = scalar_lea.vmem %s3, 40
        %v1646 = vld [vmem:[%s1645] sm:$0xff]
        %v1648 = vsel %vm574, %v1646, 0
        %1650 = vmatprep.subr.mxu0 0.0
        %1651 = vmatpush1.msra.mxu0 0.0
        %1652 = vmatprep.subr.mxu0 0.0
        %1653 = vmatpush1.msra.mxu0 0.0
        %1654 = vmatprep.subr.mxu0 0.0
        %1655 = vmatpush1.msra.mxu0 0.0
        %1656 = vmatprep.subr.mxu0 0.0
        %1657 = vmatpush1.msra.mxu0 0.0
        %1658 = vmatprep.subr.mxu0 0.0
        %1659 = vmatpush1.msra.mxu0 0.0
        %1660 = vmatprep.subr.mxu0 0.0
        %1661 = vmatpush1.msra.mxu0 0.0
        %1662 = vmatprep.subr.mxu0 0.0
        %1663 = vmatpush1.msra.mxu0 0.0
        %1664 = vmatprep.subr.mxu0 0.0
        %1665 = vmatpush1.msra.mxu0 0.0
        %1666 = vmatprep.subr.mxu0 0.0
        %1667 = vmatpush1.msra.mxu0 0.0
        %1668 = vmatprep.subr.mxu0 0.0
        %1669 = vmatpush1.msra.mxu0 0.0
        %1670 = vmatprep.subr.mxu0 0.0
        %1671 = vmatpush1.msra.mxu0 0.0
        %1672 = vmatprep.subr.mxu0 0.0
        %1673 = vmatpush1.msra.mxu0 0.0
        %1674 = vmatprep.subr.mxu0 0.0
        %1675 = vmatpush1.msra.mxu0 0.0
        %1676 = vmatprep.subr.mxu0 0.0
        %1677 = vmatpush1.msra.mxu0 0.0
        %1678 = vmatprep.subr.mxu0 0.0
        %1679 = vmatpush1.msra.mxu0 0.0
        %1680 = vmatprep.subr.mxu0 %v583
        %1681 = vmatpush1.msra.mxu0 %v580
        %1682 = vmatprep.subr.mxu0 0.0
        %1683 = vmatpush2.msra.mxu0 0.0
        %1684 = vmatprep.subr.mxu0 0.0
        %1685 = vmatpush2.msra.mxu0 0.0
        %1686 = vmatprep.subr.mxu0 0.0
        %1687 = vmatpush2.msra.mxu0 0.0
        %1688 = vmatprep.subr.mxu0 0.0
        %1689 = vmatpush2.msra.mxu0 0.0
        %1690 = vmatprep.subr.mxu0 0.0
        %1691 = vmatpush2.msra.mxu0 0.0
        %1692 = vmatprep.subr.mxu0 0.0
        %1693 = vmatpush2.msra.mxu0 0.0
        %1694 = vmatprep.subr.mxu0 0.0
        %1695 = vmatpush2.msra.mxu0 0.0
        %1696 = vmatprep.subr.mxu0 0.0
        %1697 = vmatpush2.msra.mxu0 0.0
        %1698 = vmatprep.subr.mxu0 0.0
        %1699 = vmatpush2.msra.mxu0 0.0
        %1700 = vmatprep.subr.mxu0 0.0
        %1701 = vmatpush2.msra.mxu0 0.0
        %1702 = vmatprep.subr.mxu0 0.0
        %1703 = vmatpush2.msra.mxu0 0.0
        %1704 = vmatprep.subr.mxu0 0.0
        %1705 = vmatpush2.msra.mxu0 0.0
        %1706 = vmatprep.subr.mxu0 0.0
        %1707 = vmatpush2.msra.mxu0 0.0
        %1708 = vmatprep.subr.mxu0 0.0
        %1709 = vmatpush2.msra.mxu0 0.0
        %1710 = vmatprep.subr.mxu0 0.0
        %1711 = vmatpush2.msra.mxu0 0.0
        %1712 = vmatprep.subr.mxu0 0.0
        %1713 = vmatpush2.msra.mxu0 0.0
        %1714 = vmatprep.mubr.f32.mxu0 0.0
        %1715 = vmatmul.mubr.f32.gmra.mxu0 %v1648
        %v1716 = vpop.f32.mrf.mxu0
        %v1717 = vadd.f32 0.0, %v1716
        %v1718 = vpop.f32.mrf.mxu0
        %v1719 = vadd.f32 0.0, %v1718
        %1720 = vdwg.mxu0
        %s1721 = scalar_lea.vmem [#allocation7], 2560
        %v1722 = vld [vmem:[%s1721] sm:$0xff]
        %v1723 = vld [vmem:[%s1721 + $0x8] sm:$0xff]
        %v1724 = vld [vmem:[%s1721 + $0x10] sm:$0xff]
        %v1725 = vld [vmem:[%s1721 + $0x18] sm:$0xff]
        %v1726 = vld [vmem:[%s1721 + $0x20] sm:$0xff]
        %v1727 = vld [vmem:[%s1721 + $0x28] sm:$0xff]
        %v1728 = vld [vmem:[%s1721 + $0x30] sm:$0xff]
        %v1729 = vld [vmem:[%s1721 + $0x38] sm:$0xff]
        %v1730 = vld [vmem:[%s1721 + $0x40] sm:$0xff]
        %v1731 = vld [vmem:[%s1721 + $0x48] sm:$0xff]
        %v1732 = vld [vmem:[%s1721 + $0x50] sm:$0xff]
        %v1733 = vld [vmem:[%s1721 + $0x58] sm:$0xff]
        %v1734 = vld [vmem:[%s1721 + $0x60] sm:$0xff]
        %v1735 = vld [vmem:[%s1721 + $0x68] sm:$0xff]
        %v1736 = vld [vmem:[%s1721 + $0x70] sm:$0xff]
        %v1737 = vld [vmem:[%s1721 + $0x78] sm:$0xff]
        %v1738 = vld [vmem:[%s1721 + $0x80] sm:$0xff]
        %v1739 = vld [vmem:[%s1721 + $0x88] sm:$0xff]
        %v1740 = vld [vmem:[%s1721 + $0x90] sm:$0xff]
        %v1741 = vld [vmem:[%s1721 + $0x98] sm:$0xff]
        %v1742 = vld [vmem:[%s1721 + $0xa0] sm:$0xff]
        %v1743 = vld [vmem:[%s1721 + $0xa8] sm:$0xff]
        %v1744 = vld [vmem:[%s1721 + $0xb0] sm:$0xff]
        %v1745 = vld [vmem:[%s1721 + $0xb8] sm:$0xff]
        %v1746 = vld [vmem:[%s1721 + $0xc0] sm:$0xff]
        %v1747 = vld [vmem:[%s1721 + $0xc8] sm:$0xff]
        %v1748 = vld [vmem:[%s1721 + $0xd0] sm:$0xff]
        %v1749 = vld [vmem:[%s1721 + $0xd8] sm:$0xff]
        %v1750 = vld [vmem:[%s1721 + $0xe0] sm:$0xff]
        %v1751 = vld [vmem:[%s1721 + $0xe8] sm:$0xff]
        %v1752 = vld [vmem:[%s1721 + $0xf0] sm:$0xff]
        %v1753 = vld [vmem:[%s1721 + $0xf8] sm:$0xff]
        %v1754 = vld [vmem:[%s1721 + $0x100] sm:$0xff]
        %v1755 = vld [vmem:[%s1721 + $0x108] sm:$0xff]
        %v1756 = vld [vmem:[%s1721 + $0x110] sm:$0xff]
        %v1757 = vld [vmem:[%s1721 + $0x118] sm:$0xff]
        %v1758 = vld [vmem:[%s1721 + $0x120] sm:$0xff]
        %v1759 = vld [vmem:[%s1721 + $0x128] sm:$0xff]
        %v1760 = vld [vmem:[%s1721 + $0x130] sm:$0xff]
        %v1761 = vld [vmem:[%s1721 + $0x138] sm:$0xff]
        %v1762 = vld [vmem:[%s1721 + $0x140] sm:$0xff]
        %v1763 = vld [vmem:[%s1721 + $0x148] sm:$0xff]
        %v1764 = vld [vmem:[%s1721 + $0x150] sm:$0xff]
        %v1765 = vld [vmem:[%s1721 + $0x158] sm:$0xff]
        %v1766 = vld [vmem:[%s1721 + $0x160] sm:$0xff]
        %v1767 = vld [vmem:[%s1721 + $0x168] sm:$0xff]
        %v1768 = vld [vmem:[%s1721 + $0x170] sm:$0xff]
        %v1769 = vld [vmem:[%s1721 + $0x178] sm:$0xff]
        %v1770 = vld [vmem:[%s1721 + $0x180] sm:$0xff]
        %v1771 = vld [vmem:[%s1721 + $0x188] sm:$0xff]
        %v1772 = vld [vmem:[%s1721 + $0x190] sm:$0xff]
        %v1773 = vld [vmem:[%s1721 + $0x198] sm:$0xff]
        %v1774 = vld [vmem:[%s1721 + $0x1a0] sm:$0xff]
        %v1775 = vld [vmem:[%s1721 + $0x1a8] sm:$0xff]
        %v1776 = vld [vmem:[%s1721 + $0x1b0] sm:$0xff]
        %v1777 = vld [vmem:[%s1721 + $0x1b8] sm:$0xff]
        %v1778 = vld [vmem:[%s1721 + $0x1c0] sm:$0xff]
        %v1779 = vld [vmem:[%s1721 + $0x1c8] sm:$0xff]
        %v1780 = vld [vmem:[%s1721 + $0x1d0] sm:$0xff]
        %v1781 = vld [vmem:[%s1721 + $0x1d8] sm:$0xff]
        %v1782 = vld [vmem:[%s1721 + $0x1e0] sm:$0xff]
        %v1783 = vld [vmem:[%s1721 + $0x1e8] sm:$0xff]
        %v1784 = vld [vmem:[%s1721 + $0x1f0] sm:$0xff]
        %v1785 = vld [vmem:[%s1721 + $0x1f8] sm:$0xff]
        %1786 = vmatprep.subr.mxu0 %v1753
        %1787 = vmatpush1.msra.mxu0 %v1752
        %1788 = vmatprep.subr.mxu0 %v1751
        %1789 = vmatpush1.msra.mxu0 %v1750
        %1790 = vmatprep.subr.mxu0 %v1749
        %1791 = vmatpush1.msra.mxu0 %v1748
        %1792 = vmatprep.subr.mxu0 %v1747
        %1793 = vmatpush1.msra.mxu0 %v1746
        %1794 = vmatprep.subr.mxu0 %v1745
        %1795 = vmatpush1.msra.mxu0 %v1744
        %1796 = vmatprep.subr.mxu0 %v1743
        %1797 = vmatpush1.msra.mxu0 %v1742
        %1798 = vmatprep.subr.mxu0 %v1741
        %1799 = vmatpush1.msra.mxu0 %v1740
        %1800 = vmatprep.subr.mxu0 %v1739
        %1801 = vmatpush1.msra.mxu0 %v1738
        %1802 = vmatprep.subr.mxu0 %v1737
        %1803 = vmatpush1.msra.mxu0 %v1736
        %1804 = vmatprep.subr.mxu0 %v1735
        %1805 = vmatpush1.msra.mxu0 %v1734
        %1806 = vmatprep.subr.mxu0 %v1733
        %1807 = vmatpush1.msra.mxu0 %v1732
        %1808 = vmatprep.subr.mxu0 %v1731
        %1809 = vmatpush1.msra.mxu0 %v1730
        %1810 = vmatprep.subr.mxu0 %v1729
        %1811 = vmatpush1.msra.mxu0 %v1728
        %1812 = vmatprep.subr.mxu0 %v1727
        %1813 = vmatpush1.msra.mxu0 %v1726
        %1814 = vmatprep.subr.mxu0 %v1725
        %1815 = vmatpush1.msra.mxu0 %v1724
        %1816 = vmatprep.subr.mxu0 %v1723
        %1817 = vmatpush1.msra.mxu0 %v1722
        %1818 = vmatprep.subr.mxu0 %v1785
        %1819 = vmatpush2.msra.mxu0 %v1784
        %1820 = vmatprep.subr.mxu0 %v1783
        %1821 = vmatpush2.msra.mxu0 %v1782
        %1822 = vmatprep.subr.mxu0 %v1781
        %1823 = vmatpush2.msra.mxu0 %v1780
        %1824 = vmatprep.subr.mxu0 %v1779
        %1825 = vmatpush2.msra.mxu0 %v1778
        %1826 = vmatprep.subr.mxu0 %v1777
        %1827 = vmatpush2.msra.mxu0 %v1776
        %1828 = vmatprep.subr.mxu0 %v1775
        %1829 = vmatpush2.msra.mxu0 %v1774
        %1830 = vmatprep.subr.mxu0 %v1773
        %1831 = vmatpush2.msra.mxu0 %v1772
        %1832 = vmatprep.subr.mxu0 %v1771
        %1833 = vmatpush2.msra.mxu0 %v1770
        %1834 = vmatprep.subr.mxu0 %v1769
        %1835 = vmatpush2.msra.mxu0 %v1768
        %1836 = vmatprep.subr.mxu0 %v1767
        %1837 = vmatpush2.msra.mxu0 %v1766
        %1838 = vmatprep.subr.mxu0 %v1765
        %1839 = vmatpush2.msra.mxu0 %v1764
        %1840 = vmatprep.subr.mxu0 %v1763
        %1841 = vmatpush2.msra.mxu0 %v1762
        %1842 = vmatprep.subr.mxu0 %v1761
        %1843 = vmatpush2.msra.mxu0 %v1760
        %1844 = vmatprep.subr.mxu0 %v1759
        %1845 = vmatpush2.msra.mxu0 %v1758
        %1846 = vmatprep.subr.mxu0 %v1757
        %1847 = vmatpush2.msra.mxu0 %v1756
        %1848 = vmatprep.subr.mxu0 %v1755
        %1849 = vmatpush2.msra.mxu0 %v1754
        %1850 = vmatprep.mubr.f32.mxu0 %v1719
        %1851 = vmatmul.mubr.f32.gmra.mxu0 %v1717
        %v1852 = vpop.f32.mrf.mxu0
        %v1853 = vadd.f32 0.0, %v1852
        %v1854 = vpop.f32.mrf.mxu0
        %v1855 = vadd.f32 0.0, %v1854
        %1856 = vdwg.mxu0
        %v1857 = vadd.f32 %v1643, %v1853
        %v1858 = vadd.f32 %v1644, %v1855
        %s1859 = scalar_lea.vmem %s3, 48
        %v1860 = vld [vmem:[%s1859] sm:$0xff]
        %v1862 = vsel %vm574, %v1860, 0
        %1864 = vmatprep.subr.mxu0 0.0
        %1865 = vmatpush1.msra.mxu0 0.0
        %1866 = vmatprep.subr.mxu0 0.0
        %1867 = vmatpush1.msra.mxu0 0.0
        %1868 = vmatprep.subr.mxu0 0.0
        %1869 = vmatpush1.msra.mxu0 0.0
        %1870 = vmatprep.subr.mxu0 0.0
        %1871 = vmatpush1.msra.mxu0 0.0
        %1872 = vmatprep.subr.mxu0 0.0
        %1873 = vmatpush1.msra.mxu0 0.0
        %1874 = vmatprep.subr.mxu0 0.0
        %1875 = vmatpush1.msra.mxu0 0.0
        %1876 = vmatprep.subr.mxu0 0.0
        %1877 = vmatpush1.msra.mxu0 0.0
        %1878 = vmatprep.subr.mxu0 0.0
        %1879 = vmatpush1.msra.mxu0 0.0
        %1880 = vmatprep.subr.mxu0 0.0
        %1881 = vmatpush1.msra.mxu0 0.0
        %1882 = vmatprep.subr.mxu0 0.0
        %1883 = vmatpush1.msra.mxu0 0.0
        %1884 = vmatprep.subr.mxu0 0.0
        %1885 = vmatpush1.msra.mxu0 0.0
        %1886 = vmatprep.subr.mxu0 0.0
        %1887 = vmatpush1.msra.mxu0 0.0
        %1888 = vmatprep.subr.mxu0 0.0
        %1889 = vmatpush1.msra.mxu0 0.0
        %1890 = vmatprep.subr.mxu0 0.0
        %1891 = vmatpush1.msra.mxu0 0.0
        %1892 = vmatprep.subr.mxu0 0.0
        %1893 = vmatpush1.msra.mxu0 0.0
        %1894 = vmatprep.subr.mxu0 %v583
        %1895 = vmatpush1.msra.mxu0 %v580
        %1896 = vmatprep.subr.mxu0 0.0
        %1897 = vmatpush2.msra.mxu0 0.0
        %1898 = vmatprep.subr.mxu0 0.0
        %1899 = vmatpush2.msra.mxu0 0.0
        %1900 = vmatprep.subr.mxu0 0.0
        %1901 = vmatpush2.msra.mxu0 0.0
        %1902 = vmatprep.subr.mxu0 0.0
        %1903 = vmatpush2.msra.mxu0 0.0
        %1904 = vmatprep.subr.mxu0 0.0
        %1905 = vmatpush2.msra.mxu0 0.0
        %1906 = vmatprep.subr.mxu0 0.0
        %1907 = vmatpush2.msra.mxu0 0.0
        %1908 = vmatprep.subr.mxu0 0.0
        %1909 = vmatpush2.msra.mxu0 0.0
        %1910 = vmatprep.subr.mxu0 0.0
        %1911 = vmatpush2.msra.mxu0 0.0
        %1912 = vmatprep.subr.mxu0 0.0
        %1913 = vmatpush2.msra.mxu0 0.0
        %1914 = vmatprep.subr.mxu0 0.0
        %1915 = vmatpush2.msra.mxu0 0.0
        %1916 = vmatprep.subr.mxu0 0.0
        %1917 = vmatpush2.msra.mxu0 0.0
        %1918 = vmatprep.subr.mxu0 0.0
        %1919 = vmatpush2.msra.mxu0 0.0
        %1920 = vmatprep.subr.mxu0 0.0
        %1921 = vmatpush2.msra.mxu0 0.0
        %1922 = vmatprep.subr.mxu0 0.0
        %1923 = vmatpush2.msra.mxu0 0.0
        %1924 = vmatprep.subr.mxu0 0.0
        %1925 = vmatpush2.msra.mxu0 0.0
        %1926 = vmatprep.subr.mxu0 0.0
        %1927 = vmatpush2.msra.mxu0 0.0
        %1928 = vmatprep.mubr.f32.mxu0 0.0
        %1929 = vmatmul.mubr.f32.gmra.mxu0 %v1862
        %v1930 = vpop.f32.mrf.mxu0
        %v1931 = vadd.f32 0.0, %v1930
        %v1932 = vpop.f32.mrf.mxu0
        %v1933 = vadd.f32 0.0, %v1932
        %1934 = vdwg.mxu0
        %s1935 = scalar_lea.vmem [#allocation7], 3072
        %v1936 = vld [vmem:[%s1935] sm:$0xff]
        %v1937 = vld [vmem:[%s1935 + $0x8] sm:$0xff]
        %v1938 = vld [vmem:[%s1935 + $0x10] sm:$0xff]
        %v1939 = vld [vmem:[%s1935 + $0x18] sm:$0xff]
        %v1940 = vld [vmem:[%s1935 + $0x20] sm:$0xff]
        %v1941 = vld [vmem:[%s1935 + $0x28] sm:$0xff]
        %v1942 = vld [vmem:[%s1935 + $0x30] sm:$0xff]
        %v1943 = vld [vmem:[%s1935 + $0x38] sm:$0xff]
        %v1944 = vld [vmem:[%s1935 + $0x40] sm:$0xff]
        %v1945 = vld [vmem:[%s1935 + $0x48] sm:$0xff]
        %v1946 = vld [vmem:[%s1935 + $0x50] sm:$0xff]
        %v1947 = vld [vmem:[%s1935 + $0x58] sm:$0xff]
        %v1948 = vld [vmem:[%s1935 + $0x60] sm:$0xff]
        %v1949 = vld [vmem:[%s1935 + $0x68] sm:$0xff]
        %v1950 = vld [vmem:[%s1935 + $0x70] sm:$0xff]
        %v1951 = vld [vmem:[%s1935 + $0x78] sm:$0xff]
        %v1952 = vld [vmem:[%s1935 + $0x80] sm:$0xff]
        %v1953 = vld [vmem:[%s1935 + $0x88] sm:$0xff]
        %v1954 = vld [vmem:[%s1935 + $0x90] sm:$0xff]
        %v1955 = vld [vmem:[%s1935 + $0x98] sm:$0xff]
        %v1956 = vld [vmem:[%s1935 + $0xa0] sm:$0xff]
        %v1957 = vld [vmem:[%s1935 + $0xa8] sm:$0xff]
        %v1958 = vld [vmem:[%s1935 + $0xb0] sm:$0xff]
        %v1959 = vld [vmem:[%s1935 + $0xb8] sm:$0xff]
        %v1960 = vld [vmem:[%s1935 + $0xc0] sm:$0xff]
        %v1961 = vld [vmem:[%s1935 + $0xc8] sm:$0xff]
        %v1962 = vld [vmem:[%s1935 + $0xd0] sm:$0xff]
        %v1963 = vld [vmem:[%s1935 + $0xd8] sm:$0xff]
        %v1964 = vld [vmem:[%s1935 + $0xe0] sm:$0xff]
        %v1965 = vld [vmem:[%s1935 + $0xe8] sm:$0xff]
        %v1966 = vld [vmem:[%s1935 + $0xf0] sm:$0xff]
        %v1967 = vld [vmem:[%s1935 + $0xf8] sm:$0xff]
        %v1968 = vld [vmem:[%s1935 + $0x100] sm:$0xff]
        %v1969 = vld [vmem:[%s1935 + $0x108] sm:$0xff]
        %v1970 = vld [vmem:[%s1935 + $0x110] sm:$0xff]
        %v1971 = vld [vmem:[%s1935 + $0x118] sm:$0xff]
        %v1972 = vld [vmem:[%s1935 + $0x120] sm:$0xff]
        %v1973 = vld [vmem:[%s1935 + $0x128] sm:$0xff]
        %v1974 = vld [vmem:[%s1935 + $0x130] sm:$0xff]
        %v1975 = vld [vmem:[%s1935 + $0x138] sm:$0xff]
        %v1976 = vld [vmem:[%s1935 + $0x140] sm:$0xff]
        %v1977 = vld [vmem:[%s1935 + $0x148] sm:$0xff]
        %v1978 = vld [vmem:[%s1935 + $0x150] sm:$0xff]
        %v1979 = vld [vmem:[%s1935 + $0x158] sm:$0xff]
        %v1980 = vld [vmem:[%s1935 + $0x160] sm:$0xff]
        %v1981 = vld [vmem:[%s1935 + $0x168] sm:$0xff]
        %v1982 = vld [vmem:[%s1935 + $0x170] sm:$0xff]
        %v1983 = vld [vmem:[%s1935 + $0x178] sm:$0xff]
        %v1984 = vld [vmem:[%s1935 + $0x180] sm:$0xff]
        %v1985 = vld [vmem:[%s1935 + $0x188] sm:$0xff]
        %v1986 = vld [vmem:[%s1935 + $0x190] sm:$0xff]
        %v1987 = vld [vmem:[%s1935 + $0x198] sm:$0xff]
        %v1988 = vld [vmem:[%s1935 + $0x1a0] sm:$0xff]
        %v1989 = vld [vmem:[%s1935 + $0x1a8] sm:$0xff]
        %v1990 = vld [vmem:[%s1935 + $0x1b0] sm:$0xff]
        %v1991 = vld [vmem:[%s1935 + $0x1b8] sm:$0xff]
        %v1992 = vld [vmem:[%s1935 + $0x1c0] sm:$0xff]
        %v1993 = vld [vmem:[%s1935 + $0x1c8] sm:$0xff]
        %v1994 = vld [vmem:[%s1935 + $0x1d0] sm:$0xff]
        %v1995 = vld [vmem:[%s1935 + $0x1d8] sm:$0xff]
        %v1996 = vld [vmem:[%s1935 + $0x1e0] sm:$0xff]
        %v1997 = vld [vmem:[%s1935 + $0x1e8] sm:$0xff]
        %v1998 = vld [vmem:[%s1935 + $0x1f0] sm:$0xff]
        %v1999 = vld [vmem:[%s1935 + $0x1f8] sm:$0xff]
        %2000 = vmatprep.subr.mxu0 %v1967
        %2001 = vmatpush1.msra.mxu0 %v1966
        %2002 = vmatprep.subr.mxu0 %v1965
        %2003 = vmatpush1.msra.mxu0 %v1964
        %2004 = vmatprep.subr.mxu0 %v1963
        %2005 = vmatpush1.msra.mxu0 %v1962
        %2006 = vmatprep.subr.mxu0 %v1961
        %2007 = vmatpush1.msra.mxu0 %v1960
        %2008 = vmatprep.subr.mxu0 %v1959
        %2009 = vmatpush1.msra.mxu0 %v1958
        %2010 = vmatprep.subr.mxu0 %v1957
        %2011 = vmatpush1.msra.mxu0 %v1956
        %2012 = vmatprep.subr.mxu0 %v1955
        %2013 = vmatpush1.msra.mxu0 %v1954
        %2014 = vmatprep.subr.mxu0 %v1953
        %2015 = vmatpush1.msra.mxu0 %v1952
        %2016 = vmatprep.subr.mxu0 %v1951
        %2017 = vmatpush1.msra.mxu0 %v1950
        %2018 = vmatprep.subr.mxu0 %v1949
        %2019 = vmatpush1.msra.mxu0 %v1948
        %2020 = vmatprep.subr.mxu0 %v1947
        %2021 = vmatpush1.msra.mxu0 %v1946
        %2022 = vmatprep.subr.mxu0 %v1945
        %2023 = vmatpush1.msra.mxu0 %v1944
        %2024 = vmatprep.subr.mxu0 %v1943
        %2025 = vmatpush1.msra.mxu0 %v1942
        %2026 = vmatprep.subr.mxu0 %v1941
        %2027 = vmatpush1.msra.mxu0 %v1940
        %2028 = vmatprep.subr.mxu0 %v1939
        %2029 = vmatpush1.msra.mxu0 %v1938
        %2030 = vmatprep.subr.mxu0 %v1937
        %2031 = vmatpush1.msra.mxu0 %v1936
        %2032 = vmatprep.subr.mxu0 %v1999
        %2033 = vmatpush2.msra.mxu0 %v1998
        %2034 = vmatprep.subr.mxu0 %v1997
        %2035 = vmatpush2.msra.mxu0 %v1996
        %2036 = vmatprep.subr.mxu0 %v1995
        %2037 = vmatpush2.msra.mxu0 %v1994
        %2038 = vmatprep.subr.mxu0 %v1993
        %2039 = vmatpush2.msra.mxu0 %v1992
        %2040 = vmatprep.subr.mxu0 %v1991
        %2041 = vmatpush2.msra.mxu0 %v1990
        %2042 = vmatprep.subr.mxu0 %v1989
        %2043 = vmatpush2.msra.mxu0 %v1988
        %2044 = vmatprep.subr.mxu0 %v1987
        %2045 = vmatpush2.msra.mxu0 %v1986
        %2046 = vmatprep.subr.mxu0 %v1985
        %2047 = vmatpush2.msra.mxu0 %v1984
        %2048 = vmatprep.subr.mxu0 %v1983
        %2049 = vmatpush2.msra.mxu0 %v1982
        %2050 = vmatprep.subr.mxu0 %v1981
        %2051 = vmatpush2.msra.mxu0 %v1980
        %2052 = vmatprep.subr.mxu0 %v1979
        %2053 = vmatpush2.msra.mxu0 %v1978
        %2054 = vmatprep.subr.mxu0 %v1977
        %2055 = vmatpush2.msra.mxu0 %v1976
        %2056 = vmatprep.subr.mxu0 %v1975
        %2057 = vmatpush2.msra.mxu0 %v1974
        %2058 = vmatprep.subr.mxu0 %v1973
        %2059 = vmatpush2.msra.mxu0 %v1972
        %2060 = vmatprep.subr.mxu0 %v1971
        %2061 = vmatpush2.msra.mxu0 %v1970
        %2062 = vmatprep.subr.mxu0 %v1969
        %2063 = vmatpush2.msra.mxu0 %v1968
        %2064 = vmatprep.mubr.f32.mxu0 %v1933
        %2065 = vmatmul.mubr.f32.gmra.mxu0 %v1931
        %v2066 = vpop.f32.mrf.mxu0
        %v2067 = vadd.f32 0.0, %v2066
        %v2068 = vpop.f32.mrf.mxu0
        %v2069 = vadd.f32 0.0, %v2068
        %2070 = vdwg.mxu0
        %v2071 = vadd.f32 %v1857, %v2067
        %v2072 = vadd.f32 %v1858, %v2069
        %s2073 = scalar_lea.vmem %s3, 56
        %v2074 = vld [vmem:[%s2073] sm:$0xff]
        %v2076 = vsel %vm574, %v2074, 0
        %2078 = vmatprep.subr.mxu0 0.0
        %2079 = vmatpush1.msra.mxu0 0.0
        %2080 = vmatprep.subr.mxu0 0.0
        %2081 = vmatpush1.msra.mxu0 0.0
        %2082 = vmatprep.subr.mxu0 0.0
        %2083 = vmatpush1.msra.mxu0 0.0
        %2084 = vmatprep.subr.mxu0 0.0
        %2085 = vmatpush1.msra.mxu0 0.0
        %2086 = vmatprep.subr.mxu0 0.0
        %2087 = vmatpush1.msra.mxu0 0.0
        %2088 = vmatprep.subr.mxu0 0.0
        %2089 = vmatpush1.msra.mxu0 0.0
        %2090 = vmatprep.subr.mxu0 0.0
        %2091 = vmatpush1.msra.mxu0 0.0
        %2092 = vmatprep.subr.mxu0 0.0
        %2093 = vmatpush1.msra.mxu0 0.0
        %2094 = vmatprep.subr.mxu0 0.0
        %2095 = vmatpush1.msra.mxu0 0.0
        %2096 = vmatprep.subr.mxu0 0.0
        %2097 = vmatpush1.msra.mxu0 0.0
        %2098 = vmatprep.subr.mxu0 0.0
        %2099 = vmatpush1.msra.mxu0 0.0
        %2100 = vmatprep.subr.mxu0 0.0
        %2101 = vmatpush1.msra.mxu0 0.0
        %2102 = vmatprep.subr.mxu0 0.0
        %2103 = vmatpush1.msra.mxu0 0.0
        %2104 = vmatprep.subr.mxu0 0.0
        %2105 = vmatpush1.msra.mxu0 0.0
        %2106 = vmatprep.subr.mxu0 0.0
        %2107 = vmatpush1.msra.mxu0 0.0
        %2108 = vmatprep.subr.mxu0 %v583
        %2109 = vmatpush1.msra.mxu0 %v580
        %2110 = vmatprep.subr.mxu0 0.0
        %2111 = vmatpush2.msra.mxu0 0.0
        %2112 = vmatprep.subr.mxu0 0.0
        %2113 = vmatpush2.msra.mxu0 0.0
        %2114 = vmatprep.subr.mxu0 0.0
        %2115 = vmatpush2.msra.mxu0 0.0
        %2116 = vmatprep.subr.mxu0 0.0
        %2117 = vmatpush2.msra.mxu0 0.0
        %2118 = vmatprep.subr.mxu0 0.0
        %2119 = vmatpush2.msra.mxu0 0.0
        %2120 = vmatprep.subr.mxu0 0.0
        %2121 = vmatpush2.msra.mxu0 0.0
        %2122 = vmatprep.subr.mxu0 0.0
        %2123 = vmatpush2.msra.mxu0 0.0
        %2124 = vmatprep.subr.mxu0 0.0
        %2125 = vmatpush2.msra.mxu0 0.0
        %2126 = vmatprep.subr.mxu0 0.0
        %2127 = vmatpush2.msra.mxu0 0.0
        %2128 = vmatprep.subr.mxu0 0.0
        %2129 = vmatpush2.msra.mxu0 0.0
        %2130 = vmatprep.subr.mxu0 0.0
        %2131 = vmatpush2.msra.mxu0 0.0
        %2132 = vmatprep.subr.mxu0 0.0
        %2133 = vmatpush2.msra.mxu0 0.0
        %2134 = vmatprep.subr.mxu0 0.0
        %2135 = vmatpush2.msra.mxu0 0.0
        %2136 = vmatprep.subr.mxu0 0.0
        %2137 = vmatpush2.msra.mxu0 0.0
        %2138 = vmatprep.subr.mxu0 0.0
        %2139 = vmatpush2.msra.mxu0 0.0
        %2140 = vmatprep.subr.mxu0 0.0
        %2141 = vmatpush2.msra.mxu0 0.0
        %2142 = vmatprep.mubr.f32.mxu0 0.0
        %2143 = vmatmul.mubr.f32.gmra.mxu0 %v2076
        %v2144 = vpop.f32.mrf.mxu0
        %v2145 = vadd.f32 0.0, %v2144
        %v2146 = vpop.f32.mrf.mxu0
        %v2147 = vadd.f32 0.0, %v2146
        %2148 = vdwg.mxu0
        %s2149 = scalar_lea.vmem [#allocation7], 3584
        %v2150 = vld [vmem:[%s2149] sm:$0xff]
        %v2151 = vld [vmem:[%s2149 + $0x8] sm:$0xff]
        %v2152 = vld [vmem:[%s2149 + $0x10] sm:$0xff]
        %v2153 = vld [vmem:[%s2149 + $0x18] sm:$0xff]
        %v2154 = vld [vmem:[%s2149 + $0x20] sm:$0xff]
        %v2155 = vld [vmem:[%s2149 + $0x28] sm:$0xff]
        %v2156 = vld [vmem:[%s2149 + $0x30] sm:$0xff]
        %v2157 = vld [vmem:[%s2149 + $0x38] sm:$0xff]
        %v2158 = vld [vmem:[%s2149 + $0x40] sm:$0xff]
        %v2159 = vld [vmem:[%s2149 + $0x48] sm:$0xff]
        %v2160 = vld [vmem:[%s2149 + $0x50] sm:$0xff]
        %v2161 = vld [vmem:[%s2149 + $0x58] sm:$0xff]
        %v2162 = vld [vmem:[%s2149 + $0x60] sm:$0xff]
        %v2163 = vld [vmem:[%s2149 + $0x68] sm:$0xff]
        %v2164 = vld [vmem:[%s2149 + $0x70] sm:$0xff]
        %v2165 = vld [vmem:[%s2149 + $0x78] sm:$0xff]
        %v2166 = vld [vmem:[%s2149 + $0x80] sm:$0xff]
        %v2167 = vld [vmem:[%s2149 + $0x88] sm:$0xff]
        %v2168 = vld [vmem:[%s2149 + $0x90] sm:$0xff]
        %v2169 = vld [vmem:[%s2149 + $0x98] sm:$0xff]
        %v2170 = vld [vmem:[%s2149 + $0xa0] sm:$0xff]
        %v2171 = vld [vmem:[%s2149 + $0xa8] sm:$0xff]
        %v2172 = vld [vmem:[%s2149 + $0xb0] sm:$0xff]
        %v2173 = vld [vmem:[%s2149 + $0xb8] sm:$0xff]
        %v2174 = vld [vmem:[%s2149 + $0xc0] sm:$0xff]
        %v2175 = vld [vmem:[%s2149 + $0xc8] sm:$0xff]
        %v2176 = vld [vmem:[%s2149 + $0xd0] sm:$0xff]
        %v2177 = vld [vmem:[%s2149 + $0xd8] sm:$0xff]
        %v2178 = vld [vmem:[%s2149 + $0xe0] sm:$0xff]
        %v2179 = vld [vmem:[%s2149 + $0xe8] sm:$0xff]
        %v2180 = vld [vmem:[%s2149 + $0xf0] sm:$0xff]
        %v2181 = vld [vmem:[%s2149 + $0xf8] sm:$0xff]
        %v2182 = vld [vmem:[%s2149 + $0x100] sm:$0xff]
        %v2183 = vld [vmem:[%s2149 + $0x108] sm:$0xff]
        %v2184 = vld [vmem:[%s2149 + $0x110] sm:$0xff]
        %v2185 = vld [vmem:[%s2149 + $0x118] sm:$0xff]
        %v2186 = vld [vmem:[%s2149 + $0x120] sm:$0xff]
        %v2187 = vld [vmem:[%s2149 + $0x128] sm:$0xff]
        %v2188 = vld [vmem:[%s2149 + $0x130] sm:$0xff]
        %v2189 = vld [vmem:[%s2149 + $0x138] sm:$0xff]
        %v2190 = vld [vmem:[%s2149 + $0x140] sm:$0xff]
        %v2191 = vld [vmem:[%s2149 + $0x148] sm:$0xff]
        %v2192 = vld [vmem:[%s2149 + $0x150] sm:$0xff]
        %v2193 = vld [vmem:[%s2149 + $0x158] sm:$0xff]
        %v2194 = vld [vmem:[%s2149 + $0x160] sm:$0xff]
        %v2195 = vld [vmem:[%s2149 + $0x168] sm:$0xff]
        %v2196 = vld [vmem:[%s2149 + $0x170] sm:$0xff]
        %v2197 = vld [vmem:[%s2149 + $0x178] sm:$0xff]
        %v2198 = vld [vmem:[%s2149 + $0x180] sm:$0xff]
        %v2199 = vld [vmem:[%s2149 + $0x188] sm:$0xff]
        %v2200 = vld [vmem:[%s2149 + $0x190] sm:$0xff]
        %v2201 = vld [vmem:[%s2149 + $0x198] sm:$0xff]
        %v2202 = vld [vmem:[%s2149 + $0x1a0] sm:$0xff]
        %v2203 = vld [vmem:[%s2149 + $0x1a8] sm:$0xff]
        %v2204 = vld [vmem:[%s2149 + $0x1b0] sm:$0xff]
        %v2205 = vld [vmem:[%s2149 + $0x1b8] sm:$0xff]
        %v2206 = vld [vmem:[%s2149 + $0x1c0] sm:$0xff]
        %v2207 = vld [vmem:[%s2149 + $0x1c8] sm:$0xff]
        %v2208 = vld [vmem:[%s2149 + $0x1d0] sm:$0xff]
        %v2209 = vld [vmem:[%s2149 + $0x1d8] sm:$0xff]
        %v2210 = vld [vmem:[%s2149 + $0x1e0] sm:$0xff]
        %v2211 = vld [vmem:[%s2149 + $0x1e8] sm:$0xff]
        %v2212 = vld [vmem:[%s2149 + $0x1f0] sm:$0xff]
        %v2213 = vld [vmem:[%s2149 + $0x1f8] sm:$0xff]
        %2214 = vmatprep.subr.mxu0 %v2181
        %2215 = vmatpush1.msra.mxu0 %v2180
        %2216 = vmatprep.subr.mxu0 %v2179
        %2217 = vmatpush1.msra.mxu0 %v2178
        %2218 = vmatprep.subr.mxu0 %v2177
        %2219 = vmatpush1.msra.mxu0 %v2176
        %2220 = vmatprep.subr.mxu0 %v2175
        %2221 = vmatpush1.msra.mxu0 %v2174
        %2222 = vmatprep.subr.mxu0 %v2173
        %2223 = vmatpush1.msra.mxu0 %v2172
        %2224 = vmatprep.subr.mxu0 %v2171
        %2225 = vmatpush1.msra.mxu0 %v2170
        %2226 = vmatprep.subr.mxu0 %v2169
        %2227 = vmatpush1.msra.mxu0 %v2168
        %2228 = vmatprep.subr.mxu0 %v2167
        %2229 = vmatpush1.msra.mxu0 %v2166
        %2230 = vmatprep.subr.mxu0 %v2165
        %2231 = vmatpush1.msra.mxu0 %v2164
        %2232 = vmatprep.subr.mxu0 %v2163
        %2233 = vmatpush1.msra.mxu0 %v2162
        %2234 = vmatprep.subr.mxu0 %v2161
        %2235 = vmatpush1.msra.mxu0 %v2160
        %2236 = vmatprep.subr.mxu0 %v2159
        %2237 = vmatpush1.msra.mxu0 %v2158
        %2238 = vmatprep.subr.mxu0 %v2157
        %2239 = vmatpush1.msra.mxu0 %v2156
        %2240 = vmatprep.subr.mxu0 %v2155
        %2241 = vmatpush1.msra.mxu0 %v2154
        %2242 = vmatprep.subr.mxu0 %v2153
        %2243 = vmatpush1.msra.mxu0 %v2152
        %2244 = vmatprep.subr.mxu0 %v2151
        %2245 = vmatpush1.msra.mxu0 %v2150
        %2246 = vmatprep.subr.mxu0 %v2213
        %2247 = vmatpush2.msra.mxu0 %v2212
        %2248 = vmatprep.subr.mxu0 %v2211
        %2249 = vmatpush2.msra.mxu0 %v2210
        %2250 = vmatprep.subr.mxu0 %v2209
        %2251 = vmatpush2.msra.mxu0 %v2208
        %2252 = vmatprep.subr.mxu0 %v2207
        %2253 = vmatpush2.msra.mxu0 %v2206
        %2254 = vmatprep.subr.mxu0 %v2205
        %2255 = vmatpush2.msra.mxu0 %v2204
        %2256 = vmatprep.subr.mxu0 %v2203
        %2257 = vmatpush2.msra.mxu0 %v2202
        %2258 = vmatprep.subr.mxu0 %v2201
        %2259 = vmatpush2.msra.mxu0 %v2200
        %2260 = vmatprep.subr.mxu0 %v2199
        %2261 = vmatpush2.msra.mxu0 %v2198
        %2262 = vmatprep.subr.mxu0 %v2197
        %2263 = vmatpush2.msra.mxu0 %v2196
        %2264 = vmatprep.subr.mxu0 %v2195
        %2265 = vmatpush2.msra.mxu0 %v2194
        %2266 = vmatprep.subr.mxu0 %v2193
        %2267 = vmatpush2.msra.mxu0 %v2192
        %2268 = vmatprep.subr.mxu0 %v2191
        %2269 = vmatpush2.msra.mxu0 %v2190
        %2270 = vmatprep.subr.mxu0 %v2189
        %2271 = vmatpush2.msra.mxu0 %v2188
        %2272 = vmatprep.subr.mxu0 %v2187
        %2273 = vmatpush2.msra.mxu0 %v2186
        %2274 = vmatprep.subr.mxu0 %v2185
        %2275 = vmatpush2.msra.mxu0 %v2184
        %2276 = vmatprep.subr.mxu0 %v2183
        %2277 = vmatpush2.msra.mxu0 %v2182
        %2278 = vmatprep.mubr.f32.mxu0 %v2147
        %2279 = vmatmul.mubr.f32.gmra.mxu0 %v2145
        %v2280 = vpop.f32.mrf.mxu0
        %v2281 = vadd.f32 0.0, %v2280
        %v2282 = vpop.f32.mrf.mxu0
        %v2283 = vadd.f32 0.0, %v2282
        %2284 = vdwg.mxu0
        %v2285 = vadd.f32 %v2071, %v2281
        %v2286 = vadd.f32 %v2072, %v2283
        %s2287 = scalar_lea.vmem %s3, 64
        %v2288 = vld [vmem:[%s2287] sm:$0xff]
        %v2290 = vsel %vm574, %v2288, 0
        %2292 = vmatprep.subr.mxu0 0.0
        %2293 = vmatpush1.msra.mxu0 0.0
        %2294 = vmatprep.subr.mxu0 0.0
        %2295 = vmatpush1.msra.mxu0 0.0
        %2296 = vmatprep.subr.mxu0 0.0
        %2297 = vmatpush1.msra.mxu0 0.0
        %2298 = vmatprep.subr.mxu0 0.0
        %2299 = vmatpush1.msra.mxu0 0.0
        %2300 = vmatprep.subr.mxu0 0.0
        %2301 = vmatpush1.msra.mxu0 0.0
        %2302 = vmatprep.subr.mxu0 0.0
        %2303 = vmatpush1.msra.mxu0 0.0
        %2304 = vmatprep.subr.mxu0 0.0
        %2305 = vmatpush1.msra.mxu0 0.0
        %2306 = vmatprep.subr.mxu0 0.0
        %2307 = vmatpush1.msra.mxu0 0.0
        %2308 = vmatprep.subr.mxu0 0.0
        %2309 = vmatpush1.msra.mxu0 0.0
        %2310 = vmatprep.subr.mxu0 0.0
        %2311 = vmatpush1.msra.mxu0 0.0
        %2312 = vmatprep.subr.mxu0 0.0
        %2313 = vmatpush1.msra.mxu0 0.0
        %2314 = vmatprep.subr.mxu0 0.0
        %2315 = vmatpush1.msra.mxu0 0.0
        %2316 = vmatprep.subr.mxu0 0.0
        %2317 = vmatpush1.msra.mxu0 0.0
        %2318 = vmatprep.subr.mxu0 0.0
        %2319 = vmatpush1.msra.mxu0 0.0
        %2320 = vmatprep.subr.mxu0 0.0
        %2321 = vmatpush1.msra.mxu0 0.0
        %2322 = vmatprep.subr.mxu0 %v583
        %2323 = vmatpush1.msra.mxu0 %v580
        %2324 = vmatprep.subr.mxu0 0.0
        %2325 = vmatpush2.msra.mxu0 0.0
        %2326 = vmatprep.subr.mxu0 0.0
        %2327 = vmatpush2.msra.mxu0 0.0
        %2328 = vmatprep.subr.mxu0 0.0
        %2329 = vmatpush2.msra.mxu0 0.0
        %2330 = vmatprep.subr.mxu0 0.0
        %2331 = vmatpush2.msra.mxu0 0.0
        %2332 = vmatprep.subr.mxu0 0.0
        %2333 = vmatpush2.msra.mxu0 0.0
        %2334 = vmatprep.subr.mxu0 0.0
        %2335 = vmatpush2.msra.mxu0 0.0
        %2336 = vmatprep.subr.mxu0 0.0
        %2337 = vmatpush2.msra.mxu0 0.0
        %2338 = vmatprep.subr.mxu0 0.0
        %2339 = vmatpush2.msra.mxu0 0.0
        %2340 = vmatprep.subr.mxu0 0.0
        %2341 = vmatpush2.msra.mxu0 0.0
        %2342 = vmatprep.subr.mxu0 0.0
        %2343 = vmatpush2.msra.mxu0 0.0
        %2344 = vmatprep.subr.mxu0 0.0
        %2345 = vmatpush2.msra.mxu0 0.0
        %2346 = vmatprep.subr.mxu0 0.0
        %2347 = vmatpush2.msra.mxu0 0.0
        %2348 = vmatprep.subr.mxu0 0.0
        %2349 = vmatpush2.msra.mxu0 0.0
        %2350 = vmatprep.subr.mxu0 0.0
        %2351 = vmatpush2.msra.mxu0 0.0
        %2352 = vmatprep.subr.mxu0 0.0
        %2353 = vmatpush2.msra.mxu0 0.0
        %2354 = vmatprep.subr.mxu0 0.0
        %2355 = vmatpush2.msra.mxu0 0.0
        %2356 = vmatprep.mubr.f32.mxu0 0.0
        %2357 = vmatmul.mubr.f32.gmra.mxu0 %v2290
        %v2358 = vpop.f32.mrf.mxu0
        %v2359 = vadd.f32 0.0, %v2358
        %v2360 = vpop.f32.mrf.mxu0
        %v2361 = vadd.f32 0.0, %v2360
        %2362 = vdwg.mxu0
        %s2363 = scalar_lea.vmem [#allocation7], 4096
        %v2364 = vld [vmem:[%s2363] sm:$0xff]
        %v2365 = vld [vmem:[%s2363 + $0x8] sm:$0xff]
        %v2366 = vld [vmem:[%s2363 + $0x10] sm:$0xff]
        %v2367 = vld [vmem:[%s2363 + $0x18] sm:$0xff]
        %v2368 = vld [vmem:[%s2363 + $0x20] sm:$0xff]
        %v2369 = vld [vmem:[%s2363 + $0x28] sm:$0xff]
        %v2370 = vld [vmem:[%s2363 + $0x30] sm:$0xff]
        %v2371 = vld [vmem:[%s2363 + $0x38] sm:$0xff]
        %v2372 = vld [vmem:[%s2363 + $0x40] sm:$0xff]
        %v2373 = vld [vmem:[%s2363 + $0x48] sm:$0xff]
        %v2374 = vld [vmem:[%s2363 + $0x50] sm:$0xff]
        %v2375 = vld [vmem:[%s2363 + $0x58] sm:$0xff]
        %v2376 = vld [vmem:[%s2363 + $0x60] sm:$0xff]
        %v2377 = vld [vmem:[%s2363 + $0x68] sm:$0xff]
        %v2378 = vld [vmem:[%s2363 + $0x70] sm:$0xff]
        %v2379 = vld [vmem:[%s2363 + $0x78] sm:$0xff]
        %v2380 = vld [vmem:[%s2363 + $0x80] sm:$0xff]
        %v2381 = vld [vmem:[%s2363 + $0x88] sm:$0xff]
        %v2382 = vld [vmem:[%s2363 + $0x90] sm:$0xff]
        %v2383 = vld [vmem:[%s2363 + $0x98] sm:$0xff]
        %v2384 = vld [vmem:[%s2363 + $0xa0] sm:$0xff]
        %v2385 = vld [vmem:[%s2363 + $0xa8] sm:$0xff]
        %v2386 = vld [vmem:[%s2363 + $0xb0] sm:$0xff]
        %v2387 = vld [vmem:[%s2363 + $0xb8] sm:$0xff]
        %v2388 = vld [vmem:[%s2363 + $0xc0] sm:$0xff]
        %v2389 = vld [vmem:[%s2363 + $0xc8] sm:$0xff]
        %v2390 = vld [vmem:[%s2363 + $0xd0] sm:$0xff]
        %v2391 = vld [vmem:[%s2363 + $0xd8] sm:$0xff]
        %v2392 = vld [vmem:[%s2363 + $0xe0] sm:$0xff]
        %v2393 = vld [vmem:[%s2363 + $0xe8] sm:$0xff]
        %v2394 = vld [vmem:[%s2363 + $0xf0] sm:$0xff]
        %v2395 = vld [vmem:[%s2363 + $0xf8] sm:$0xff]
        %v2396 = vld [vmem:[%s2363 + $0x100] sm:$0xff]
        %v2397 = vld [vmem:[%s2363 + $0x108] sm:$0xff]
        %v2398 = vld [vmem:[%s2363 + $0x110] sm:$0xff]
        %v2399 = vld [vmem:[%s2363 + $0x118] sm:$0xff]
        %v2400 = vld [vmem:[%s2363 + $0x120] sm:$0xff]
        %v2401 = vld [vmem:[%s2363 + $0x128] sm:$0xff]
        %v2402 = vld [vmem:[%s2363 + $0x130] sm:$0xff]
        %v2403 = vld [vmem:[%s2363 + $0x138] sm:$0xff]
        %v2404 = vld [vmem:[%s2363 + $0x140] sm:$0xff]
        %v2405 = vld [vmem:[%s2363 + $0x148] sm:$0xff]
        %v2406 = vld [vmem:[%s2363 + $0x150] sm:$0xff]
        %v2407 = vld [vmem:[%s2363 + $0x158] sm:$0xff]
        %v2408 = vld [vmem:[%s2363 + $0x160] sm:$0xff]
        %v2409 = vld [vmem:[%s2363 + $0x168] sm:$0xff]
        %v2410 = vld [vmem:[%s2363 + $0x170] sm:$0xff]
        %v2411 = vld [vmem:[%s2363 + $0x178] sm:$0xff]
        %v2412 = vld [vmem:[%s2363 + $0x180] sm:$0xff]
        %v2413 = vld [vmem:[%s2363 + $0x188] sm:$0xff]
        %v2414 = vld [vmem:[%s2363 + $0x190] sm:$0xff]
        %v2415 = vld [vmem:[%s2363 + $0x198] sm:$0xff]
        %v2416 = vld [vmem:[%s2363 + $0x1a0] sm:$0xff]
        %v2417 = vld [vmem:[%s2363 + $0x1a8] sm:$0xff]
        %v2418 = vld [vmem:[%s2363 + $0x1b0] sm:$0xff]
        %v2419 = vld [vmem:[%s2363 + $0x1b8] sm:$0xff]
        %v2420 = vld [vmem:[%s2363 + $0x1c0] sm:$0xff]
        %v2421 = vld [vmem:[%s2363 + $0x1c8] sm:$0xff]
        %v2422 = vld [vmem:[%s2363 + $0x1d0] sm:$0xff]
        %v2423 = vld [vmem:[%s2363 + $0x1d8] sm:$0xff]
        %v2424 = vld [vmem:[%s2363 + $0x1e0] sm:$0xff]
        %v2425 = vld [vmem:[%s2363 + $0x1e8] sm:$0xff]
        %v2426 = vld [vmem:[%s2363 + $0x1f0] sm:$0xff]
        %v2427 = vld [vmem:[%s2363 + $0x1f8] sm:$0xff]
        %2428 = vmatprep.subr.mxu0 %v2395
        %2429 = vmatpush1.msra.mxu0 %v2394
        %2430 = vmatprep.subr.mxu0 %v2393
        %2431 = vmatpush1.msra.mxu0 %v2392
        %2432 = vmatprep.subr.mxu0 %v2391
        %2433 = vmatpush1.msra.mxu0 %v2390
        %2434 = vmatprep.subr.mxu0 %v2389
        %2435 = vmatpush1.msra.mxu0 %v2388
        %2436 = vmatprep.subr.mxu0 %v2387
        %2437 = vmatpush1.msra.mxu0 %v2386
        %2438 = vmatprep.subr.mxu0 %v2385
        %2439 = vmatpush1.msra.mxu0 %v2384
        %2440 = vmatprep.subr.mxu0 %v2383
        %2441 = vmatpush1.msra.mxu0 %v2382
        %2442 = vmatprep.subr.mxu0 %v2381
        %2443 = vmatpush1.msra.mxu0 %v2380
        %2444 = vmatprep.subr.mxu0 %v2379
        %2445 = vmatpush1.msra.mxu0 %v2378
        %2446 = vmatprep.subr.mxu0 %v2377
        %2447 = vmatpush1.msra.mxu0 %v2376
        %2448 = vmatprep.subr.mxu0 %v2375
        %2449 = vmatpush1.msra.mxu0 %v2374
        %2450 = vmatprep.subr.mxu0 %v2373
        %2451 = vmatpush1.msra.mxu0 %v2372
        %2452 = vmatprep.subr.mxu0 %v2371
        %2453 = vmatpush1.msra.mxu0 %v2370
        %2454 = vmatprep.subr.mxu0 %v2369
        %2455 = vmatpush1.msra.mxu0 %v2368
        %2456 = vmatprep.subr.mxu0 %v2367
        %2457 = vmatpush1.msra.mxu0 %v2366
        %2458 = vmatprep.subr.mxu0 %v2365
        %2459 = vmatpush1.msra.mxu0 %v2364
        %2460 = vmatprep.subr.mxu0 %v2427
        %2461 = vmatpush2.msra.mxu0 %v2426
        %2462 = vmatprep.subr.mxu0 %v2425
        %2463 = vmatpush2.msra.mxu0 %v2424
        %2464 = vmatprep.subr.mxu0 %v2423
        %2465 = vmatpush2.msra.mxu0 %v2422
        %2466 = vmatprep.subr.mxu0 %v2421
        %2467 = vmatpush2.msra.mxu0 %v2420
        %2468 = vmatprep.subr.mxu0 %v2419
        %2469 = vmatpush2.msra.mxu0 %v2418
        %2470 = vmatprep.subr.mxu0 %v2417
        %2471 = vmatpush2.msra.mxu0 %v2416
        %2472 = vmatprep.subr.mxu0 %v2415
        %2473 = vmatpush2.msra.mxu0 %v2414
        %2474 = vmatprep.subr.mxu0 %v2413
        %2475 = vmatpush2.msra.mxu0 %v2412
        %2476 = vmatprep.subr.mxu0 %v2411
        %2477 = vmatpush2.msra.mxu0 %v2410
        %2478 = vmatprep.subr.mxu0 %v2409
        %2479 = vmatpush2.msra.mxu0 %v2408
        %2480 = vmatprep.subr.mxu0 %v2407
        %2481 = vmatpush2.msra.mxu0 %v2406
        %2482 = vmatprep.subr.mxu0 %v2405
        %2483 = vmatpush2.msra.mxu0 %v2404
        %2484 = vmatprep.subr.mxu0 %v2403
        %2485 = vmatpush2.msra.mxu0 %v2402
        %2486 = vmatprep.subr.mxu0 %v2401
        %2487 = vmatpush2.msra.mxu0 %v2400
        %2488 = vmatprep.subr.mxu0 %v2399
        %2489 = vmatpush2.msra.mxu0 %v2398
        %2490 = vmatprep.subr.mxu0 %v2397
        %2491 = vmatpush2.msra.mxu0 %v2396
        %2492 = vmatprep.mubr.f32.mxu0 %v2361
        %2493 = vmatmul.mubr.f32.gmra.mxu0 %v2359
        %v2494 = vpop.f32.mrf.mxu0
        %v2495 = vadd.f32 0.0, %v2494
        %v2496 = vpop.f32.mrf.mxu0
        %v2497 = vadd.f32 0.0, %v2496
        %2498 = vdwg.mxu0
        %v2499 = vadd.f32 %v2285, %v2495
        %v2500 = vadd.f32 %v2286, %v2497
        %v2501 = vld [vmem:[%s4] sm:$0xff]
        %2503 = vset.pattern.permute.xlu0 0
        %2504 = vperm.xlu0 %2503, %v2501
        %v2505 = vpop.permute.xlu0 %2504
        %v2507 = vadd.f32 %v2499, %v2505
        %v2508 = vadd.f32 %v2500, %v2505
        %v2509 = vadd.f32 %v2507, %v2508
        %2510 = vadd.xlane.f32.xlu0 %v2509
        %v2511 = vpop.xlane.xlu0 %2510
        %v2512 = vrot.slane %v2511, 4
        %v2513 = vadd.f32 %v2511, %v2512
        %v2514 = vrot.slane %v2513, 2
        %v2515 = vadd.f32 %v2513, %v2514
        %v2516 = vrot.slane %v2515, 1
        %v2517 = vadd.f32 %v2515, %v2516
        %v2518 = vmul.f32 %v2517, 0.00048828125
        %v2519 = vsub.f32 %v2507, %v2518
        %v2520 = vsub.f32 %v2508, %v2518
        %v2521 = vmul.f32 %v2519, %v2519
        %v2522 = vmul.f32 %v2520, %v2520
        %v2523 = vadd.f32 %v2521, %v2522
        %2524 = vadd.xlane.f32.xlu0 %v2523
        %v2525 = vpop.xlane.xlu0 %2524
        %v2526 = vrot.slane %v2525, 4
        %v2527 = vadd.f32 %v2525, %v2526
        %v2528 = vrot.slane %v2527, 2
        %v2529 = vadd.f32 %v2527, %v2528
        %v2530 = vrot.slane %v2529, 1
        %v2531 = vadd.f32 %v2529, %v2530
        %v2532 = vmul.f32 %v2531, 0.00048828125
        %v2533 = vadd.f32 %v2532, 1e-05
        %v2534 = vrsqrt.pop %v2533
        %v2535 = vld [vmem:[#allocation8] sm:$0xff]
        %v2536 = vld [vmem:[#allocation8 + $0x8] sm:$0xff]
        %v2537 = vmul.f32 %v2535, %v2534
        %v2538 = vmul.f32 %v2536, %v2534
        %v2539 = vmul.f32 %v2519, %v2537
        %v2540 = vmul.f32 %v2520, %v2538
        %v2541 = vld [vmem:[#allocation10] sm:$0xff]
        %v2542 = vld [vmem:[#allocation10 + $0x8] sm:$0xff]
        %v2543 = vadd.f32 %v2539, %v2541
        %v2544 = vadd.f32 %v2540, %v2542
        %v2545 = vmul.f32 %v2543, 0.2
        %v2546 = vmul.f32 %v2544, 0.2
        %v2547 = vmax.f32 %v2543, %v2545
        %v2548 = vmax.f32 %v2544, %v2546
        %v2549 = vld [vmem:[%s7] sm:$0xff]
        %vm2550 = vcmask 64512
        %v2552 = vsel %vm2550, %v2549, 0
        %2554 = vmatprep.subr.mxu0 0.0
        %2555 = vmatpush1.msra.mxu0 0.0
        %2556 = vmatprep.subr.mxu0 0.0
        %2557 = vmatpush1.msra.mxu0 0.0
        %2558 = vmatprep.subr.mxu0 0.0
        %2559 = vmatpush1.msra.mxu0 0.0
        %2560 = vmatprep.subr.mxu0 0.0
        %2561 = vmatpush1.msra.mxu0 0.0
        %2562 = vmatprep.subr.mxu0 0.0
        %2563 = vmatpush1.msra.mxu0 0.0
        %2564 = vmatprep.subr.mxu0 0.0
        %2565 = vmatpush1.msra.mxu0 0.0
        %2566 = vmatprep.subr.mxu0 0.0
        %2567 = vmatpush1.msra.mxu0 0.0
        %2568 = vmatprep.subr.mxu0 0.0
        %2569 = vmatpush1.msra.mxu0 0.0
        %2570 = vmatprep.subr.mxu0 0.0
        %2571 = vmatpush1.msra.mxu0 0.0
        %2572 = vmatprep.subr.mxu0 0.0
        %2573 = vmatpush1.msra.mxu0 0.0
        %2574 = vmatprep.subr.mxu0 0.0
        %2575 = vmatpush1.msra.mxu0 0.0
        %2576 = vmatprep.subr.mxu0 0.0
        %2577 = vmatpush1.msra.mxu0 0.0
        %2578 = vmatprep.subr.mxu0 0.0
        %2579 = vmatpush1.msra.mxu0 0.0
        %2580 = vmatprep.subr.mxu0 0.0
        %2581 = vmatpush1.msra.mxu0 0.0
        %2582 = vmatprep.subr.mxu0 0.0
        %2583 = vmatpush1.msra.mxu0 0.0
        %2584 = vmatprep.subr.mxu0 %v2548
        %2585 = vmatpush1.msra.mxu0 %v2547
        %2586 = vmatprep.subr.mxu0 0.0
        %2587 = vmatpush2.msra.mxu0 0.0
        %2588 = vmatprep.subr.mxu0 0.0
        %2589 = vmatpush2.msra.mxu0 0.0
        %2590 = vmatprep.subr.mxu0 0.0
        %2591 = vmatpush2.msra.mxu0 0.0
        %2592 = vmatprep.subr.mxu0 0.0
        %2593 = vmatpush2.msra.mxu0 0.0
        %2594 = vmatprep.subr.mxu0 0.0
        %2595 = vmatpush2.msra.mxu0 0.0
        %2596 = vmatprep.subr.mxu0 0.0
        %2597 = vmatpush2.msra.mxu0 0.0
        %2598 = vmatprep.subr.mxu0 0.0
        %2599 = vmatpush2.msra.mxu0 0.0
        %2600 = vmatprep.subr.mxu0 0.0
        %2601 = vmatpush2.msra.mxu0 0.0
        %2602 = vmatprep.subr.mxu0 0.0
        %2603 = vmatpush2.msra.mxu0 0.0
        %2604 = vmatprep.subr.mxu0 0.0
        %2605 = vmatpush2.msra.mxu0 0.0
        %2606 = vmatprep.subr.mxu0 0.0
        %2607 = vmatpush2.msra.mxu0 0.0
        %2608 = vmatprep.subr.mxu0 0.0
        %2609 = vmatpush2.msra.mxu0 0.0
        %2610 = vmatprep.subr.mxu0 0.0
        %2611 = vmatpush2.msra.mxu0 0.0
        %2612 = vmatprep.subr.mxu0 0.0
        %2613 = vmatpush2.msra.mxu0 0.0
        %2614 = vmatprep.subr.mxu0 0.0
        %2615 = vmatpush2.msra.mxu0 0.0
        %2616 = vmatprep.subr.mxu0 0.0
        %2617 = vmatpush2.msra.mxu0 0.0
        %2618 = vmatprep.mubr.f32.mxu0 0.0
        %2619 = vmatmul.mubr.f32.gmra.mxu0 %v2552
        %v2620 = vpop.f32.mrf.mxu0
        %v2621 = vadd.f32 0.0, %v2620
        %v2622 = vpop.f32.mrf.mxu0
        %v2623 = vadd.f32 0.0, %v2622
        %2624 = vdwg.mxu0
        %s2625 = scalar_lea.vmem %s7, 8
        %v2626 = vld [vmem:[%s2625] sm:$0xff]
        %v2628 = vsel %vm2550, %v2626, 0
        %2630 = vmatprep.subr.mxu0 0.0
        %2631 = vmatpush1.msra.mxu0 0.0
        %2632 = vmatprep.subr.mxu0 0.0
        %2633 = vmatpush1.msra.mxu0 0.0
        %2634 = vmatprep.subr.mxu0 0.0
        %2635 = vmatpush1.msra.mxu0 0.0
        %2636 = vmatprep.subr.mxu0 0.0
        %2637 = vmatpush1.msra.mxu0 0.0
        %2638 = vmatprep.subr.mxu0 0.0
        %2639 = vmatpush1.msra.mxu0 0.0
        %2640 = vmatprep.subr.mxu0 0.0
        %2641 = vmatpush1.msra.mxu0 0.0
        %2642 = vmatprep.subr.mxu0 0.0
        %2643 = vmatpush1.msra.mxu0 0.0
        %2644 = vmatprep.subr.mxu0 0.0
        %2645 = vmatpush1.msra.mxu0 0.0
        %2646 = vmatprep.subr.mxu0 0.0
        %2647 = vmatpush1.msra.mxu0 0.0
        %2648 = vmatprep.subr.mxu0 0.0
        %2649 = vmatpush1.msra.mxu0 0.0
        %2650 = vmatprep.subr.mxu0 0.0
        %2651 = vmatpush1.msra.mxu0 0.0
        %2652 = vmatprep.subr.mxu0 0.0
        %2653 = vmatpush1.msra.mxu0 0.0
        %2654 = vmatprep.subr.mxu0 0.0
        %2655 = vmatpush1.msra.mxu0 0.0
        %2656 = vmatprep.subr.mxu0 0.0
        %2657 = vmatpush1.msra.mxu0 0.0
        %2658 = vmatprep.subr.mxu0 0.0
        %2659 = vmatpush1.msra.mxu0 0.0
        %2660 = vmatprep.subr.mxu0 %v2548
        %2661 = vmatpush1.msra.mxu0 %v2547
        %2662 = vmatprep.subr.mxu0 0.0
        %2663 = vmatpush2.msra.mxu0 0.0
        %2664 = vmatprep.subr.mxu0 0.0
        %2665 = vmatpush2.msra.mxu0 0.0
        %2666 = vmatprep.subr.mxu0 0.0
        %2667 = vmatpush2.msra.mxu0 0.0
        %2668 = vmatprep.subr.mxu0 0.0
        %2669 = vmatpush2.msra.mxu0 0.0
        %2670 = vmatprep.subr.mxu0 0.0
        %2671 = vmatpush2.msra.mxu0 0.0
        %2672 = vmatprep.subr.mxu0 0.0
        %2673 = vmatpush2.msra.mxu0 0.0
        %2674 = vmatprep.subr.mxu0 0.0
        %2675 = vmatpush2.msra.mxu0 0.0
        %2676 = vmatprep.subr.mxu0 0.0
        %2677 = vmatpush2.msra.mxu0 0.0
        %2678 = vmatprep.subr.mxu0 0.0
        %2679 = vmatpush2.msra.mxu0 0.0
        %2680 = vmatprep.subr.mxu0 0.0
        %2681 = vmatpush2.msra.mxu0 0.0
        %2682 = vmatprep.subr.mxu0 0.0
        %2683 = vmatpush2.msra.mxu0 0.0
        %2684 = vmatprep.subr.mxu0 0.0
        %2685 = vmatpush2.msra.mxu0 0.0
        %2686 = vmatprep.subr.mxu0 0.0
        %2687 = vmatpush2.msra.mxu0 0.0
        %2688 = vmatprep.subr.mxu0 0.0
        %2689 = vmatpush2.msra.mxu0 0.0
        %2690 = vmatprep.subr.mxu0 0.0
        %2691 = vmatpush2.msra.mxu0 0.0
        %2692 = vmatprep.subr.mxu0 0.0
        %2693 = vmatpush2.msra.mxu0 0.0
        %2694 = vmatprep.mubr.f32.mxu0 0.0
        %2695 = vmatmul.mubr.f32.gmra.mxu0 %v2628
        %v2696 = vpop.f32.mrf.mxu0
        %v2697 = vadd.f32 0.0, %v2696
        %v2698 = vpop.f32.mrf.mxu0
        %v2699 = vadd.f32 0.0, %v2698
        %2700 = vdwg.mxu0
        %2701 = vmatprep.subr.mxu0 %v828
        %2702 = vmatpush1.msra.mxu0 %v827
        %2703 = vmatprep.subr.mxu0 %v826
        %2704 = vmatpush1.msra.mxu0 %v825
        %2705 = vmatprep.subr.mxu0 %v824
        %2706 = vmatpush1.msra.mxu0 %v823
        %2707 = vmatprep.subr.mxu0 %v822
        %2708 = vmatpush1.msra.mxu0 %v821
        %2709 = vmatprep.subr.mxu0 %v820
        %2710 = vmatpush1.msra.mxu0 %v819
        %2711 = vmatprep.subr.mxu0 %v818
        %2712 = vmatpush1.msra.mxu0 %v817
        %2713 = vmatprep.subr.mxu0 %v816
        %2714 = vmatpush1.msra.mxu0 %v815
        %2715 = vmatprep.subr.mxu0 %v814
        %2716 = vmatpush1.msra.mxu0 %v813
        %2717 = vmatprep.subr.mxu0 %v812
        %2718 = vmatpush1.msra.mxu0 %v811
        %2719 = vmatprep.subr.mxu0 %v810
        %2720 = vmatpush1.msra.mxu0 %v809
        %2721 = vmatprep.subr.mxu0 %v808
        %2722 = vmatpush1.msra.mxu0 %v807
        %2723 = vmatprep.subr.mxu0 %v806
        %2724 = vmatpush1.msra.mxu0 %v805
        %2725 = vmatprep.subr.mxu0 %v804
        %2726 = vmatpush1.msra.mxu0 %v803
        %2727 = vmatprep.subr.mxu0 %v802
        %2728 = vmatpush1.msra.mxu0 %v801
        %2729 = vmatprep.subr.mxu0 %v800
        %2730 = vmatpush1.msra.mxu0 %v799
        %2731 = vmatprep.subr.mxu0 %v798
        %2732 = vmatpush1.msra.mxu0 %v797
        %2733 = vmatprep.subr.mxu0 %v860
        %2734 = vmatpush2.msra.mxu0 %v859
        %2735 = vmatprep.subr.mxu0 %v858
        %2736 = vmatpush2.msra.mxu0 %v857
        %2737 = vmatprep.subr.mxu0 %v856
        %2738 = vmatpush2.msra.mxu0 %v855
        %2739 = vmatprep.subr.mxu0 %v854
        %2740 = vmatpush2.msra.mxu0 %v853
        %2741 = vmatprep.subr.mxu0 %v852
        %2742 = vmatpush2.msra.mxu0 %v851
        %2743 = vmatprep.subr.mxu0 %v850
        %2744 = vmatpush2.msra.mxu0 %v849
        %2745 = vmatprep.subr.mxu0 %v848
        %2746 = vmatpush2.msra.mxu0 %v847
        %2747 = vmatprep.subr.mxu0 %v846
        %2748 = vmatpush2.msra.mxu0 %v845
        %2749 = vmatprep.subr.mxu0 %v844
        %2750 = vmatpush2.msra.mxu0 %v843
        %2751 = vmatprep.subr.mxu0 %v842
        %2752 = vmatpush2.msra.mxu0 %v841
        %2753 = vmatprep.subr.mxu0 %v840
        %2754 = vmatpush2.msra.mxu0 %v839
        %2755 = vmatprep.subr.mxu0 %v838
        %2756 = vmatpush2.msra.mxu0 %v837
        %2757 = vmatprep.subr.mxu0 %v836
        %2758 = vmatpush2.msra.mxu0 %v835
        %2759 = vmatprep.subr.mxu0 %v834
        %2760 = vmatpush2.msra.mxu0 %v833
        %2761 = vmatprep.subr.mxu0 %v832
        %2762 = vmatpush2.msra.mxu0 %v831
        %2763 = vmatprep.subr.mxu0 %v830
        %2764 = vmatpush2.msra.mxu0 %v829
        %2765 = vmatprep.mubr.f32.mxu0 %v2699
        %2766 = vmatmul.mubr.f32.gmra.mxu0 %v2697
        %v2767 = vpop.f32.mrf.mxu0
        %v2768 = vadd.f32 0.0, %v2767
        %v2769 = vpop.f32.mrf.mxu0
        %v2770 = vadd.f32 0.0, %v2769
        %2771 = vdwg.mxu0
        %2772 = vmatprep.subr.mxu0 %v687
        %2773 = vmatpush1.msra.mxu0 %v686
        %2774 = vmatprep.subr.mxu0 %v685
        %2775 = vmatpush1.msra.mxu0 %v684
        %2776 = vmatprep.subr.mxu0 %v683
        %2777 = vmatpush1.msra.mxu0 %v682
        %2778 = vmatprep.subr.mxu0 %v681
        %2779 = vmatpush1.msra.mxu0 %v680
        %2780 = vmatprep.subr.mxu0 %v679
        %2781 = vmatpush1.msra.mxu0 %v678
        %2782 = vmatprep.subr.mxu0 %v677
        %2783 = vmatpush1.msra.mxu0 %v676
        %2784 = vmatprep.subr.mxu0 %v675
        %2785 = vmatpush1.msra.mxu0 %v674
        %2786 = vmatprep.subr.mxu0 %v673
        %2787 = vmatpush1.msra.mxu0 %v672
        %2788 = vmatprep.subr.mxu0 %v671
        %2789 = vmatpush1.msra.mxu0 %v670
        %2790 = vmatprep.subr.mxu0 %v669
        %2791 = vmatpush1.msra.mxu0 %v668
        %2792 = vmatprep.subr.mxu0 %v667
        %2793 = vmatpush1.msra.mxu0 %v666
        %2794 = vmatprep.subr.mxu0 %v665
        %2795 = vmatpush1.msra.mxu0 %v664
        %2796 = vmatprep.subr.mxu0 %v663
        %2797 = vmatpush1.msra.mxu0 %v662
        %2798 = vmatprep.subr.mxu0 %v661
        %2799 = vmatpush1.msra.mxu0 %v660
        %2800 = vmatprep.subr.mxu0 %v659
        %2801 = vmatpush1.msra.mxu0 %v658
        %2802 = vmatprep.subr.mxu0 %v657
        %2803 = vmatpush1.msra.mxu0 %v656
        %2804 = vmatprep.subr.mxu0 %v719
        %2805 = vmatpush2.msra.mxu0 %v718
        %2806 = vmatprep.subr.mxu0 %v717
        %2807 = vmatpush2.msra.mxu0 %v716
        %2808 = vmatprep.subr.mxu0 %v715
        %2809 = vmatpush2.msra.mxu0 %v714
        %2810 = vmatprep.subr.mxu0 %v713
        %2811 = vmatpush2.msra.mxu0 %v712
        %2812 = vmatprep.subr.mxu0 %v711
        %2813 = vmatpush2.msra.mxu0 %v710
        %2814 = vmatprep.subr.mxu0 %v709
        %2815 = vmatpush2.msra.mxu0 %v708
        %2816 = vmatprep.subr.mxu0 %v707
        %2817 = vmatpush2.msra.mxu0 %v706
        %2818 = vmatprep.subr.mxu0 %v705
        %2819 = vmatpush2.msra.mxu0 %v704
        %2820 = vmatprep.subr.mxu0 %v703
        %2821 = vmatpush2.msra.mxu0 %v702
        %2822 = vmatprep.subr.mxu0 %v701
        %2823 = vmatpush2.msra.mxu0 %v700
        %2824 = vmatprep.subr.mxu0 %v699
        %2825 = vmatpush2.msra.mxu0 %v698
        %2826 = vmatprep.subr.mxu0 %v697
        %2827 = vmatpush2.msra.mxu0 %v696
        %2828 = vmatprep.subr.mxu0 %v695
        %2829 = vmatpush2.msra.mxu0 %v694
        %2830 = vmatprep.subr.mxu0 %v693
        %2831 = vmatpush2.msra.mxu0 %v692
        %2832 = vmatprep.subr.mxu0 %v691
        %2833 = vmatpush2.msra.mxu0 %v690
        %2834 = vmatprep.subr.mxu0 %v689
        %2835 = vmatpush2.msra.mxu0 %v688
        %2836 = vmatprep.mubr.f32.mxu0 %v2623
        %2837 = vmatmul.mubr.f32.gmra.mxu0 %v2621
        %v2838 = vpop.f32.mrf.mxu0
        %v2839 = vadd.f32 %v2768, %v2838
        %v2840 = vpop.f32.mrf.mxu0
        %v2841 = vadd.f32 %v2770, %v2840
        %2842 = vdwg.mxu0
        %s2843 = scalar_lea.vmem %s7, 16
        %v2844 = vld [vmem:[%s2843] sm:$0xff]
        %v2846 = vsel %vm2550, %v2844, 0
        %2848 = vmatprep.subr.mxu0 0.0
        %2849 = vmatpush1.msra.mxu0 0.0
        %2850 = vmatprep.subr.mxu0 0.0
        %2851 = vmatpush1.msra.mxu0 0.0
        %2852 = vmatprep.subr.mxu0 0.0
        %2853 = vmatpush1.msra.mxu0 0.0
        %2854 = vmatprep.subr.mxu0 0.0
        %2855 = vmatpush1.msra.mxu0 0.0
        %2856 = vmatprep.subr.mxu0 0.0
        %2857 = vmatpush1.msra.mxu0 0.0
        %2858 = vmatprep.subr.mxu0 0.0
        %2859 = vmatpush1.msra.mxu0 0.0
        %2860 = vmatprep.subr.mxu0 0.0
        %2861 = vmatpush1.msra.mxu0 0.0
        %2862 = vmatprep.subr.mxu0 0.0
        %2863 = vmatpush1.msra.mxu0 0.0
        %2864 = vmatprep.subr.mxu0 0.0
        %2865 = vmatpush1.msra.mxu0 0.0
        %2866 = vmatprep.subr.mxu0 0.0
        %2867 = vmatpush1.msra.mxu0 0.0
        %2868 = vmatprep.subr.mxu0 0.0
        %2869 = vmatpush1.msra.mxu0 0.0
        %2870 = vmatprep.subr.mxu0 0.0
        %2871 = vmatpush1.msra.mxu0 0.0
        %2872 = vmatprep.subr.mxu0 0.0
        %2873 = vmatpush1.msra.mxu0 0.0
        %2874 = vmatprep.subr.mxu0 0.0
        %2875 = vmatpush1.msra.mxu0 0.0
        %2876 = vmatprep.subr.mxu0 0.0
        %2877 = vmatpush1.msra.mxu0 0.0
        %2878 = vmatprep.subr.mxu0 %v2548
        %2879 = vmatpush1.msra.mxu0 %v2547
        %2880 = vmatprep.subr.mxu0 0.0
        %2881 = vmatpush2.msra.mxu0 0.0
        %2882 = vmatprep.subr.mxu0 0.0
        %2883 = vmatpush2.msra.mxu0 0.0
        %2884 = vmatprep.subr.mxu0 0.0
        %2885 = vmatpush2.msra.mxu0 0.0
        %2886 = vmatprep.subr.mxu0 0.0
        %2887 = vmatpush2.msra.mxu0 0.0
        %2888 = vmatprep.subr.mxu0 0.0
        %2889 = vmatpush2.msra.mxu0 0.0
        %2890 = vmatprep.subr.mxu0 0.0
        %2891 = vmatpush2.msra.mxu0 0.0
        %2892 = vmatprep.subr.mxu0 0.0
        %2893 = vmatpush2.msra.mxu0 0.0
        %2894 = vmatprep.subr.mxu0 0.0
        %2895 = vmatpush2.msra.mxu0 0.0
        %2896 = vmatprep.subr.mxu0 0.0
        %2897 = vmatpush2.msra.mxu0 0.0
        %2898 = vmatprep.subr.mxu0 0.0
        %2899 = vmatpush2.msra.mxu0 0.0
        %2900 = vmatprep.subr.mxu0 0.0
        %2901 = vmatpush2.msra.mxu0 0.0
        %2902 = vmatprep.subr.mxu0 0.0
        %2903 = vmatpush2.msra.mxu0 0.0
        %2904 = vmatprep.subr.mxu0 0.0
        %2905 = vmatpush2.msra.mxu0 0.0
        %2906 = vmatprep.subr.mxu0 0.0
        %2907 = vmatpush2.msra.mxu0 0.0
        %2908 = vmatprep.subr.mxu0 0.0
        %2909 = vmatpush2.msra.mxu0 0.0
        %2910 = vmatprep.subr.mxu0 0.0
        %2911 = vmatpush2.msra.mxu0 0.0
        %2912 = vmatprep.mubr.f32.mxu0 0.0
        %2913 = vmatmul.mubr.f32.gmra.mxu0 %v2846
        %v2914 = vpop.f32.mrf.mxu0
        %v2915 = vadd.f32 0.0, %v2914
        %v2916 = vpop.f32.mrf.mxu0
        %v2917 = vadd.f32 0.0, %v2916
        %2918 = vdwg.mxu0
        %2919 = vmatprep.subr.mxu0 %v1111
        %2920 = vmatpush1.msra.mxu0 %v1110
        %2921 = vmatprep.subr.mxu0 %v1109
        %2922 = vmatpush1.msra.mxu0 %v1108
        %2923 = vmatprep.subr.mxu0 %v1107
        %2924 = vmatpush1.msra.mxu0 %v1106
        %2925 = vmatprep.subr.mxu0 %v1105
        %2926 = vmatpush1.msra.mxu0 %v1104
        %2927 = vmatprep.subr.mxu0 %v1103
        %2928 = vmatpush1.msra.mxu0 %v1102
        %2929 = vmatprep.subr.mxu0 %v1101
        %2930 = vmatpush1.msra.mxu0 %v1100
        %2931 = vmatprep.subr.mxu0 %v1099
        %2932 = vmatpush1.msra.mxu0 %v1098
        %2933 = vmatprep.subr.mxu0 %v1097
        %2934 = vmatpush1.msra.mxu0 %v1096
        %2935 = vmatprep.subr.mxu0 %v1095
        %2936 = vmatpush1.msra.mxu0 %v1094
        %2937 = vmatprep.subr.mxu0 %v1093
        %2938 = vmatpush1.msra.mxu0 %v1092
        %2939 = vmatprep.subr.mxu0 %v1091
        %2940 = vmatpush1.msra.mxu0 %v1090
        %2941 = vmatprep.subr.mxu0 %v1089
        %2942 = vmatpush1.msra.mxu0 %v1088
        %2943 = vmatprep.subr.mxu0 %v1087
        %2944 = vmatpush1.msra.mxu0 %v1086
        %2945 = vmatprep.subr.mxu0 %v1085
        %2946 = vmatpush1.msra.mxu0 %v1084
        %2947 = vmatprep.subr.mxu0 %v1083
        %2948 = vmatpush1.msra.mxu0 %v1082
        %2949 = vmatprep.subr.mxu0 %v1081
        %2950 = vmatpush1.msra.mxu0 %v1080
        %2951 = vmatprep.subr.mxu0 %v1143
        %2952 = vmatpush2.msra.mxu0 %v1142
        %2953 = vmatprep.subr.mxu0 %v1141
        %2954 = vmatpush2.msra.mxu0 %v1140
        %2955 = vmatprep.subr.mxu0 %v1139
        %2956 = vmatpush2.msra.mxu0 %v1138
        %2957 = vmatprep.subr.mxu0 %v1137
        %2958 = vmatpush2.msra.mxu0 %v1136
        %2959 = vmatprep.subr.mxu0 %v1135
        %2960 = vmatpush2.msra.mxu0 %v1134
        %2961 = vmatprep.subr.mxu0 %v1133
        %2962 = vmatpush2.msra.mxu0 %v1132
        %2963 = vmatprep.subr.mxu0 %v1131
        %2964 = vmatpush2.msra.mxu0 %v1130
        %2965 = vmatprep.subr.mxu0 %v1129
        %2966 = vmatpush2.msra.mxu0 %v1128
        %2967 = vmatprep.subr.mxu0 %v1127
        %2968 = vmatpush2.msra.mxu0 %v1126
        %2969 = vmatprep.subr.mxu0 %v1125
        %2970 = vmatpush2.msra.mxu0 %v1124
        %2971 = vmatprep.subr.mxu0 %v1123
        %2972 = vmatpush2.msra.mxu0 %v1122
        %2973 = vmatprep.subr.mxu0 %v1121
        %2974 = vmatpush2.msra.mxu0 %v1120
        %2975 = vmatprep.subr.mxu0 %v1119
        %2976 = vmatpush2.msra.mxu0 %v1118
        %2977 = vmatprep.subr.mxu0 %v1117
        %2978 = vmatpush2.msra.mxu0 %v1116
        %2979 = vmatprep.subr.mxu0 %v1115
        %2980 = vmatpush2.msra.mxu0 %v1114
        %2981 = vmatprep.subr.mxu0 %v1113
        %2982 = vmatpush2.msra.mxu0 %v1112
        %2983 = vmatprep.mubr.f32.mxu0 %v2917
        %2984 = vmatmul.mubr.f32.gmra.mxu0 %v2915
        %v2985 = vpop.f32.mrf.mxu0
        %v2986 = vadd.f32 0.0, %v2985
        %v2987 = vpop.f32.mrf.mxu0
        %v2988 = vadd.f32 0.0, %v2987
        %2989 = vdwg.mxu0
        %v2990 = vadd.f32 %v2839, %v2986
        %v2991 = vadd.f32 %v2841, %v2988
        %s2992 = scalar_lea.vmem %s7, 24
        %v2993 = vld [vmem:[%s2992] sm:$0xff]
        %v2995 = vsel %vm2550, %v2993, 0
        %2997 = vmatprep.subr.mxu0 0.0
        %2998 = vmatpush1.msra.mxu0 0.0
        %2999 = vmatprep.subr.mxu0 0.0
        %3000 = vmatpush1.msra.mxu0 0.0
        %3001 = vmatprep.subr.mxu0 0.0
        %3002 = vmatpush1.msra.mxu0 0.0
        %3003 = vmatprep.subr.mxu0 0.0
        %3004 = vmatpush1.msra.mxu0 0.0
        %3005 = vmatprep.subr.mxu0 0.0
        %3006 = vmatpush1.msra.mxu0 0.0
        %3007 = vmatprep.subr.mxu0 0.0
        %3008 = vmatpush1.msra.mxu0 0.0
        %3009 = vmatprep.subr.mxu0 0.0
        %3010 = vmatpush1.msra.mxu0 0.0
        %3011 = vmatprep.subr.mxu0 0.0
        %3012 = vmatpush1.msra.mxu0 0.0
        %3013 = vmatprep.subr.mxu0 0.0
        %3014 = vmatpush1.msra.mxu0 0.0
        %3015 = vmatprep.subr.mxu0 0.0
        %3016 = vmatpush1.msra.mxu0 0.0
        %3017 = vmatprep.subr.mxu0 0.0
        %3018 = vmatpush1.msra.mxu0 0.0
        %3019 = vmatprep.subr.mxu0 0.0
        %3020 = vmatpush1.msra.mxu0 0.0
        %3021 = vmatprep.subr.mxu0 0.0
        %3022 = vmatpush1.msra.mxu0 0.0
        %3023 = vmatprep.subr.mxu0 0.0
        %3024 = vmatpush1.msra.mxu0 0.0
        %3025 = vmatprep.subr.mxu0 0.0
        %3026 = vmatpush1.msra.mxu0 0.0
        %3027 = vmatprep.subr.mxu0 %v2548
        %3028 = vmatpush1.msra.mxu0 %v2547
        %3029 = vmatprep.subr.mxu0 0.0
        %3030 = vmatpush2.msra.mxu0 0.0
        %3031 = vmatprep.subr.mxu0 0.0
        %3032 = vmatpush2.msra.mxu0 0.0
        %3033 = vmatprep.subr.mxu0 0.0
        %3034 = vmatpush2.msra.mxu0 0.0
        %3035 = vmatprep.subr.mxu0 0.0
        %3036 = vmatpush2.msra.mxu0 0.0
        %3037 = vmatprep.subr.mxu0 0.0
        %3038 = vmatpush2.msra.mxu0 0.0
        %3039 = vmatprep.subr.mxu0 0.0
        %3040 = vmatpush2.msra.mxu0 0.0
        %3041 = vmatprep.subr.mxu0 0.0
        %3042 = vmatpush2.msra.mxu0 0.0
        %3043 = vmatprep.subr.mxu0 0.0
        %3044 = vmatpush2.msra.mxu0 0.0
        %3045 = vmatprep.subr.mxu0 0.0
        %3046 = vmatpush2.msra.mxu0 0.0
        %3047 = vmatprep.subr.mxu0 0.0
        %3048 = vmatpush2.msra.mxu0 0.0
        %3049 = vmatprep.subr.mxu0 0.0
        %3050 = vmatpush2.msra.mxu0 0.0
        %3051 = vmatprep.subr.mxu0 0.0
        %3052 = vmatpush2.msra.mxu0 0.0
        %3053 = vmatprep.subr.mxu0 0.0
        %3054 = vmatpush2.msra.mxu0 0.0
        %3055 = vmatprep.subr.mxu0 0.0
        %3056 = vmatpush2.msra.mxu0 0.0
        %3057 = vmatprep.subr.mxu0 0.0
        %3058 = vmatpush2.msra.mxu0 0.0
        %3059 = vmatprep.subr.mxu0 0.0
        %3060 = vmatpush2.msra.mxu0 0.0
        %3061 = vmatprep.mubr.f32.mxu0 0.0
        %3062 = vmatmul.mubr.f32.gmra.mxu0 %v2995
        %v3063 = vpop.f32.mrf.mxu0
        %v3064 = vadd.f32 0.0, %v3063
        %v3065 = vpop.f32.mrf.mxu0
        %v3066 = vadd.f32 0.0, %v3065
        %3067 = vdwg.mxu0
        %3068 = vmatprep.subr.mxu0 %v1325
        %3069 = vmatpush1.msra.mxu0 %v1324
        %3070 = vmatprep.subr.mxu0 %v1323
        %3071 = vmatpush1.msra.mxu0 %v1322
        %3072 = vmatprep.subr.mxu0 %v1321
        %3073 = vmatpush1.msra.mxu0 %v1320
        %3074 = vmatprep.subr.mxu0 %v1319
        %3075 = vmatpush1.msra.mxu0 %v1318
        %3076 = vmatprep.subr.mxu0 %v1317
        %3077 = vmatpush1.msra.mxu0 %v1316
        %3078 = vmatprep.subr.mxu0 %v1315
        %3079 = vmatpush1.msra.mxu0 %v1314
        %3080 = vmatprep.subr.mxu0 %v1313
        %3081 = vmatpush1.msra.mxu0 %v1312
        %3082 = vmatprep.subr.mxu0 %v1311
        %3083 = vmatpush1.msra.mxu0 %v1310
        %3084 = vmatprep.subr.mxu0 %v1309
        %3085 = vmatpush1.msra.mxu0 %v1308
        %3086 = vmatprep.subr.mxu0 %v1307
        %3087 = vmatpush1.msra.mxu0 %v1306
        %3088 = vmatprep.subr.mxu0 %v1305
        %3089 = vmatpush1.msra.mxu0 %v1304
        %3090 = vmatprep.subr.mxu0 %v1303
        %3091 = vmatpush1.msra.mxu0 %v1302
        %3092 = vmatprep.subr.mxu0 %v1301
        %3093 = vmatpush1.msra.mxu0 %v1300
        %3094 = vmatprep.subr.mxu0 %v1299
        %3095 = vmatpush1.msra.mxu0 %v1298
        %3096 = vmatprep.subr.mxu0 %v1297
        %3097 = vmatpush1.msra.mxu0 %v1296
        %3098 = vmatprep.subr.mxu0 %v1295
        %3099 = vmatpush1.msra.mxu0 %v1294
        %3100 = vmatprep.subr.mxu0 %v1357
        %3101 = vmatpush2.msra.mxu0 %v1356
        %3102 = vmatprep.subr.mxu0 %v1355
        %3103 = vmatpush2.msra.mxu0 %v1354
        %3104 = vmatprep.subr.mxu0 %v1353
        %3105 = vmatpush2.msra.mxu0 %v1352
        %3106 = vmatprep.subr.mxu0 %v1351
        %3107 = vmatpush2.msra.mxu0 %v1350
        %3108 = vmatprep.subr.mxu0 %v1349
        %3109 = vmatpush2.msra.mxu0 %v1348
        %3110 = vmatprep.subr.mxu0 %v1347
        %3111 = vmatpush2.msra.mxu0 %v1346
        %3112 = vmatprep.subr.mxu0 %v1345
        %3113 = vmatpush2.msra.mxu0 %v1344
        %3114 = vmatprep.subr.mxu0 %v1343
        %3115 = vmatpush2.msra.mxu0 %v1342
        %3116 = vmatprep.subr.mxu0 %v1341
        %3117 = vmatpush2.msra.mxu0 %v1340
        %3118 = vmatprep.subr.mxu0 %v1339
        %3119 = vmatpush2.msra.mxu0 %v1338
        %3120 = vmatprep.subr.mxu0 %v1337
        %3121 = vmatpush2.msra.mxu0 %v1336
        %3122 = vmatprep.subr.mxu0 %v1335
        %3123 = vmatpush2.msra.mxu0 %v1334
        %3124 = vmatprep.subr.mxu0 %v1333
        %3125 = vmatpush2.msra.mxu0 %v1332
        %3126 = vmatprep.subr.mxu0 %v1331
        %3127 = vmatpush2.msra.mxu0 %v1330
        %3128 = vmatprep.subr.mxu0 %v1329
        %3129 = vmatpush2.msra.mxu0 %v1328
        %3130 = vmatprep.subr.mxu0 %v1327
        %3131 = vmatpush2.msra.mxu0 %v1326
        %3132 = vmatprep.mubr.f32.mxu0 %v3066
        %3133 = vmatmul.mubr.f32.gmra.mxu0 %v3064
        %v3134 = vpop.f32.mrf.mxu0
        %v3135 = vadd.f32 0.0, %v3134
        %v3136 = vpop.f32.mrf.mxu0
        %v3137 = vadd.f32 0.0, %v3136
        %3138 = vdwg.mxu0
        %v3139 = vadd.f32 %v2990, %v3135
        %v3140 = vadd.f32 %v2991, %v3137
        %s3141 = scalar_lea.vmem %s7, 32
        %v3142 = vld [vmem:[%s3141] sm:$0xff]
        %v3144 = vsel %vm2550, %v3142, 0
        %3146 = vmatprep.subr.mxu0 0.0
        %3147 = vmatpush1.msra.mxu0 0.0
        %3148 = vmatprep.subr.mxu0 0.0
        %3149 = vmatpush1.msra.mxu0 0.0
        %3150 = vmatprep.subr.mxu0 0.0
        %3151 = vmatpush1.msra.mxu0 0.0
        %3152 = vmatprep.subr.mxu0 0.0
        %3153 = vmatpush1.msra.mxu0 0.0
        %3154 = vmatprep.subr.mxu0 0.0
        %3155 = vmatpush1.msra.mxu0 0.0
        %3156 = vmatprep.subr.mxu0 0.0
        %3157 = vmatpush1.msra.mxu0 0.0
        %3158 = vmatprep.subr.mxu0 0.0
        %3159 = vmatpush1.msra.mxu0 0.0
        %3160 = vmatprep.subr.mxu0 0.0
        %3161 = vmatpush1.msra.mxu0 0.0
        %3162 = vmatprep.subr.mxu0 0.0
        %3163 = vmatpush1.msra.mxu0 0.0
        %3164 = vmatprep.subr.mxu0 0.0
        %3165 = vmatpush1.msra.mxu0 0.0
        %3166 = vmatprep.subr.mxu0 0.0
        %3167 = vmatpush1.msra.mxu0 0.0
        %3168 = vmatprep.subr.mxu0 0.0
        %3169 = vmatpush1.msra.mxu0 0.0
        %3170 = vmatprep.subr.mxu0 0.0
        %3171 = vmatpush1.msra.mxu0 0.0
        %3172 = vmatprep.subr.mxu0 0.0
        %3173 = vmatpush1.msra.mxu0 0.0
        %3174 = vmatprep.subr.mxu0 0.0
        %3175 = vmatpush1.msra.mxu0 0.0
        %3176 = vmatprep.subr.mxu0 %v2548
        %3177 = vmatpush1.msra.mxu0 %v2547
        %3178 = vmatprep.subr.mxu0 0.0
        %3179 = vmatpush2.msra.mxu0 0.0
        %3180 = vmatprep.subr.mxu0 0.0
        %3181 = vmatpush2.msra.mxu0 0.0
        %3182 = vmatprep.subr.mxu0 0.0
        %3183 = vmatpush2.msra.mxu0 0.0
        %3184 = vmatprep.subr.mxu0 0.0
        %3185 = vmatpush2.msra.mxu0 0.0
        %3186 = vmatprep.subr.mxu0 0.0
        %3187 = vmatpush2.msra.mxu0 0.0
        %3188 = vmatprep.subr.mxu0 0.0
        %3189 = vmatpush2.msra.mxu0 0.0
        %3190 = vmatprep.subr.mxu0 0.0
        %3191 = vmatpush2.msra.mxu0 0.0
        %3192 = vmatprep.subr.mxu0 0.0
        %3193 = vmatpush2.msra.mxu0 0.0
        %3194 = vmatprep.subr.mxu0 0.0
        %3195 = vmatpush2.msra.mxu0 0.0
        %3196 = vmatprep.subr.mxu0 0.0
        %3197 = vmatpush2.msra.mxu0 0.0
        %3198 = vmatprep.subr.mxu0 0.0
        %3199 = vmatpush2.msra.mxu0 0.0
        %3200 = vmatprep.subr.mxu0 0.0
        %3201 = vmatpush2.msra.mxu0 0.0
        %3202 = vmatprep.subr.mxu0 0.0
        %3203 = vmatpush2.msra.mxu0 0.0
        %3204 = vmatprep.subr.mxu0 0.0
        %3205 = vmatpush2.msra.mxu0 0.0
        %3206 = vmatprep.subr.mxu0 0.0
        %3207 = vmatpush2.msra.mxu0 0.0
        %3208 = vmatprep.subr.mxu0 0.0
        %3209 = vmatpush2.msra.mxu0 0.0
        %3210 = vmatprep.mubr.f32.mxu0 0.0
        %3211 = vmatmul.mubr.f32.gmra.mxu0 %v3144
        %v3212 = vpop.f32.mrf.mxu0
        %v3213 = vadd.f32 0.0, %v3212
        %v3214 = vpop.f32.mrf.mxu0
        %v3215 = vadd.f32 0.0, %v3214
        %3216 = vdwg.mxu0
        %3217 = vmatprep.subr.mxu0 %v1539
        %3218 = vmatpush1.msra.mxu0 %v1538
        %3219 = vmatprep.subr.mxu0 %v1537
        %3220 = vmatpush1.msra.mxu0 %v1536
        %3221 = vmatprep.subr.mxu0 %v1535
        %3222 = vmatpush1.msra.mxu0 %v1534
        %3223 = vmatprep.subr.mxu0 %v1533
        %3224 = vmatpush1.msra.mxu0 %v1532
        %3225 = vmatprep.subr.mxu0 %v1531
        %3226 = vmatpush1.msra.mxu0 %v1530
        %3227 = vmatprep.subr.mxu0 %v1529
        %3228 = vmatpush1.msra.mxu0 %v1528
        %3229 = vmatprep.subr.mxu0 %v1527
        %3230 = vmatpush1.msra.mxu0 %v1526
        %3231 = vmatprep.subr.mxu0 %v1525
        %3232 = vmatpush1.msra.mxu0 %v1524
        %3233 = vmatprep.subr.mxu0 %v1523
        %3234 = vmatpush1.msra.mxu0 %v1522
        %3235 = vmatprep.subr.mxu0 %v1521
        %3236 = vmatpush1.msra.mxu0 %v1520
        %3237 = vmatprep.subr.mxu0 %v1519
        %3238 = vmatpush1.msra.mxu0 %v1518
        %3239 = vmatprep.subr.mxu0 %v1517
        %3240 = vmatpush1.msra.mxu0 %v1516
        %3241 = vmatprep.subr.mxu0 %v1515
        %3242 = vmatpush1.msra.mxu0 %v1514
        %3243 = vmatprep.subr.mxu0 %v1513
        %3244 = vmatpush1.msra.mxu0 %v1512
        %3245 = vmatprep.subr.mxu0 %v1511
        %3246 = vmatpush1.msra.mxu0 %v1510
        %3247 = vmatprep.subr.mxu0 %v1509
        %3248 = vmatpush1.msra.mxu0 %v1508
        %3249 = vmatprep.subr.mxu0 %v1571
        %3250 = vmatpush2.msra.mxu0 %v1570
        %3251 = vmatprep.subr.mxu0 %v1569
        %3252 = vmatpush2.msra.mxu0 %v1568
        %3253 = vmatprep.subr.mxu0 %v1567
        %3254 = vmatpush2.msra.mxu0 %v1566
        %3255 = vmatprep.subr.mxu0 %v1565
        %3256 = vmatpush2.msra.mxu0 %v1564
        %3257 = vmatprep.subr.mxu0 %v1563
        %3258 = vmatpush2.msra.mxu0 %v1562
        %3259 = vmatprep.subr.mxu0 %v1561
        %3260 = vmatpush2.msra.mxu0 %v1560
        %3261 = vmatprep.subr.mxu0 %v1559
        %3262 = vmatpush2.msra.mxu0 %v1558
        %3263 = vmatprep.subr.mxu0 %v1557
        %3264 = vmatpush2.msra.mxu0 %v1556
        %3265 = vmatprep.subr.mxu0 %v1555
        %3266 = vmatpush2.msra.mxu0 %v1554
        %3267 = vmatprep.subr.mxu0 %v1553
        %3268 = vmatpush2.msra.mxu0 %v1552
        %3269 = vmatprep.subr.mxu0 %v1551
        %3270 = vmatpush2.msra.mxu0 %v1550
        %3271 = vmatprep.subr.mxu0 %v1549
        %3272 = vmatpush2.msra.mxu0 %v1548
        %3273 = vmatprep.subr.mxu0 %v1547
        %3274 = vmatpush2.msra.mxu0 %v1546
        %3275 = vmatprep.subr.mxu0 %v1545
        %3276 = vmatpush2.msra.mxu0 %v1544
        %3277 = vmatprep.subr.mxu0 %v1543
        %3278 = vmatpush2.msra.mxu0 %v1542
        %3279 = vmatprep.subr.mxu0 %v1541
        %3280 = vmatpush2.msra.mxu0 %v1540
        %3281 = vmatprep.mubr.f32.mxu0 %v3215
        %3282 = vmatmul.mubr.f32.gmra.mxu0 %v3213
        %v3283 = vpop.f32.mrf.mxu0
        %v3284 = vadd.f32 0.0, %v3283
        %v3285 = vpop.f32.mrf.mxu0
        %v3286 = vadd.f32 0.0, %v3285
        %3287 = vdwg.mxu0
        %v3288 = vadd.f32 %v3139, %v3284
        %v3289 = vadd.f32 %v3140, %v3286
        %s3290 = scalar_lea.vmem %s7, 40
        %v3291 = vld [vmem:[%s3290] sm:$0xff]
        %v3293 = vsel %vm2550, %v3291, 0
        %3295 = vmatprep.subr.mxu0 0.0
        %3296 = vmatpush1.msra.mxu0 0.0
        %3297 = vmatprep.subr.mxu0 0.0
        %3298 = vmatpush1.msra.mxu0 0.0
        %3299 = vmatprep.subr.mxu0 0.0
        %3300 = vmatpush1.msra.mxu0 0.0
        %3301 = vmatprep.subr.mxu0 0.0
        %3302 = vmatpush1.msra.mxu0 0.0
        %3303 = vmatprep.subr.mxu0 0.0
        %3304 = vmatpush1.msra.mxu0 0.0
        %3305 = vmatprep.subr.mxu0 0.0
        %3306 = vmatpush1.msra.mxu0 0.0
        %3307 = vmatprep.subr.mxu0 0.0
        %3308 = vmatpush1.msra.mxu0 0.0
        %3309 = vmatprep.subr.mxu0 0.0
        %3310 = vmatpush1.msra.mxu0 0.0
        %3311 = vmatprep.subr.mxu0 0.0
        %3312 = vmatpush1.msra.mxu0 0.0
        %3313 = vmatprep.subr.mxu0 0.0
        %3314 = vmatpush1.msra.mxu0 0.0
        %3315 = vmatprep.subr.mxu0 0.0
        %3316 = vmatpush1.msra.mxu0 0.0
        %3317 = vmatprep.subr.mxu0 0.0
        %3318 = vmatpush1.msra.mxu0 0.0
        %3319 = vmatprep.subr.mxu0 0.0
        %3320 = vmatpush1.msra.mxu0 0.0
        %3321 = vmatprep.subr.mxu0 0.0
        %3322 = vmatpush1.msra.mxu0 0.0
        %3323 = vmatprep.subr.mxu0 0.0
        %3324 = vmatpush1.msra.mxu0 0.0
        %3325 = vmatprep.subr.mxu0 %v2548
        %3326 = vmatpush1.msra.mxu0 %v2547
        %3327 = vmatprep.subr.mxu0 0.0
        %3328 = vmatpush2.msra.mxu0 0.0
        %3329 = vmatprep.subr.mxu0 0.0
        %3330 = vmatpush2.msra.mxu0 0.0
        %3331 = vmatprep.subr.mxu0 0.0
        %3332 = vmatpush2.msra.mxu0 0.0
        %3333 = vmatprep.subr.mxu0 0.0
        %3334 = vmatpush2.msra.mxu0 0.0
        %3335 = vmatprep.subr.mxu0 0.0
        %3336 = vmatpush2.msra.mxu0 0.0
        %3337 = vmatprep.subr.mxu0 0.0
        %3338 = vmatpush2.msra.mxu0 0.0
        %3339 = vmatprep.subr.mxu0 0.0
        %3340 = vmatpush2.msra.mxu0 0.0
        %3341 = vmatprep.subr.mxu0 0.0
        %3342 = vmatpush2.msra.mxu0 0.0
        %3343 = vmatprep.subr.mxu0 0.0
        %3344 = vmatpush2.msra.mxu0 0.0
        %3345 = vmatprep.subr.mxu0 0.0
        %3346 = vmatpush2.msra.mxu0 0.0
        %3347 = vmatprep.subr.mxu0 0.0
        %3348 = vmatpush2.msra.mxu0 0.0
        %3349 = vmatprep.subr.mxu0 0.0
        %3350 = vmatpush2.msra.mxu0 0.0
        %3351 = vmatprep.subr.mxu0 0.0
        %3352 = vmatpush2.msra.mxu0 0.0
        %3353 = vmatprep.subr.mxu0 0.0
        %3354 = vmatpush2.msra.mxu0 0.0
        %3355 = vmatprep.subr.mxu0 0.0
        %3356 = vmatpush2.msra.mxu0 0.0
        %3357 = vmatprep.subr.mxu0 0.0
        %3358 = vmatpush2.msra.mxu0 0.0
        %3359 = vmatprep.mubr.f32.mxu0 0.0
        %3360 = vmatmul.mubr.f32.gmra.mxu0 %v3293
        %v3361 = vpop.f32.mrf.mxu0
        %v3362 = vadd.f32 0.0, %v3361
        %v3363 = vpop.f32.mrf.mxu0
        %v3364 = vadd.f32 0.0, %v3363
        %3365 = vdwg.mxu0
        %3366 = vmatprep.subr.mxu0 %v1753
        %3367 = vmatpush1.msra.mxu0 %v1752
        %3368 = vmatprep.subr.mxu0 %v1751
        %3369 = vmatpush1.msra.mxu0 %v1750
        %3370 = vmatprep.subr.mxu0 %v1749
        %3371 = vmatpush1.msra.mxu0 %v1748
        %3372 = vmatprep.subr.mxu0 %v1747
        %3373 = vmatpush1.msra.mxu0 %v1746
        %3374 = vmatprep.subr.mxu0 %v1745
        %3375 = vmatpush1.msra.mxu0 %v1744
        %3376 = vmatprep.subr.mxu0 %v1743
        %3377 = vmatpush1.msra.mxu0 %v1742
        %3378 = vmatprep.subr.mxu0 %v1741
        %3379 = vmatpush1.msra.mxu0 %v1740
        %3380 = vmatprep.subr.mxu0 %v1739
        %3381 = vmatpush1.msra.mxu0 %v1738
        %3382 = vmatprep.subr.mxu0 %v1737
        %3383 = vmatpush1.msra.mxu0 %v1736
        %3384 = vmatprep.subr.mxu0 %v1735
        %3385 = vmatpush1.msra.mxu0 %v1734
        %3386 = vmatprep.subr.mxu0 %v1733
        %3387 = vmatpush1.msra.mxu0 %v1732
        %3388 = vmatprep.subr.mxu0 %v1731
        %3389 = vmatpush1.msra.mxu0 %v1730
        %3390 = vmatprep.subr.mxu0 %v1729
        %3391 = vmatpush1.msra.mxu0 %v1728
        %3392 = vmatprep.subr.mxu0 %v1727
        %3393 = vmatpush1.msra.mxu0 %v1726
        %3394 = vmatprep.subr.mxu0 %v1725
        %3395 = vmatpush1.msra.mxu0 %v1724
        %3396 = vmatprep.subr.mxu0 %v1723
        %3397 = vmatpush1.msra.mxu0 %v1722
        %3398 = vmatprep.subr.mxu0 %v1785
        %3399 = vmatpush2.msra.mxu0 %v1784
        %3400 = vmatprep.subr.mxu0 %v1783
        %3401 = vmatpush2.msra.mxu0 %v1782
        %3402 = vmatprep.subr.mxu0 %v1781
        %3403 = vmatpush2.msra.mxu0 %v1780
        %3404 = vmatprep.subr.mxu0 %v1779
        %3405 = vmatpush2.msra.mxu0 %v1778
        %3406 = vmatprep.subr.mxu0 %v1777
        %3407 = vmatpush2.msra.mxu0 %v1776
        %3408 = vmatprep.subr.mxu0 %v1775
        %3409 = vmatpush2.msra.mxu0 %v1774
        %3410 = vmatprep.subr.mxu0 %v1773
        %3411 = vmatpush2.msra.mxu0 %v1772
        %3412 = vmatprep.subr.mxu0 %v1771
        %3413 = vmatpush2.msra.mxu0 %v1770
        %3414 = vmatprep.subr.mxu0 %v1769
        %3415 = vmatpush2.msra.mxu0 %v1768
        %3416 = vmatprep.subr.mxu0 %v1767
        %3417 = vmatpush2.msra.mxu0 %v1766
        %3418 = vmatprep.subr.mxu0 %v1765
        %3419 = vmatpush2.msra.mxu0 %v1764
        %3420 = vmatprep.subr.mxu0 %v1763
        %3421 = vmatpush2.msra.mxu0 %v1762
        %3422 = vmatprep.subr.mxu0 %v1761
        %3423 = vmatpush2.msra.mxu0 %v1760
        %3424 = vmatprep.subr.mxu0 %v1759
        %3425 = vmatpush2.msra.mxu0 %v1758
        %3426 = vmatprep.subr.mxu0 %v1757
        %3427 = vmatpush2.msra.mxu0 %v1756
        %3428 = vmatprep.subr.mxu0 %v1755
        %3429 = vmatpush2.msra.mxu0 %v1754
        %3430 = vmatprep.mubr.f32.mxu0 %v3364
        %3431 = vmatmul.mubr.f32.gmra.mxu0 %v3362
        %v3432 = vpop.f32.mrf.mxu0
        %v3433 = vadd.f32 0.0, %v3432
        %v3434 = vpop.f32.mrf.mxu0
        %v3435 = vadd.f32 0.0, %v3434
        %3436 = vdwg.mxu0
        %v3437 = vadd.f32 %v3288, %v3433
        %v3438 = vadd.f32 %v3289, %v3435
        %s3439 = scalar_lea.vmem %s7, 48
        %v3440 = vld [vmem:[%s3439] sm:$0xff]
        %v3442 = vsel %vm2550, %v3440, 0
        %3444 = vmatprep.subr.mxu0 0.0
        %3445 = vmatpush1.msra.mxu0 0.0
        %3446 = vmatprep.subr.mxu0 0.0
        %3447 = vmatpush1.msra.mxu0 0.0
        %3448 = vmatprep.subr.mxu0 0.0
        %3449 = vmatpush1.msra.mxu0 0.0
        %3450 = vmatprep.subr.mxu0 0.0
        %3451 = vmatpush1.msra.mxu0 0.0
        %3452 = vmatprep.subr.mxu0 0.0
        %3453 = vmatpush1.msra.mxu0 0.0
        %3454 = vmatprep.subr.mxu0 0.0
        %3455 = vmatpush1.msra.mxu0 0.0
        %3456 = vmatprep.subr.mxu0 0.0
        %3457 = vmatpush1.msra.mxu0 0.0
        %3458 = vmatprep.subr.mxu0 0.0
        %3459 = vmatpush1.msra.mxu0 0.0
        %3460 = vmatprep.subr.mxu0 0.0
        %3461 = vmatpush1.msra.mxu0 0.0
        %3462 = vmatprep.subr.mxu0 0.0
        %3463 = vmatpush1.msra.mxu0 0.0
        %3464 = vmatprep.subr.mxu0 0.0
        %3465 = vmatpush1.msra.mxu0 0.0
        %3466 = vmatprep.subr.mxu0 0.0
        %3467 = vmatpush1.msra.mxu0 0.0
        %3468 = vmatprep.subr.mxu0 0.0
        %3469 = vmatpush1.msra.mxu0 0.0
        %3470 = vmatprep.subr.mxu0 0.0
        %3471 = vmatpush1.msra.mxu0 0.0
        %3472 = vmatprep.subr.mxu0 0.0
        %3473 = vmatpush1.msra.mxu0 0.0
        %3474 = vmatprep.subr.mxu0 %v2548
        %3475 = vmatpush1.msra.mxu0 %v2547
        %3476 = vmatprep.subr.mxu0 0.0
        %3477 = vmatpush2.msra.mxu0 0.0
        %3478 = vmatprep.subr.mxu0 0.0
        %3479 = vmatpush2.msra.mxu0 0.0
        %3480 = vmatprep.subr.mxu0 0.0
        %3481 = vmatpush2.msra.mxu0 0.0
        %3482 = vmatprep.subr.mxu0 0.0
        %3483 = vmatpush2.msra.mxu0 0.0
        %3484 = vmatprep.subr.mxu0 0.0
        %3485 = vmatpush2.msra.mxu0 0.0
        %3486 = vmatprep.subr.mxu0 0.0
        %3487 = vmatpush2.msra.mxu0 0.0
        %3488 = vmatprep.subr.mxu0 0.0
        %3489 = vmatpush2.msra.mxu0 0.0
        %3490 = vmatprep.subr.mxu0 0.0
        %3491 = vmatpush2.msra.mxu0 0.0
        %3492 = vmatprep.subr.mxu0 0.0
        %3493 = vmatpush2.msra.mxu0 0.0
        %3494 = vmatprep.subr.mxu0 0.0
        %3495 = vmatpush2.msra.mxu0 0.0
        %3496 = vmatprep.subr.mxu0 0.0
        %3497 = vmatpush2.msra.mxu0 0.0
        %3498 = vmatprep.subr.mxu0 0.0
        %3499 = vmatpush2.msra.mxu0 0.0
        %3500 = vmatprep.subr.mxu0 0.0
        %3501 = vmatpush2.msra.mxu0 0.0
        %3502 = vmatprep.subr.mxu0 0.0
        %3503 = vmatpush2.msra.mxu0 0.0
        %3504 = vmatprep.subr.mxu0 0.0
        %3505 = vmatpush2.msra.mxu0 0.0
        %3506 = vmatprep.subr.mxu0 0.0
        %3507 = vmatpush2.msra.mxu0 0.0
        %3508 = vmatprep.mubr.f32.mxu0 0.0
        %3509 = vmatmul.mubr.f32.gmra.mxu0 %v3442
        %v3510 = vpop.f32.mrf.mxu0
        %v3511 = vadd.f32 0.0, %v3510
        %v3512 = vpop.f32.mrf.mxu0
        %v3513 = vadd.f32 0.0, %v3512
        %3514 = vdwg.mxu0
        %3515 = vmatprep.subr.mxu0 %v1967
        %3516 = vmatpush1.msra.mxu0 %v1966
        %3517 = vmatprep.subr.mxu0 %v1965
        %3518 = vmatpush1.msra.mxu0 %v1964
        %3519 = vmatprep.subr.mxu0 %v1963
        %3520 = vmatpush1.msra.mxu0 %v1962
        %3521 = vmatprep.subr.mxu0 %v1961
        %3522 = vmatpush1.msra.mxu0 %v1960
        %3523 = vmatprep.subr.mxu0 %v1959
        %3524 = vmatpush1.msra.mxu0 %v1958
        %3525 = vmatprep.subr.mxu0 %v1957
        %3526 = vmatpush1.msra.mxu0 %v1956
        %3527 = vmatprep.subr.mxu0 %v1955
        %3528 = vmatpush1.msra.mxu0 %v1954
        %3529 = vmatprep.subr.mxu0 %v1953
        %3530 = vmatpush1.msra.mxu0 %v1952
        %3531 = vmatprep.subr.mxu0 %v1951
        %3532 = vmatpush1.msra.mxu0 %v1950
        %3533 = vmatprep.subr.mxu0 %v1949
        %3534 = vmatpush1.msra.mxu0 %v1948
        %3535 = vmatprep.subr.mxu0 %v1947
        %3536 = vmatpush1.msra.mxu0 %v1946
        %3537 = vmatprep.subr.mxu0 %v1945
        %3538 = vmatpush1.msra.mxu0 %v1944
        %3539 = vmatprep.subr.mxu0 %v1943
        %3540 = vmatpush1.msra.mxu0 %v1942
        %3541 = vmatprep.subr.mxu0 %v1941
        %3542 = vmatpush1.msra.mxu0 %v1940
        %3543 = vmatprep.subr.mxu0 %v1939
        %3544 = vmatpush1.msra.mxu0 %v1938
        %3545 = vmatprep.subr.mxu0 %v1937
        %3546 = vmatpush1.msra.mxu0 %v1936
        %3547 = vmatprep.subr.mxu0 %v1999
        %3548 = vmatpush2.msra.mxu0 %v1998
        %3549 = vmatprep.subr.mxu0 %v1997
        %3550 = vmatpush2.msra.mxu0 %v1996
        %3551 = vmatprep.subr.mxu0 %v1995
        %3552 = vmatpush2.msra.mxu0 %v1994
        %3553 = vmatprep.subr.mxu0 %v1993
        %3554 = vmatpush2.msra.mxu0 %v1992
        %3555 = vmatprep.subr.mxu0 %v1991
        %3556 = vmatpush2.msra.mxu0 %v1990
        %3557 = vmatprep.subr.mxu0 %v1989
        %3558 = vmatpush2.msra.mxu0 %v1988
        %3559 = vmatprep.subr.mxu0 %v1987
        %3560 = vmatpush2.msra.mxu0 %v1986
        %3561 = vmatprep.subr.mxu0 %v1985
        %3562 = vmatpush2.msra.mxu0 %v1984
        %3563 = vmatprep.subr.mxu0 %v1983
        %3564 = vmatpush2.msra.mxu0 %v1982
        %3565 = vmatprep.subr.mxu0 %v1981
        %3566 = vmatpush2.msra.mxu0 %v1980
        %3567 = vmatprep.subr.mxu0 %v1979
        %3568 = vmatpush2.msra.mxu0 %v1978
        %3569 = vmatprep.subr.mxu0 %v1977
        %3570 = vmatpush2.msra.mxu0 %v1976
        %3571 = vmatprep.subr.mxu0 %v1975
        %3572 = vmatpush2.msra.mxu0 %v1974
        %3573 = vmatprep.subr.mxu0 %v1973
        %3574 = vmatpush2.msra.mxu0 %v1972
        %3575 = vmatprep.subr.mxu0 %v1971
        %3576 = vmatpush2.msra.mxu0 %v1970
        %3577 = vmatprep.subr.mxu0 %v1969
        %3578 = vmatpush2.msra.mxu0 %v1968
        %3579 = vmatprep.mubr.f32.mxu0 %v3513
        %3580 = vmatmul.mubr.f32.gmra.mxu0 %v3511
        %v3581 = vpop.f32.mrf.mxu0
        %v3582 = vadd.f32 0.0, %v3581
        %v3583 = vpop.f32.mrf.mxu0
        %v3584 = vadd.f32 0.0, %v3583
        %3585 = vdwg.mxu0
        %v3586 = vadd.f32 %v3437, %v3582
        %v3587 = vadd.f32 %v3438, %v3584
        %s3588 = scalar_lea.vmem %s7, 56
        %v3589 = vld [vmem:[%s3588] sm:$0xff]
        %v3591 = vsel %vm2550, %v3589, 0
        %3593 = vmatprep.subr.mxu0 0.0
        %3594 = vmatpush1.msra.mxu0 0.0
        %3595 = vmatprep.subr.mxu0 0.0
        %3596 = vmatpush1.msra.mxu0 0.0
        %3597 = vmatprep.subr.mxu0 0.0
        %3598 = vmatpush1.msra.mxu0 0.0
        %3599 = vmatprep.subr.mxu0 0.0
        %3600 = vmatpush1.msra.mxu0 0.0
        %3601 = vmatprep.subr.mxu0 0.0
        %3602 = vmatpush1.msra.mxu0 0.0
        %3603 = vmatprep.subr.mxu0 0.0
        %3604 = vmatpush1.msra.mxu0 0.0
        %3605 = vmatprep.subr.mxu0 0.0
        %3606 = vmatpush1.msra.mxu0 0.0
        %3607 = vmatprep.subr.mxu0 0.0
        %3608 = vmatpush1.msra.mxu0 0.0
        %3609 = vmatprep.subr.mxu0 0.0
        %3610 = vmatpush1.msra.mxu0 0.0
        %3611 = vmatprep.subr.mxu0 0.0
        %3612 = vmatpush1.msra.mxu0 0.0
        %3613 = vmatprep.subr.mxu0 0.0
        %3614 = vmatpush1.msra.mxu0 0.0
        %3615 = vmatprep.subr.mxu0 0.0
        %3616 = vmatpush1.msra.mxu0 0.0
        %3617 = vmatprep.subr.mxu0 0.0
        %3618 = vmatpush1.msra.mxu0 0.0
        %3619 = vmatprep.subr.mxu0 0.0
        %3620 = vmatpush1.msra.mxu0 0.0
        %3621 = vmatprep.subr.mxu0 0.0
        %3622 = vmatpush1.msra.mxu0 0.0
        %3623 = vmatprep.subr.mxu0 %v2548
        %3624 = vmatpush1.msra.mxu0 %v2547
        %3625 = vmatprep.subr.mxu0 0.0
        %3626 = vmatpush2.msra.mxu0 0.0
        %3627 = vmatprep.subr.mxu0 0.0
        %3628 = vmatpush2.msra.mxu0 0.0
        %3629 = vmatprep.subr.mxu0 0.0
        %3630 = vmatpush2.msra.mxu0 0.0
        %3631 = vmatprep.subr.mxu0 0.0
        %3632 = vmatpush2.msra.mxu0 0.0
        %3633 = vmatprep.subr.mxu0 0.0
        %3634 = vmatpush2.msra.mxu0 0.0
        %3635 = vmatprep.subr.mxu0 0.0
        %3636 = vmatpush2.msra.mxu0 0.0
        %3637 = vmatprep.subr.mxu0 0.0
        %3638 = vmatpush2.msra.mxu0 0.0
        %3639 = vmatprep.subr.mxu0 0.0
        %3640 = vmatpush2.msra.mxu0 0.0
        %3641 = vmatprep.subr.mxu0 0.0
        %3642 = vmatpush2.msra.mxu0 0.0
        %3643 = vmatprep.subr.mxu0 0.0
        %3644 = vmatpush2.msra.mxu0 0.0
        %3645 = vmatprep.subr.mxu0 0.0
        %3646 = vmatpush2.msra.mxu0 0.0
        %3647 = vmatprep.subr.mxu0 0.0
        %3648 = vmatpush2.msra.mxu0 0.0
        %3649 = vmatprep.subr.mxu0 0.0
        %3650 = vmatpush2.msra.mxu0 0.0
        %3651 = vmatprep.subr.mxu0 0.0
        %3652 = vmatpush2.msra.mxu0 0.0
        %3653 = vmatprep.subr.mxu0 0.0
        %3654 = vmatpush2.msra.mxu0 0.0
        %3655 = vmatprep.subr.mxu0 0.0
        %3656 = vmatpush2.msra.mxu0 0.0
        %3657 = vmatprep.mubr.f32.mxu0 0.0
        %3658 = vmatmul.mubr.f32.gmra.mxu0 %v3591
        %v3659 = vpop.f32.mrf.mxu0
        %v3660 = vadd.f32 0.0, %v3659
        %v3661 = vpop.f32.mrf.mxu0
        %v3662 = vadd.f32 0.0, %v3661
        %3663 = vdwg.mxu0
        %3664 = vmatprep.subr.mxu0 %v2181
        %3665 = vmatpush1.msra.mxu0 %v2180
        %3666 = vmatprep.subr.mxu0 %v2179
        %3667 = vmatpush1.msra.mxu0 %v2178
        %3668 = vmatprep.subr.mxu0 %v2177
        %3669 = vmatpush1.msra.mxu0 %v2176
        %3670 = vmatprep.subr.mxu0 %v2175
        %3671 = vmatpush1.msra.mxu0 %v2174
        %3672 = vmatprep.subr.mxu0 %v2173
        %3673 = vmatpush1.msra.mxu0 %v2172
        %3674 = vmatprep.subr.mxu0 %v2171
        %3675 = vmatpush1.msra.mxu0 %v2170
        %3676 = vmatprep.subr.mxu0 %v2169
        %3677 = vmatpush1.msra.mxu0 %v2168
        %3678 = vmatprep.subr.mxu0 %v2167
        %3679 = vmatpush1.msra.mxu0 %v2166
        %3680 = vmatprep.subr.mxu0 %v2165
        %3681 = vmatpush1.msra.mxu0 %v2164
        %3682 = vmatprep.subr.mxu0 %v2163
        %3683 = vmatpush1.msra.mxu0 %v2162
        %3684 = vmatprep.subr.mxu0 %v2161
        %3685 = vmatpush1.msra.mxu0 %v2160
        %3686 = vmatprep.subr.mxu0 %v2159
        %3687 = vmatpush1.msra.mxu0 %v2158
        %3688 = vmatprep.subr.mxu0 %v2157
        %3689 = vmatpush1.msra.mxu0 %v2156
        %3690 = vmatprep.subr.mxu0 %v2155
        %3691 = vmatpush1.msra.mxu0 %v2154
        %3692 = vmatprep.subr.mxu0 %v2153
        %3693 = vmatpush1.msra.mxu0 %v2152
        %3694 = vmatprep.subr.mxu0 %v2151
        %3695 = vmatpush1.msra.mxu0 %v2150
        %3696 = vmatprep.subr.mxu0 %v2213
        %3697 = vmatpush2.msra.mxu0 %v2212
        %3698 = vmatprep.subr.mxu0 %v2211
        %3699 = vmatpush2.msra.mxu0 %v2210
        %3700 = vmatprep.subr.mxu0 %v2209
        %3701 = vmatpush2.msra.mxu0 %v2208
        %3702 = vmatprep.subr.mxu0 %v2207
        %3703 = vmatpush2.msra.mxu0 %v2206
        %3704 = vmatprep.subr.mxu0 %v2205
        %3705 = vmatpush2.msra.mxu0 %v2204
        %3706 = vmatprep.subr.mxu0 %v2203
        %3707 = vmatpush2.msra.mxu0 %v2202
        %3708 = vmatprep.subr.mxu0 %v2201
        %3709 = vmatpush2.msra.mxu0 %v2200
        %3710 = vmatprep.subr.mxu0 %v2199
        %3711 = vmatpush2.msra.mxu0 %v2198
        %3712 = vmatprep.subr.mxu0 %v2197
        %3713 = vmatpush2.msra.mxu0 %v2196
        %3714 = vmatprep.subr.mxu0 %v2195
        %3715 = vmatpush2.msra.mxu0 %v2194
        %3716 = vmatprep.subr.mxu0 %v2193
        %3717 = vmatpush2.msra.mxu0 %v2192
        %3718 = vmatprep.subr.mxu0 %v2191
        %3719 = vmatpush2.msra.mxu0 %v2190
        %3720 = vmatprep.subr.mxu0 %v2189
        %3721 = vmatpush2.msra.mxu0 %v2188
        %3722 = vmatprep.subr.mxu0 %v2187
        %3723 = vmatpush2.msra.mxu0 %v2186
        %3724 = vmatprep.subr.mxu0 %v2185
        %3725 = vmatpush2.msra.mxu0 %v2184
        %3726 = vmatprep.subr.mxu0 %v2183
        %3727 = vmatpush2.msra.mxu0 %v2182
        %3728 = vmatprep.mubr.f32.mxu0 %v3662
        %3729 = vmatmul.mubr.f32.gmra.mxu0 %v3660
        %v3730 = vpop.f32.mrf.mxu0
        %v3731 = vadd.f32 0.0, %v3730
        %v3732 = vpop.f32.mrf.mxu0
        %v3733 = vadd.f32 0.0, %v3732
        %3734 = vdwg.mxu0
        %v3735 = vadd.f32 %v3586, %v3731
        %v3736 = vadd.f32 %v3587, %v3733
        %s3737 = scalar_lea.vmem %s7, 64
        %v3738 = vld [vmem:[%s3737] sm:$0xff]
        %v3740 = vsel %vm2550, %v3738, 0
        %3742 = vmatprep.subr.mxu0 0.0
        %3743 = vmatpush1.msra.mxu0 0.0
        %3744 = vmatprep.subr.mxu0 0.0
        %3745 = vmatpush1.msra.mxu0 0.0
        %3746 = vmatprep.subr.mxu0 0.0
        %3747 = vmatpush1.msra.mxu0 0.0
        %3748 = vmatprep.subr.mxu0 0.0
        %3749 = vmatpush1.msra.mxu0 0.0
        %3750 = vmatprep.subr.mxu0 0.0
        %3751 = vmatpush1.msra.mxu0 0.0
        %3752 = vmatprep.subr.mxu0 0.0
        %3753 = vmatpush1.msra.mxu0 0.0
        %3754 = vmatprep.subr.mxu0 0.0
        %3755 = vmatpush1.msra.mxu0 0.0
        %3756 = vmatprep.subr.mxu0 0.0
        %3757 = vmatpush1.msra.mxu0 0.0
        %3758 = vmatprep.subr.mxu0 0.0
        %3759 = vmatpush1.msra.mxu0 0.0
        %3760 = vmatprep.subr.mxu0 0.0
        %3761 = vmatpush1.msra.mxu0 0.0
        %3762 = vmatprep.subr.mxu0 0.0
        %3763 = vmatpush1.msra.mxu0 0.0
        %3764 = vmatprep.subr.mxu0 0.0
        %3765 = vmatpush1.msra.mxu0 0.0
        %3766 = vmatprep.subr.mxu0 0.0
        %3767 = vmatpush1.msra.mxu0 0.0
        %3768 = vmatprep.subr.mxu0 0.0
        %3769 = vmatpush1.msra.mxu0 0.0
        %3770 = vmatprep.subr.mxu0 0.0
        %3771 = vmatpush1.msra.mxu0 0.0
        %3772 = vmatprep.subr.mxu0 %v2548
        %3773 = vmatpush1.msra.mxu0 %v2547
        %3774 = vmatprep.subr.mxu0 0.0
        %3775 = vmatpush2.msra.mxu0 0.0
        %3776 = vmatprep.subr.mxu0 0.0
        %3777 = vmatpush2.msra.mxu0 0.0
        %3778 = vmatprep.subr.mxu0 0.0
        %3779 = vmatpush2.msra.mxu0 0.0
        %3780 = vmatprep.subr.mxu0 0.0
        %3781 = vmatpush2.msra.mxu0 0.0
        %3782 = vmatprep.subr.mxu0 0.0
        %3783 = vmatpush2.msra.mxu0 0.0
        %3784 = vmatprep.subr.mxu0 0.0
        %3785 = vmatpush2.msra.mxu0 0.0
        %3786 = vmatprep.subr.mxu0 0.0
        %3787 = vmatpush2.msra.mxu0 0.0
        %3788 = vmatprep.subr.mxu0 0.0
        %3789 = vmatpush2.msra.mxu0 0.0
        %3790 = vmatprep.subr.mxu0 0.0
        %3791 = vmatpush2.msra.mxu0 0.0
        %3792 = vmatprep.subr.mxu0 0.0
        %3793 = vmatpush2.msra.mxu0 0.0
        %3794 = vmatprep.subr.mxu0 0.0
        %3795 = vmatpush2.msra.mxu0 0.0
        %3796 = vmatprep.subr.mxu0 0.0
        %3797 = vmatpush2.msra.mxu0 0.0
        %3798 = vmatprep.subr.mxu0 0.0
        %3799 = vmatpush2.msra.mxu0 0.0
        %3800 = vmatprep.subr.mxu0 0.0
        %3801 = vmatpush2.msra.mxu0 0.0
        %3802 = vmatprep.subr.mxu0 0.0
        %3803 = vmatpush2.msra.mxu0 0.0
        %3804 = vmatprep.subr.mxu0 0.0
        %3805 = vmatpush2.msra.mxu0 0.0
        %3806 = vmatprep.mubr.f32.mxu0 0.0
        %3807 = vmatmul.mubr.f32.gmra.mxu0 %v3740
        %v3808 = vpop.f32.mrf.mxu0
        %v3809 = vadd.f32 0.0, %v3808
        %v3810 = vpop.f32.mrf.mxu0
        %v3811 = vadd.f32 0.0, %v3810
        %3812 = vdwg.mxu0
        %3813 = vmatprep.subr.mxu0 %v2395
        %3814 = vmatpush1.msra.mxu0 %v2394
        %3815 = vmatprep.subr.mxu0 %v2393
        %3816 = vmatpush1.msra.mxu0 %v2392
        %3817 = vmatprep.subr.mxu0 %v2391
        %3818 = vmatpush1.msra.mxu0 %v2390
        %3819 = vmatprep.subr.mxu0 %v2389
        %3820 = vmatpush1.msra.mxu0 %v2388
        %3821 = vmatprep.subr.mxu0 %v2387
        %3822 = vmatpush1.msra.mxu0 %v2386
        %3823 = vmatprep.subr.mxu0 %v2385
        %3824 = vmatpush1.msra.mxu0 %v2384
        %3825 = vmatprep.subr.mxu0 %v2383
        %3826 = vmatpush1.msra.mxu0 %v2382
        %3827 = vmatprep.subr.mxu0 %v2381
        %3828 = vmatpush1.msra.mxu0 %v2380
        %3829 = vmatprep.subr.mxu0 %v2379
        %3830 = vmatpush1.msra.mxu0 %v2378
        %3831 = vmatprep.subr.mxu0 %v2377
        %3832 = vmatpush1.msra.mxu0 %v2376
        %3833 = vmatprep.subr.mxu0 %v2375
        %3834 = vmatpush1.msra.mxu0 %v2374
        %3835 = vmatprep.subr.mxu0 %v2373
        %3836 = vmatpush1.msra.mxu0 %v2372
        %3837 = vmatprep.subr.mxu0 %v2371
        %3838 = vmatpush1.msra.mxu0 %v2370
        %3839 = vmatprep.subr.mxu0 %v2369
        %3840 = vmatpush1.msra.mxu0 %v2368
        %3841 = vmatprep.subr.mxu0 %v2367
        %3842 = vmatpush1.msra.mxu0 %v2366
        %3843 = vmatprep.subr.mxu0 %v2365
        %3844 = vmatpush1.msra.mxu0 %v2364
        %3845 = vmatprep.subr.mxu0 %v2427
        %3846 = vmatpush2.msra.mxu0 %v2426
        %3847 = vmatprep.subr.mxu0 %v2425
        %3848 = vmatpush2.msra.mxu0 %v2424
        %3849 = vmatprep.subr.mxu0 %v2423
        %3850 = vmatpush2.msra.mxu0 %v2422
        %3851 = vmatprep.subr.mxu0 %v2421
        %3852 = vmatpush2.msra.mxu0 %v2420
        %3853 = vmatprep.subr.mxu0 %v2419
        %3854 = vmatpush2.msra.mxu0 %v2418
        %3855 = vmatprep.subr.mxu0 %v2417
        %3856 = vmatpush2.msra.mxu0 %v2416
        %3857 = vmatprep.subr.mxu0 %v2415
        %3858 = vmatpush2.msra.mxu0 %v2414
        %3859 = vmatprep.subr.mxu0 %v2413
        %3860 = vmatpush2.msra.mxu0 %v2412
        %3861 = vmatprep.subr.mxu0 %v2411
        %3862 = vmatpush2.msra.mxu0 %v2410
        %3863 = vmatprep.subr.mxu0 %v2409
        %3864 = vmatpush2.msra.mxu0 %v2408
        %3865 = vmatprep.subr.mxu0 %v2407
        %3866 = vmatpush2.msra.mxu0 %v2406
        %3867 = vmatprep.subr.mxu0 %v2405
        %3868 = vmatpush2.msra.mxu0 %v2404
        %3869 = vmatprep.subr.mxu0 %v2403
        %3870 = vmatpush2.msra.mxu0 %v2402
        %3871 = vmatprep.subr.mxu0 %v2401
        %3872 = vmatpush2.msra.mxu0 %v2400
        %3873 = vmatprep.subr.mxu0 %v2399
        %3874 = vmatpush2.msra.mxu0 %v2398
        %3875 = vmatprep.subr.mxu0 %v2397
        %3876 = vmatpush2.msra.mxu0 %v2396
        %3877 = vmatprep.mubr.f32.mxu0 %v3811
        %3878 = vmatmul.mubr.f32.gmra.mxu0 %v3809
        %v3879 = vpop.f32.mrf.mxu0
        %v3880 = vadd.f32 0.0, %v3879
        %v3881 = vpop.f32.mrf.mxu0
        %v3882 = vadd.f32 0.0, %v3881
        %3883 = vdwg.mxu0
        %v3884 = vadd.f32 %v3735, %v3880
        %v3885 = vadd.f32 %v3736, %v3882
        %v3886 = vld [vmem:[%s8] sm:$0xff]
        %3888 = vset.pattern.permute.xlu0 0
        %3889 = vperm.xlu0 %3888, %v3886
        %v3890 = vpop.permute.xlu0 %3889
        %v3892 = vadd.f32 %v3884, %v3890
        %v3893 = vadd.f32 %v3885, %v3890
        %v3894 = vadd.f32 %v3892, %v3893
        %3895 = vadd.xlane.f32.xlu0 %v3894
        %v3896 = vpop.xlane.xlu0 %3895
        %v3897 = vrot.slane %v3896, 4
        %v3898 = vadd.f32 %v3896, %v3897
        %v3899 = vrot.slane %v3898, 2
        %v3900 = vadd.f32 %v3898, %v3899
        %v3901 = vrot.slane %v3900, 1
        %v3902 = vadd.f32 %v3900, %v3901
        %v3903 = vmul.f32 %v3902, 0.00048828125
        %v3904 = vsub.f32 %v3892, %v3903
        %v3905 = vsub.f32 %v3893, %v3903
        %v3906 = vmul.f32 %v3904, %v3904
        %v3907 = vmul.f32 %v3905, %v3905
        %v3908 = vadd.f32 %v3906, %v3907
        %3909 = vadd.xlane.f32.xlu0 %v3908
        %v3910 = vpop.xlane.xlu0 %3909
        %v3911 = vrot.slane %v3910, 4
        %v3912 = vadd.f32 %v3910, %v3911
        %v3913 = vrot.slane %v3912, 2
        %v3914 = vadd.f32 %v3912, %v3913
        %v3915 = vrot.slane %v3914, 1
        %v3916 = vadd.f32 %v3914, %v3915
        %v3917 = vmul.f32 %v3916, 0.00048828125
        %v3918 = vadd.f32 %v3917, 1e-05
        %v3919 = vrsqrt.pop %v3918
        %v3920 = vld [vmem:[#allocation11] sm:$0xff]
        %v3921 = vld [vmem:[#allocation11 + $0x8] sm:$0xff]
        %v3922 = vmul.f32 %v3920, %v3919
        %v3923 = vmul.f32 %v3921, %v3919
        %v3924 = vmul.f32 %v3904, %v3922
        %v3925 = vmul.f32 %v3905, %v3923
        %v3926 = vld [vmem:[#allocation13] sm:$0xff]
        %v3927 = vld [vmem:[#allocation13 + $0x8] sm:$0xff]
        %v3928 = vadd.f32 %v3924, %v3926
        %v3929 = vadd.f32 %v3925, %v3927
        %v3930 = vmul.f32 %v3928, 0.2
        %v3931 = vmul.f32 %v3929, 0.2
        %v3932 = vmax.f32 %v3928, %v3930
        %v3933 = vmax.f32 %v3929, %v3931
        %3934 = vst [vmem:[%s480] sm:$0xff] %v3932
        %3935 = vst [vmem:[%s480 + $0x8] sm:$0xff] %v3933
        %s3936 = sand.u32 %s275, 1
        %s3937 = scalar_lea.sflag [#allocation4], %s3936
        %s3938 = sand.u32 %s275, 1
        %s3939 = smul.addr %s3938, 16
        %s3940 = scalar_lea.vmem [#allocation14], %s3939
        // Predicated region
        $region93: #{tpu_custom_call.1} parent=63 // pred_check
          %p3941 = pneg %p285
        $region94: #{tpu_custom_call.1} parent=63 // pred_check_branch
          %3943 = sbr.rel (%p3941) target = $region96
        $region95: #{tpu_custom_call.1} parent=63 // pred_region
          %s3945 = ssub.s32 256, 256
          %3946 = vsyncadd %s3937, %s3945
          %s3947 = smul.addr %s31, 2
          %s3948 = smul.addr %s3947, 128
          %s3949 = scalar_lea.hbm %s11, %s3948
          %s3951 = sshll.u32 %s3940, 4
          %s3952 = int_to_ptr.vmem [resolvable:$true] %s3951
          %3954 = dma.vmem_to_hbm [thread:$0]  %s3952, 256, %s3949, %s3937
        $region96: #{tpu_custom_call.1} parent=63 // pred_fallthru
          _
      $region64: #{tpu_custom_call.1} parent=5 // pred_fallthru
        _
      %p3955 = scmp.le.s32.totalorder 2, %s26
      // Predicated region
      $region97: #{tpu_custom_call.1} parent=5 // pred_check
        %p3956 = pneg %p3955
      $region98: #{tpu_custom_call.1} parent=5 // pred_check_branch
        %3958 = sbr.rel (%p3956) target = $region100
      $region99: #{tpu_custom_call.1} parent=5 // pred_region
        %s3959 = ssub.s32 %s26, 2
        // Predicated region
        $region101: #{tpu_custom_call.1} parent=99 // pred_check
          %p3960 = pneg %p291
        $region102: #{tpu_custom_call.1} parent=99 // pred_check_branch
          %3962 = sbr.rel (%p3960) target = $region104
        $region103: #{tpu_custom_call.1} parent=99 // pred_region
          %s3963 = sand.u32 %s276, 1
          %s3964 = scalar_lea.sflag [#allocation4], %s3963
          %s3965 = sand.u32 %s276, 1
          %s3966 = smul.addr %s3965, 16
          %s3967 = scalar_lea.vmem [#allocation14], %s3966
          %3968 = dma.done %s3964, 256
        $region104: #{tpu_custom_call.1} parent=99 // pred_fallthru
          _
      $region100: #{tpu_custom_call.1} parent=5 // pred_fallthru
        _
    $region6: #{tpu_custom_call.1} parent=1 // loop_footer
      %s30 = sadd.s32 1, %s26
    $region7: #{tpu_custom_call.1} parent=1 // loop_footer_branch
      %25 = sbr.rel target = $region3
    $region8: #{tpu_custom_call.1} parent=1 // loop_exit
      _
    %3969 = vsyncpa [#allocation3], 1
    %s3970 = scalar_lea.sflag [#allocation3], 1
    %3971 = vsyncpa %s3970, 1
    %3972 = vsyncpa [#allocation6], 1
    %3973 = vsyncpa [#allocation9], 1
    %3974 = vsyncpa [#allocation12], 1
    %3975 = vsyncpa [#allocation4], 1
    %s3976 = scalar_lea.sflag [#allocation4], 1
    %3977 = vsyncpa %s3976, 1

</llo_original>
